<compile_context>
chip_gen: v5e
topology: v5e:2x2
jax: 0.10.0
libtpu: 0.0.40
codegen_flags: <defaults>
</compile_context>

<pallas_src>
import functools

import jax
import jax.numpy as jnp
from jax.experimental import pallas as pl
from jax.experimental.pallas import tpu as pltpu


def _bidir_attn_lstm_kernel(eg_ref, encp_ref, enc_ref, s0_ref, s1_ref,
                            wah_ref, v_ref, wc_ref, wh_ref, b_ref,
                            cell_ref, hid_ref):
    """One direction per grid step; full T-step recurrence inside the body.

    eg_ref   (T, B, 4H)  precomputed emb_t @ W_ih_x^T (time already reversed
                         for the backward direction)
    encp_ref (B, S, H)   precomputed enc @ Wa_e^T + ba
    enc_ref  (B, S, E)   raw encoder outputs (shared across directions)
    s0_ref   (B, H)      prev_state[0]  ("c" slot of the module's tuple)
    s1_ref   (B, H)      prev_state[1]  ("h" slot)
    wah_ref  (H, H)      Wa_h^T
    v_ref    (1, H)      attention v
    wc_ref   (E, 4H)     W_ih_context^T
    wh_ref   (H, 4H)     W_hh^T
    b_ref    (1, 4H)     b_ih + b_hh
    cell_ref (T, B, H)   output: cell_seq entries ( = h1 each step )
    hid_ref  (T, B, H)   output: hid_seq entries  ( = c1 each step )
    """
    T = eg_ref.shape[0]
    H = cell_ref.shape[2]

    enc = enc_ref[...]          # (B, S, E)
    enc_part = encp_ref[...]    # (B, S, H)   loop-invariant attention term
    v = v_ref[...]              # (1, H)
    wah_t = wah_ref[...]        # (H, H)
    wc_t = wc_ref[...]          # (E, 4H)
    wh_t = wh_ref[...]          # (H, 4H)
    bias = b_ref[...]           # (1, 4H)

    # prev_state = (state0, state1); module passes this tuple to nn.LSTMCell
    # as (h_0, c_0), i.e. state0 plays h_0 and state1 plays c_0.
    state0 = s0_ref[...]        # (B, H)
    state1 = s1_ref[...]        # (B, H)

    for t in range(T):          # static unroll: everything below is straight-line
        # ---- concat attention: tanh(enc@Wa_e^T + h@Wa_h^T + ba) . v ----
        hid_part = jnp.dot(state1, wah_t,
                           preferred_element_type=jnp.float32)        # (B, H)
        energy = jnp.tanh(enc_part + hid_part[:, None, :])            # (B, S, H)
        scores = jnp.sum(energy * v[None, :, :], axis=-1)             # (B, S)

        # softmax over S (max-subtracted), reciprocal on the EUP
        m = jnp.max(scores, axis=-1, keepdims=True)
        e = jnp.exp(scores - m)
        denom = jnp.sum(e, axis=-1, keepdims=True)
        attn = e * pl.reciprocal(denom, approx=True)                  # (B, S)

        # context[b] = sum_s attn[b,s] * enc[b,s,:]
        context = jnp.sum(attn[:, :, None] * enc, axis=1)             # (B, E)

        # ---- LSTMCell gates; emb contribution was hoisted to eg_ref ----
        gates = (eg_ref[t]
                 + jnp.dot(context, wc_t, preferred_element_type=jnp.float32)
                 + jnp.dot(state0, wh_t, preferred_element_type=jnp.float32)
                 + bias)                                              # (B, 4H)
        i_g = jax.nn.sigmoid(gates[:, 0 * H:1 * H])
        f_g = jax.nn.sigmoid(gates[:, 1 * H:2 * H])
        g_g = jnp.tanh(gates[:, 2 * H:3 * H])
        o_g = jax.nn.sigmoid(gates[:, 3 * H:4 * H])

        # nn.LSTMCell received (h_0, c_0) = (state0, state1)
        c1 = f_g * state1 + i_g * g_g
        h1 = o_g * jnp.tanh(c1)

        cell_ref[t] = h1        # cell_seq entry = returned hidden[0] = h1
        hid_ref[t] = c1         # hid_seq  entry = returned hidden[1] = c1

        # module stores (h1, c1) as the next prev_state tuple
        state0, state1 = h1, c1


def bidirectional_attn_lstm(input_emb, img_seq, params_fw, params_bw,
                            prev_state_fw=None, prev_state_bw=None):
    """input_emb (B,T,I), img_seq (B,S,E) -> (cell_seq, hid_seq), each (B,T,2H)."""
    B, T, I = input_emb.shape
    _, S, E = img_seq.shape
    H = params_fw["whh"].shape[1]

    zeros = jnp.zeros((B, H), jnp.float32)
    if prev_state_fw is None:
        prev_state_fw = (zeros, zeros)
    if prev_state_bw is None:
        prev_state_bw = (zeros, zeros)

    def stack(name):
        return jnp.stack([params_fw[name], params_bw[name]], axis=0)

    # ---- host-side layout plumbing (done once, outside the recurrence) ----
    wa_h = stack("wa_h")                                    # (2, H, H)
    wa_e = stack("wa_e")                                    # (2, H, E)
    ba = stack("ba")                                        # (2, 1, H)
    v = stack("v")                                          # (2, 1, H)
    wih_x = stack("wih_x")                                  # (2, 4H, I)
    wih_c = stack("wih_c")                                  # (2, 4H, E)
    whh = stack("whh")                                      # (2, 4H, H)
    bias = stack("bih") + stack("bhh")                      # (2, 1, 4H)

    wa_h_t = jnp.transpose(wa_h, (0, 2, 1))                 # (2, H, H)
    wih_c_t = jnp.transpose(wih_c, (0, 2, 1))               # (2, E, 4H)
    whh_t = jnp.transpose(whh, (0, 2, 1))                   # (2, H, 4H)

    # Hoisted loop-invariant projections:
    #  encoder projection + attention bias folded in       -> (2, B, S, H)
    enc_part = jnp.einsum("bse,dhe->dbsh", img_seq, wa_e) + ba[:, None, :, :]
    #  embedding gate contribution for every timestep      -> (2, T, B, 4H)
    eg = jnp.einsum("bti,dgi->dtbg", input_emb, wih_x)
    # backward direction consumes input_emb in reversed time order; apply the
    # reversal to the tiny precomputed gate tensor (no emb reverse/transpose copy)
    emb_gates = jnp.stack([eg[0], eg[1][::-1]], axis=0)

    state0_0 = jnp.stack([prev_state_fw[0], prev_state_bw[0]], axis=0)  # (2,B,H)
    state1_0 = jnp.stack([prev_state_fw[1], prev_state_bw[1]], axis=0)  # (2,B,H)

    in_specs = [
        pl.BlockSpec((None, T, B, 4 * H), lambda d: (d, 0, 0, 0)),  # emb gates
        pl.BlockSpec((None, B, S, H), lambda d: (d, 0, 0, 0)),      # enc projection
        pl.BlockSpec((B, S, E), lambda d: (0, 0, 0)),               # raw encoder (shared)
        pl.BlockSpec((None, B, H), lambda d: (d, 0, 0)),            # state0
        pl.BlockSpec((None, B, H), lambda d: (d, 0, 0)),            # state1
        pl.BlockSpec((None, H, H), lambda d: (d, 0, 0)),            # Wa_h^T
        pl.BlockSpec((None, 1, H), lambda d: (d, 0, 0)),            # v
        pl.BlockSpec((None, E, 4 * H), lambda d: (d, 0, 0)),        # W_ih_ctx^T
        pl.BlockSpec((None, H, 4 * H), lambda d: (d, 0, 0)),        # W_hh^T
        pl.BlockSpec((None, 1, 4 * H), lambda d: (d, 0, 0)),        # bias
    ]
    out_specs = [
        pl.BlockSpec((None, T, B, H), lambda d: (d, 0, 0, 0)),
        pl.BlockSpec((None, T, B, H), lambda d: (d, 0, 0, 0)),
    ]
    out_shape = [
        jax.ShapeDtypeStruct((2, T, B, H), jnp.float32),
        jax.ShapeDtypeStruct((2, T, B, H), jnp.float32),
    ]

    cell_dtbh, hid_dtbh = pl.pallas_call(
        _bidir_attn_lstm_kernel,
        grid=(2,),
        in_specs=in_specs,
        out_specs=out_specs,
        out_shape=out_shape,
        compiler_params=pltpu.CompilerParams(
            dimension_semantics=("parallel",)),  # 2 directions -> 2 TCs on v7x
    )(emb_gates, enc_part, img_seq, state0_0, state1_0,
      wa_h_t, v, wih_c_t, whh_t, bias)

    cell_fw = jnp.transpose(cell_dtbh[0], (1, 0, 2))   # (B, T, H)
    cell_bw = jnp.transpose(cell_dtbh[1], (1, 0, 2))
    hid_fw = jnp.transpose(hid_dtbh[0], (1, 0, 2))
    hid_bw = jnp.transpose(hid_dtbh[1], (1, 0, 2))
    cell_seq = jnp.concatenate([cell_fw, cell_bw], axis=-1)
    hid_seq = jnp.concatenate([hid_fw, hid_bw], axis=-1)
    return cell_seq, hid_seq


def init_params(key, H, I, E):
    """Deterministic synthetic parameters (shapes match the PyTorch module)."""
    ks = jax.random.split(key, 7)
    sa = 1.0 / jnp.sqrt(jnp.float32(H + E))
    sl = 1.0 / jnp.sqrt(jnp.float32(H))
    wa = jax.random.uniform(ks[0], (H, H + E), jnp.float32, -sa, sa)       # nn.Linear(H+E, H)
    ba = jax.random.uniform(ks[1], (1, H), jnp.float32, -sa, sa)
    v = sl * jax.random.normal(ks[2], (1, H), jnp.float32)                 # Attn.v
    wih = jax.random.uniform(ks[3], (4 * H, I + E), jnp.float32, -sl, sl)  # LSTMCell.weight_ih
    whh = jax.random.uniform(ks[4], (4 * H, H), jnp.float32, -sl, sl)      # LSTMCell.weight_hh
    bih = jax.random.uniform(ks[5], (1, 4 * H), jnp.float32, -sl, sl)
    bhh = jax.random.uniform(ks[6], (1, 4 * H), jnp.float32, -sl, sl)
    return {
        "wa_h": wa[:, :H], "wa_e": wa[:, H:], "ba": ba, "v": v,
        "wih_x": wih[:, :I], "wih_c": wih[:, I:], "whh": whh,
        "bih": bih, "bhh": bhh,
    }


def _reference_direction(input_emb, img_seq, c0, h0, p):
    """Pure-JAX reference mirroring the PyTorch semantics (incl. state swap)."""
    B, T, _ = input_emb.shape
    H = c0.shape[1]
    state0, state1 = c0, h0
    cells, hids = [], []
    for t in range(T):
        hid_part = state1 @ p["wa_h"].T
        enc_part = jnp.einsum("bse,he->bsh", img_seq, p["wa_e"])
        energy = jnp.tanh(enc_part + hid_part[:, None, :] + p["ba"][None, :, :])
        scores = jnp.sum(energy * p["v"][None, :, :], axis=-1)
        attn = jax.nn.softmax(scores, axis=-1)
        context = jnp.einsum("bs,bse->be", attn, img_seq)
        gates = (input_emb[:, t] @ p["wih_x"].T + context @ p["wih_c"].T
                 + state0 @ p["whh"].T + p["bih"] + p["bhh"])
        i_g = jax.nn.sigmoid(gates[:, :H])
        f_g = jax.nn.sigmoid(gates[:, H:2 * H])
        g_g = jnp.tanh(gates[:, 2 * H:3 * H])
        o_g = jax.nn.sigmoid(gates[:, 3 * H:])
        c1 = f_g * state1 + i_g * g_g
        h1 = o_g * jnp.tanh(c1)
        state0, state1 = h1, c1
        cells.append(h1)
        hids.append(c1)
    return jnp.stack(cells, axis=1), jnp.stack(hids, axis=1)


if __name__ == "__main__":
    B, T, S = 2, 8, 16          # batch, decoder seq len, encoder seq len
    H, I, E = 32, 16, 24        # hidden_size, input_size, encoder_size

    key = jax.random.PRNGKey(0)
    k_emb, k_img, k_fw, k_bw = jax.random.split(key, 4)
    input_emb = jax.random.normal(k_emb, (B, T, I), jnp.float32)
    img_seq = jax.random.normal(k_img, (B, S, E), jnp.float32)
    params_fw = init_params(k_fw, H, I, E)
    params_bw = init_params(k_bw, H, I, E)

    run = jax.jit(functools.partial(bidirectional_attn_lstm))
    cell_seq, hid_seq = run(input_emb, img_seq, params_fw, params_bw)
    jax.block_until_ready((cell_seq, hid_seq))
    assert cell_seq.shape == (B, T, 2 * H) and hid_seq.shape == (B, T, 2 * H)

    # pure-JAX reference check (backward outputs stay in reversed-input order,
    # exactly like the PyTorch module).
    zeros = jnp.zeros((B, H), jnp.float32)
    ref_c_fw, ref_h_fw = _reference_direction(input_emb, img_seq, zeros, zeros, params_fw)
    ref_c_bw, ref_h_bw = _reference_direction(input_emb[:, ::-1], img_seq, zeros, zeros, params_bw)
    ref_cell = jnp.concatenate([ref_c_fw, ref_c_bw], axis=-1)
    ref_hid = jnp.concatenate([ref_h_fw, ref_h_bw], axis=-1)
    assert jnp.allclose(cell_seq, ref_cell, atol=1e-2, rtol=1e-2)
    assert jnp.allclose(hid_seq, ref_hid, atol=1e-2, rtol=1e-2)

    # TODO(synk): the Attn.src_len masking branch is never exercised by
    # ATTNLSTMCell (src_len=None), so it is intentionally not implemented.
    print("KERNEL_OK")
</pallas_src>

<mosaic_0001>
module attributes {stable_mosaic.version = 11 : i64} {
  func.func @_bidir_attn_lstm_kernel(%arg0: i32, %arg1: memref<1x8x2x128xf32, #tpu.memory_space<vmem>>, %arg2: memref<1x2x16x32xf32, #tpu.memory_space<vmem>>, %arg3: memref<2x16x24xf32, #tpu.memory_space<vmem>>, %arg4: memref<1x2x32xf32, #tpu.memory_space<vmem>>, %arg5: memref<1x2x32xf32, #tpu.memory_space<vmem>>, %arg6: memref<1x32x32xf32, #tpu.memory_space<vmem>>, %arg7: memref<1x1x32xf32, #tpu.memory_space<vmem>>, %arg8: memref<1x24x128xf32, #tpu.memory_space<vmem>>, %arg9: memref<1x32x128xf32, #tpu.memory_space<vmem>>, %arg10: memref<1x1x128xf32, #tpu.memory_space<vmem>>, %arg11: memref<1x8x2x32xf32, #tpu.memory_space<vmem>>, %arg12: memref<1x8x2x32xf32, #tpu.memory_space<vmem>>) attributes {dimension_semantics = [#tpu.dimension_semantics<parallel>], iteration_bounds = array<i64: 2>, scalar_prefetch = 0 : i64, scratch_operands = 0 : i64, tpu.core_type = #tpu.core_type<tc>, window_params = [{transform_indices = @transform_0, window_bounds = array<i64: 1, 8, 2, 128>}, {transform_indices = @transform_1, window_bounds = array<i64: 1, 2, 16, 32>}, {pipeline_mode = #tpu.pipeline_mode<synchronous>, transform_indices = @transform_2, window_bounds = array<i64: 2, 16, 24>}, {transform_indices = @transform_3, window_bounds = array<i64: 1, 2, 32>}, {transform_indices = @transform_4, window_bounds = array<i64: 1, 2, 32>}, {transform_indices = @transform_5, window_bounds = array<i64: 1, 32, 32>}, {transform_indices = @transform_6, window_bounds = array<i64: 1, 1, 32>}, {transform_indices = @transform_7, window_bounds = array<i64: 1, 24, 128>}, {transform_indices = @transform_8, window_bounds = array<i64: 1, 32, 128>}, {transform_indices = @transform_9, window_bounds = array<i64: 1, 1, 128>}, {transform_indices = @transform_10, window_bounds = array<i64: 1, 8, 2, 32>}, {transform_indices = @transform_11, window_bounds = array<i64: 1, 8, 2, 32>}]} {
    %c0 = arith.constant 0 : index
    %c0_0 = arith.constant 0 : index
    %c0_1 = arith.constant 0 : index
    %0 = vector.load %arg3[%c0, %c0_0, %c0_1] : memref<2x16x24xf32, #tpu.memory_space<vmem>>, vector<2x16x24xf32>
    %c0_2 = arith.constant 0 : index
    %c0_3 = arith.constant 0 : index
    %c0_4 = arith.constant 0 : index
    %c0_5 = arith.constant 0 : index
    %1 = vector.load %arg2[%c0_2, %c0_3, %c0_4, %c0_5] : memref<1x2x16x32xf32, #tpu.memory_space<vmem>>, vector<1x2x16x32xf32>
    %2 = vector.shape_cast %1 : vector<1x2x16x32xf32> to vector<2x16x32xf32>
    %c0_6 = arith.constant 0 : index
    %c0_7 = arith.constant 0 : index
    %c0_8 = arith.constant 0 : index
    %3 = vector.load %arg7[%c0_6, %c0_7, %c0_8] : memref<1x1x32xf32, #tpu.memory_space<vmem>>, vector<1x1x32xf32>
    %4 = vector.shape_cast %3 : vector<1x1x32xf32> to vector<1x32xf32>
    %c0_9 = arith.constant 0 : index
    %c0_10 = arith.constant 0 : index
    %c0_11 = arith.constant 0 : index
    %5 = vector.load %arg6[%c0_9, %c0_10, %c0_11] : memref<1x32x32xf32, #tpu.memory_space<vmem>>, vector<1x32x32xf32>
    %6 = vector.shape_cast %5 : vector<1x32x32xf32> to vector<32x32xf32>
    %c0_12 = arith.constant 0 : index
    %c0_13 = arith.constant 0 : index
    %c0_14 = arith.constant 0 : index
    %7 = vector.load %arg8[%c0_12, %c0_13, %c0_14] : memref<1x24x128xf32, #tpu.memory_space<vmem>>, vector<1x24x128xf32>
    %8 = vector.shape_cast %7 : vector<1x24x128xf32> to vector<24x128xf32>
    %c0_15 = arith.constant 0 : index
    %c0_16 = arith.constant 0 : index
    %c0_17 = arith.constant 0 : index
    %9 = vector.load %arg9[%c0_15, %c0_16, %c0_17] : memref<1x32x128xf32, #tpu.memory_space<vmem>>, vector<1x32x128xf32>
    %10 = vector.shape_cast %9 : vector<1x32x128xf32> to vector<32x128xf32>
    %c0_18 = arith.constant 0 : index
    %c0_19 = arith.constant 0 : index
    %c0_20 = arith.constant 0 : index
    %11 = vector.load %arg10[%c0_18, %c0_19, %c0_20] : memref<1x1x128xf32, #tpu.memory_space<vmem>>, vector<1x1x128xf32>
    %12 = vector.shape_cast %11 : vector<1x1x128xf32> to vector<1x128xf32>
    %c0_21 = arith.constant 0 : index
    %c0_22 = arith.constant 0 : index
    %c0_23 = arith.constant 0 : index
    %13 = vector.load %arg4[%c0_21, %c0_22, %c0_23] : memref<1x2x32xf32, #tpu.memory_space<vmem>>, vector<1x2x32xf32>
    %14 = vector.shape_cast %13 : vector<1x2x32xf32> to vector<2x32xf32>
    %c0_24 = arith.constant 0 : index
    %c0_25 = arith.constant 0 : index
    %c0_26 = arith.constant 0 : index
    %15 = vector.load %arg5[%c0_24, %c0_25, %c0_26] : memref<1x2x32xf32, #tpu.memory_space<vmem>>, vector<1x2x32xf32>
    %16 = vector.shape_cast %15 : vector<1x2x32xf32> to vector<2x32xf32>
    %cst = arith.constant dense<0.000000e+00> : vector<2x32xf32>
    %17 = tpu.matmul %16, %6, %cst {dimension_numbers = #tpu.dot_dimension_numbers<[1], [0], [0], [1], [0, 0, 1, 1], [], []>} : vector<2x32xf32>, vector<32x32xf32>, vector<2x32xf32> -> vector<2x32xf32>
    %18 = vector.shape_cast %17 : vector<2x32xf32> to vector<2x1x32xf32>
    %19 = vector.broadcast %18 : vector<2x1x32xf32> to vector<2x16x32xf32>
    %20 = arith.addf %2, %19 : vector<2x16x32xf32>
    %21 = math.tanh %20 : vector<2x16x32xf32>
    %22 = vector.shape_cast %4 : vector<1x32xf32> to vector<1x1x32xf32>
    %23 = vector.broadcast %22 : vector<1x1x32xf32> to vector<2x16x32xf32>
    %24 = arith.mulf %21, %23 : vector<2x16x32xf32>
    %cst_27 = arith.constant dense<0.000000e+00> : vector<2x16xf32>
    %25 = vector.multi_reduction <add>, %24, %cst_27 [2] : vector<2x16x32xf32> to vector<2x16xf32>
    %cst_28 = arith.constant dense<0xFF800000> : vector<2xf32>
    %26 = vector.multi_reduction <maximumf>, %25, %cst_28 [1] : vector<2x16xf32> to vector<2xf32>
    %27 = vector.shape_cast %26 : vector<2xf32> to vector<2x1xf32>
    %28 = vector.broadcast %27 : vector<2x1xf32> to vector<2x16xf32>
    %29 = arith.subf %25, %28 : vector<2x16xf32>
    %30 = math.exp %29 : vector<2x16xf32>
    %cst_29 = arith.constant dense<0.000000e+00> : vector<2xf32>
    %31 = vector.multi_reduction <add>, %30, %cst_29 [1] : vector<2x16xf32> to vector<2xf32>
    %32 = vector.shape_cast %31 : vector<2xf32> to vector<2x1xf32>
    %33 = tpu.reciprocal %32 {approx = true} : vector<2x1xf32> -> vector<2x1xf32>
    %34 = vector.broadcast %33 : vector<2x1xf32> to vector<2x16xf32>
    %35 = arith.mulf %30, %34 : vector<2x16xf32>
    %36 = vector.shape_cast %35 : vector<2x16xf32> to vector<2x16x1xf32>
    %37 = vector.broadcast %36 : vector<2x16x1xf32> to vector<2x16x24xf32>
    %38 = arith.mulf %37, %0 : vector<2x16x24xf32>
    %cst_30 = arith.constant dense<0.000000e+00> : vector<2x24xf32>
    %39 = vector.multi_reduction <add>, %38, %cst_30 [1] : vector<2x16x24xf32> to vector<2x24xf32>
    %c0_31 = arith.constant 0 : index
    %c0_32 = arith.constant 0 : index
    %c0_33 = arith.constant 0 : index
    %c0_34 = arith.constant 0 : index
    %40 = vector.load %arg1[%c0_31, %c0_32, %c0_33, %c0_34] : memref<1x8x2x128xf32, #tpu.memory_space<vmem>>, vector<1x1x2x128xf32>
    %41 = vector.shape_cast %40 : vector<1x1x2x128xf32> to vector<2x128xf32>
    %cst_35 = arith.constant dense<0.000000e+00> : vector<2x128xf32>
    %42 = tpu.matmul %39, %8, %cst_35 {dimension_numbers = #tpu.dot_dimension_numbers<[1], [0], [0], [1], [0, 0, 1, 1], [], []>} : vector<2x24xf32>, vector<24x128xf32>, vector<2x128xf32> -> vector<2x128xf32>
    %43 = arith.addf %41, %42 : vector<2x128xf32>
    %cst_36 = arith.constant dense<0.000000e+00> : vector<2x128xf32>
    %44 = tpu.matmul %14, %10, %cst_36 {dimension_numbers = #tpu.dot_dimension_numbers<[1], [0], [0], [1], [0, 0, 1, 1], [], []>} : vector<2x32xf32>, vector<32x128xf32>, vector<2x128xf32> -> vector<2x128xf32>
    %45 = arith.addf %43, %44 : vector<2x128xf32>
    %46 = vector.broadcast %12 : vector<1x128xf32> to vector<2x128xf32>
    %47 = arith.addf %45, %46 : vector<2x128xf32>
    %48 = vector.extract_strided_slice %47 {offsets = [0, 0], sizes = [2, 32], strides = [1, 1]} : vector<2x128xf32> to vector<2x32xf32>
    %49 = arith.negf %48 : vector<2x32xf32>
    %50 = math.exp %49 : vector<2x32xf32>
    %cst_37 = arith.constant 1.000000e+00 : f32
    %51 = vector.broadcast %cst_37 : f32 to vector<2x32xf32>
    %52 = arith.addf %51, %50 : vector<2x32xf32>
    %53 = arith.divf %51, %52 : vector<2x32xf32>
    %54 = vector.extract_strided_slice %47 {offsets = [0, 32], sizes = [2, 32], strides = [1, 1]} : vector<2x128xf32> to vector<2x32xf32>
    %55 = arith.negf %54 : vector<2x32xf32>
    %56 = math.exp %55 : vector<2x32xf32>
    %cst_38 = arith.constant 1.000000e+00 : f32
    %57 = vector.broadcast %cst_38 : f32 to vector<2x32xf32>
    %58 = arith.addf %57, %56 : vector<2x32xf32>
    %59 = arith.divf %57, %58 : vector<2x32xf32>
    %60 = vector.extract_strided_slice %47 {offsets = [0, 64], sizes = [2, 32], strides = [1, 1]} : vector<2x128xf32> to vector<2x32xf32>
    %61 = math.tanh %60 : vector<2x32xf32>
    %62 = vector.extract_strided_slice %47 {offsets = [0, 96], sizes = [2, 32], strides = [1, 1]} : vector<2x128xf32> to vector<2x32xf32>
    %63 = arith.negf %62 : vector<2x32xf32>
    %64 = math.exp %63 : vector<2x32xf32>
    %cst_39 = arith.constant 1.000000e+00 : f32
    %65 = vector.broadcast %cst_39 : f32 to vector<2x32xf32>
    %66 = arith.addf %65, %64 : vector<2x32xf32>
    %67 = arith.divf %65, %66 : vector<2x32xf32>
    %68 = arith.mulf %59, %16 : vector<2x32xf32>
    %69 = arith.mulf %53, %61 : vector<2x32xf32>
    %70 = arith.addf %68, %69 : vector<2x32xf32>
    %71 = math.tanh %70 : vector<2x32xf32>
    %72 = arith.mulf %67, %71 : vector<2x32xf32>
    %c0_40 = arith.constant 0 : index
    %c0_41 = arith.constant 0 : index
    %c0_42 = arith.constant 0 : index
    %c0_43 = arith.constant 0 : index
    %73 = vector.load %arg11[%c0_40, %c0_41, %c0_42, %c0_43] : memref<1x8x2x32xf32, #tpu.memory_space<vmem>>, vector<1x1x2x32xf32>
    %74 = vector.shape_cast %73 : vector<1x1x2x32xf32> to vector<2x32xf32>
    %75 = vector.shape_cast %72 : vector<2x32xf32> to vector<1x1x2x32xf32>
    tpu.vector_store %arg11[%c0_40, %c0_41, %c0_42, %c0_43], %75 {strides = array<i32>} : memref<1x8x2x32xf32, #tpu.memory_space<vmem>>, vector<1x1x2x32xf32>,
    %c0_44 = arith.constant 0 : index
    %c0_45 = arith.constant 0 : index
    %c0_46 = arith.constant 0 : index
    %c0_47 = arith.constant 0 : index
    %76 = vector.load %arg12[%c0_44, %c0_45, %c0_46, %c0_47] : memref<1x8x2x32xf32, #tpu.memory_space<vmem>>, vector<1x1x2x32xf32>
    %77 = vector.shape_cast %76 : vector<1x1x2x32xf32> to vector<2x32xf32>
    %78 = vector.shape_cast %70 : vector<2x32xf32> to vector<1x1x2x32xf32>
    tpu.vector_store %arg12[%c0_44, %c0_45, %c0_46, %c0_47], %78 {strides = array<i32>} : memref<1x8x2x32xf32, #tpu.memory_space<vmem>>, vector<1x1x2x32xf32>,
    %cst_48 = arith.constant dense<0.000000e+00> : vector<2x32xf32>
    %79 = tpu.matmul %70, %6, %cst_48 {dimension_numbers = #tpu.dot_dimension_numbers<[1], [0], [0], [1], [0, 0, 1, 1], [], []>} : vector<2x32xf32>, vector<32x32xf32>, vector<2x32xf32> -> vector<2x32xf32>
    %80 = vector.shape_cast %79 : vector<2x32xf32> to vector<2x1x32xf32>
    %81 = vector.broadcast %80 : vector<2x1x32xf32> to vector<2x16x32xf32>
    %82 = arith.addf %2, %81 : vector<2x16x32xf32>
    %83 = math.tanh %82 : vector<2x16x32xf32>
    %84 = vector.shape_cast %4 : vector<1x32xf32> to vector<1x1x32xf32>
    %85 = vector.broadcast %84 : vector<1x1x32xf32> to vector<2x16x32xf32>
    %86 = arith.mulf %83, %85 : vector<2x16x32xf32>
    %cst_49 = arith.constant dense<0.000000e+00> : vector<2x16xf32>
    %87 = vector.multi_reduction <add>, %86, %cst_49 [2] : vector<2x16x32xf32> to vector<2x16xf32>
    %cst_50 = arith.constant dense<0xFF800000> : vector<2xf32>
    %88 = vector.multi_reduction <maximumf>, %87, %cst_50 [1] : vector<2x16xf32> to vector<2xf32>
    %89 = vector.shape_cast %88 : vector<2xf32> to vector<2x1xf32>
    %90 = vector.broadcast %89 : vector<2x1xf32> to vector<2x16xf32>
    %91 = arith.subf %87, %90 : vector<2x16xf32>
    %92 = math.exp %91 : vector<2x16xf32>
    %cst_51 = arith.constant dense<0.000000e+00> : vector<2xf32>
    %93 = vector.multi_reduction <add>, %92, %cst_51 [1] : vector<2x16xf32> to vector<2xf32>
    %94 = vector.shape_cast %93 : vector<2xf32> to vector<2x1xf32>
    %95 = tpu.reciprocal %94 {approx = true} : vector<2x1xf32> -> vector<2x1xf32>
    %96 = vector.broadcast %95 : vector<2x1xf32> to vector<2x16xf32>
    %97 = arith.mulf %92, %96 : vector<2x16xf32>
    %98 = vector.shape_cast %97 : vector<2x16xf32> to vector<2x16x1xf32>
    %99 = vector.broadcast %98 : vector<2x16x1xf32> to vector<2x16x24xf32>
    %100 = arith.mulf %99, %0 : vector<2x16x24xf32>
    %cst_52 = arith.constant dense<0.000000e+00> : vector<2x24xf32>
    %101 = vector.multi_reduction <add>, %100, %cst_52 [1] : vector<2x16x24xf32> to vector<2x24xf32>
    %c0_53 = arith.constant 0 : index
    %c1 = arith.constant 1 : index
    %c0_54 = arith.constant 0 : index
    %c0_55 = arith.constant 0 : index
    %102 = vector.load %arg1[%c0_53, %c1, %c0_54, %c0_55] : memref<1x8x2x128xf32, #tpu.memory_space<vmem>>, vector<1x1x2x128xf32>
    %103 = vector.shape_cast %102 : vector<1x1x2x128xf32> to vector<2x128xf32>
    %cst_56 = arith.constant dense<0.000000e+00> : vector<2x128xf32>
    %104 = tpu.matmul %101, %8, %cst_56 {dimension_numbers = #tpu.dot_dimension_numbers<[1], [0], [0], [1], [0, 0, 1, 1], [], []>} : vector<2x24xf32>, vector<24x128xf32>, vector<2x128xf32> -> vector<2x128xf32>
    %105 = arith.addf %103, %104 : vector<2x128xf32>
    %cst_57 = arith.constant dense<0.000000e+00> : vector<2x128xf32>
    %106 = tpu.matmul %72, %10, %cst_57 {dimension_numbers = #tpu.dot_dimension_numbers<[1], [0], [0], [1], [0, 0, 1, 1], [], []>} : vector<2x32xf32>, vector<32x128xf32>, vector<2x128xf32> -> vector<2x128xf32>
    %107 = arith.addf %105, %106 : vector<2x128xf32>
    %108 = vector.broadcast %12 : vector<1x128xf32> to vector<2x128xf32>
    %109 = arith.addf %107, %108 : vector<2x128xf32>
    %110 = vector.extract_strided_slice %109 {offsets = [0, 0], sizes = [2, 32], strides = [1, 1]} : vector<2x128xf32> to vector<2x32xf32>
    %111 = arith.negf %110 : vector<2x32xf32>
    %112 = math.exp %111 : vector<2x32xf32>
    %cst_58 = arith.constant 1.000000e+00 : f32
    %113 = vector.broadcast %cst_58 : f32 to vector<2x32xf32>
    %114 = arith.addf %113, %112 : vector<2x32xf32>
    %115 = arith.divf %113, %114 : vector<2x32xf32>
    %116 = vector.extract_strided_slice %109 {offsets = [0, 32], sizes = [2, 32], strides = [1, 1]} : vector<2x128xf32> to vector<2x32xf32>
    %117 = arith.negf %116 : vector<2x32xf32>
    %118 = math.exp %117 : vector<2x32xf32>
    %cst_59 = arith.constant 1.000000e+00 : f32
    %119 = vector.broadcast %cst_59 : f32 to vector<2x32xf32>
    %120 = arith.addf %119, %118 : vector<2x32xf32>
    %121 = arith.divf %119, %120 : vector<2x32xf32>
    %122 = vector.extract_strided_slice %109 {offsets = [0, 64], sizes = [2, 32], strides = [1, 1]} : vector<2x128xf32> to vector<2x32xf32>
    %123 = math.tanh %122 : vector<2x32xf32>
    %124 = vector.extract_strided_slice %109 {offsets = [0, 96], sizes = [2, 32], strides = [1, 1]} : vector<2x128xf32> to vector<2x32xf32>
    %125 = arith.negf %124 : vector<2x32xf32>
    %126 = math.exp %125 : vector<2x32xf32>
    %cst_60 = arith.constant 1.000000e+00 : f32
    %127 = vector.broadcast %cst_60 : f32 to vector<2x32xf32>
    %128 = arith.addf %127, %126 : vector<2x32xf32>
    %129 = arith.divf %127, %128 : vector<2x32xf32>
    %130 = arith.mulf %121, %70 : vector<2x32xf32>
    %131 = arith.mulf %115, %123 : vector<2x32xf32>
    %132 = arith.addf %130, %131 : vector<2x32xf32>
    %133 = math.tanh %132 : vector<2x32xf32>
    %134 = arith.mulf %129, %133 : vector<2x32xf32>
    %c0_61 = arith.constant 0 : index
    %c1_62 = arith.constant 1 : index
    %c0_63 = arith.constant 0 : index
    %c0_64 = arith.constant 0 : index
    %135 = vector.load %arg11[%c0_61, %c1_62, %c0_63, %c0_64] : memref<1x8x2x32xf32, #tpu.memory_space<vmem>>, vector<1x1x2x32xf32>
    %136 = vector.shape_cast %135 : vector<1x1x2x32xf32> to vector<2x32xf32>
    %137 = vector.shape_cast %134 : vector<2x32xf32> to vector<1x1x2x32xf32>
    tpu.vector_store %arg11[%c0_61, %c1_62, %c0_63, %c0_64], %137 {strides = array<i32>} : memref<1x8x2x32xf32, #tpu.memory_space<vmem>>, vector<1x1x2x32xf32>,
    %c0_65 = arith.constant 0 : index
    %c1_66 = arith.constant 1 : index
    %c0_67 = arith.constant 0 : index
    %c0_68 = arith.constant 0 : index
    %138 = vector.load %arg12[%c0_65, %c1_66, %c0_67, %c0_68] : memref<1x8x2x32xf32, #tpu.memory_space<vmem>>, vector<1x1x2x32xf32>
    %139 = vector.shape_cast %138 : vector<1x1x2x32xf32> to vector<2x32xf32>
    %140 = vector.shape_cast %132 : vector<2x32xf32> to vector<1x1x2x32xf32>
    tpu.vector_store %arg12[%c0_65, %c1_66, %c0_67, %c0_68], %140 {strides = array<i32>} : memref<1x8x2x32xf32, #tpu.memory_space<vmem>>, vector<1x1x2x32xf32>,
    %cst_69 = arith.constant dense<0.000000e+00> : vector<2x32xf32>
    %141 = tpu.matmul %132, %6, %cst_69 {dimension_numbers = #tpu.dot_dimension_numbers<[1], [0], [0], [1], [0, 0, 1, 1], [], []>} : vector<2x32xf32>, vector<32x32xf32>, vector<2x32xf32> -> vector<2x32xf32>
    %142 = vector.shape_cast %141 : vector<2x32xf32> to vector<2x1x32xf32>
    %143 = vector.broadcast %142 : vector<2x1x32xf32> to vector<2x16x32xf32>
    %144 = arith.addf %2, %143 : vector<2x16x32xf32>
    %145 = math.tanh %144 : vector<2x16x32xf32>
    %146 = vector.shape_cast %4 : vector<1x32xf32> to vector<1x1x32xf32>
    %147 = vector.broadcast %146 : vector<1x1x32xf32> to vector<2x16x32xf32>
    %148 = arith.mulf %145, %147 : vector<2x16x32xf32>
    %cst_70 = arith.constant dense<0.000000e+00> : vector<2x16xf32>
    %149 = vector.multi_reduction <add>, %148, %cst_70 [2] : vector<2x16x32xf32> to vector<2x16xf32>
    %cst_71 = arith.constant dense<0xFF800000> : vector<2xf32>
    %150 = vector.multi_reduction <maximumf>, %149, %cst_71 [1] : vector<2x16xf32> to vector<2xf32>
    %151 = vector.shape_cast %150 : vector<2xf32> to vector<2x1xf32>
    %152 = vector.broadcast %151 : vector<2x1xf32> to vector<2x16xf32>
    %153 = arith.subf %149, %152 : vector<2x16xf32>
    %154 = math.exp %153 : vector<2x16xf32>
    %cst_72 = arith.constant dense<0.000000e+00> : vector<2xf32>
    %155 = vector.multi_reduction <add>, %154, %cst_72 [1] : vector<2x16xf32> to vector<2xf32>
    %156 = vector.shape_cast %155 : vector<2xf32> to vector<2x1xf32>
    %157 = tpu.reciprocal %156 {approx = true} : vector<2x1xf32> -> vector<2x1xf32>
    %158 = vector.broadcast %157 : vector<2x1xf32> to vector<2x16xf32>
    %159 = arith.mulf %154, %158 : vector<2x16xf32>
    %160 = vector.shape_cast %159 : vector<2x16xf32> to vector<2x16x1xf32>
    %161 = vector.broadcast %160 : vector<2x16x1xf32> to vector<2x16x24xf32>
    %162 = arith.mulf %161, %0 : vector<2x16x24xf32>
    %cst_73 = arith.constant dense<0.000000e+00> : vector<2x24xf32>
    %163 = vector.multi_reduction <add>, %162, %cst_73 [1] : vector<2x16x24xf32> to vector<2x24xf32>
    %c0_74 = arith.constant 0 : index
    %c2 = arith.constant 2 : index
    %c0_75 = arith.constant 0 : index
    %c0_76 = arith.constant 0 : index
    %164 = vector.load %arg1[%c0_74, %c2, %c0_75, %c0_76] : memref<1x8x2x128xf32, #tpu.memory_space<vmem>>, vector<1x1x2x128xf32>
    %165 = vector.shape_cast %164 : vector<1x1x2x128xf32> to vector<2x128xf32>
    %cst_77 = arith.constant dense<0.000000e+00> : vector<2x128xf32>
    %166 = tpu.matmul %163, %8, %cst_77 {dimension_numbers = #tpu.dot_dimension_numbers<[1], [0], [0], [1], [0, 0, 1, 1], [], []>} : vector<2x24xf32>, vector<24x128xf32>, vector<2x128xf32> -> vector<2x128xf32>
    %167 = arith.addf %165, %166 : vector<2x128xf32>
    %cst_78 = arith.constant dense<0.000000e+00> : vector<2x128xf32>
    %168 = tpu.matmul %134, %10, %cst_78 {dimension_numbers = #tpu.dot_dimension_numbers<[1], [0], [0], [1], [0, 0, 1, 1], [], []>} : vector<2x32xf32>, vector<32x128xf32>, vector<2x128xf32> -> vector<2x128xf32>
    %169 = arith.addf %167, %168 : vector<2x128xf32>
    %170 = vector.broadcast %12 : vector<1x128xf32> to vector<2x128xf32>
    %171 = arith.addf %169, %170 : vector<2x128xf32>
    %172 = vector.extract_strided_slice %171 {offsets = [0, 0], sizes = [2, 32], strides = [1, 1]} : vector<2x128xf32> to vector<2x32xf32>
    %173 = arith.negf %172 : vector<2x32xf32>
    %174 = math.exp %173 : vector<2x32xf32>
    %cst_79 = arith.constant 1.000000e+00 : f32
    %175 = vector.broadcast %cst_79 : f32 to vector<2x32xf32>
    %176 = arith.addf %175, %174 : vector<2x32xf32>
    %177 = arith.divf %175, %176 : vector<2x32xf32>
    %178 = vector.extract_strided_slice %171 {offsets = [0, 32], sizes = [2, 32], strides = [1, 1]} : vector<2x128xf32> to vector<2x32xf32>
    %179 = arith.negf %178 : vector<2x32xf32>
    %180 = math.exp %179 : vector<2x32xf32>
    %cst_80 = arith.constant 1.000000e+00 : f32
    %181 = vector.broadcast %cst_80 : f32 to vector<2x32xf32>
    %182 = arith.addf %181, %180 : vector<2x32xf32>
    %183 = arith.divf %181, %182 : vector<2x32xf32>
    %184 = vector.extract_strided_slice %171 {offsets = [0, 64], sizes = [2, 32], strides = [1, 1]} : vector<2x128xf32> to vector<2x32xf32>
    %185 = math.tanh %184 : vector<2x32xf32>
    %186 = vector.extract_strided_slice %171 {offsets = [0, 96], sizes = [2, 32], strides = [1, 1]} : vector<2x128xf32> to vector<2x32xf32>
    %187 = arith.negf %186 : vector<2x32xf32>
    %188 = math.exp %187 : vector<2x32xf32>
    %cst_81 = arith.constant 1.000000e+00 : f32
    %189 = vector.broadcast %cst_81 : f32 to vector<2x32xf32>
    %190 = arith.addf %189, %188 : vector<2x32xf32>
    %191 = arith.divf %189, %190 : vector<2x32xf32>
    %192 = arith.mulf %183, %132 : vector<2x32xf32>
    %193 = arith.mulf %177, %185 : vector<2x32xf32>
    %194 = arith.addf %192, %193 : vector<2x32xf32>
    %195 = math.tanh %194 : vector<2x32xf32>
    %196 = arith.mulf %191, %195 : vector<2x32xf32>
    %c0_82 = arith.constant 0 : index
    %c2_83 = arith.constant 2 : index
    %c0_84 = arith.constant 0 : index
    %c0_85 = arith.constant 0 : index
    %197 = vector.load %arg11[%c0_82, %c2_83, %c0_84, %c0_85] : memref<1x8x2x32xf32, #tpu.memory_space<vmem>>, vector<1x1x2x32xf32>
    %198 = vector.shape_cast %197 : vector<1x1x2x32xf32> to vector<2x32xf32>
    %199 = vector.shape_cast %196 : vector<2x32xf32> to vector<1x1x2x32xf32>
    tpu.vector_store %arg11[%c0_82, %c2_83, %c0_84, %c0_85], %199 {strides = array<i32>} : memref<1x8x2x32xf32, #tpu.memory_space<vmem>>, vector<1x1x2x32xf32>,
    %c0_86 = arith.constant 0 : index
    %c2_87 = arith.constant 2 : index
    %c0_88 = arith.constant 0 : index
    %c0_89 = arith.constant 0 : index
    %200 = vector.load %arg12[%c0_86, %c2_87, %c0_88, %c0_89] : memref<1x8x2x32xf32, #tpu.memory_space<vmem>>, vector<1x1x2x32xf32>
    %201 = vector.shape_cast %200 : vector<1x1x2x32xf32> to vector<2x32xf32>
    %202 = vector.shape_cast %194 : vector<2x32xf32> to vector<1x1x2x32xf32>
    tpu.vector_store %arg12[%c0_86, %c2_87, %c0_88, %c0_89], %202 {strides = array<i32>} : memref<1x8x2x32xf32, #tpu.memory_space<vmem>>, vector<1x1x2x32xf32>,
    %cst_90 = arith.constant dense<0.000000e+00> : vector<2x32xf32>
    %203 = tpu.matmul %194, %6, %cst_90 {dimension_numbers = #tpu.dot_dimension_numbers<[1], [0], [0], [1], [0, 0, 1, 1], [], []>} : vector<2x32xf32>, vector<32x32xf32>, vector<2x32xf32> -> vector<2x32xf32>
    %204 = vector.shape_cast %203 : vector<2x32xf32> to vector<2x1x32xf32>
    %205 = vector.broadcast %204 : vector<2x1x32xf32> to vector<2x16x32xf32>
    %206 = arith.addf %2, %205 : vector<2x16x32xf32>
    %207 = math.tanh %206 : vector<2x16x32xf32>
    %208 = vector.shape_cast %4 : vector<1x32xf32> to vector<1x1x32xf32>
    %209 = vector.broadcast %208 : vector<1x1x32xf32> to vector<2x16x32xf32>
    %210 = arith.mulf %207, %209 : vector<2x16x32xf32>
    %cst_91 = arith.constant dense<0.000000e+00> : vector<2x16xf32>
    %211 = vector.multi_reduction <add>, %210, %cst_91 [2] : vector<2x16x32xf32> to vector<2x16xf32>
    %cst_92 = arith.constant dense<0xFF800000> : vector<2xf32>
    %212 = vector.multi_reduction <maximumf>, %211, %cst_92 [1] : vector<2x16xf32> to vector<2xf32>
    %213 = vector.shape_cast %212 : vector<2xf32> to vector<2x1xf32>
    %214 = vector.broadcast %213 : vector<2x1xf32> to vector<2x16xf32>
    %215 = arith.subf %211, %214 : vector<2x16xf32>
    %216 = math.exp %215 : vector<2x16xf32>
    %cst_93 = arith.constant dense<0.000000e+00> : vector<2xf32>
    %217 = vector.multi_reduction <add>, %216, %cst_93 [1] : vector<2x16xf32> to vector<2xf32>
    %218 = vector.shape_cast %217 : vector<2xf32> to vector<2x1xf32>
    %219 = tpu.reciprocal %218 {approx = true} : vector<2x1xf32> -> vector<2x1xf32>
    %220 = vector.broadcast %219 : vector<2x1xf32> to vector<2x16xf32>
    %221 = arith.mulf %216, %220 : vector<2x16xf32>
    %222 = vector.shape_cast %221 : vector<2x16xf32> to vector<2x16x1xf32>
    %223 = vector.broadcast %222 : vector<2x16x1xf32> to vector<2x16x24xf32>
    %224 = arith.mulf %223, %0 : vector<2x16x24xf32>
    %cst_94 = arith.constant dense<0.000000e+00> : vector<2x24xf32>
    %225 = vector.multi_reduction <add>, %224, %cst_94 [1] : vector<2x16x24xf32> to vector<2x24xf32>
    %c0_95 = arith.constant 0 : index
    %c3 = arith.constant 3 : index
    %c0_96 = arith.constant 0 : index
    %c0_97 = arith.constant 0 : index
    %226 = vector.load %arg1[%c0_95, %c3, %c0_96, %c0_97] : memref<1x8x2x128xf32, #tpu.memory_space<vmem>>, vector<1x1x2x128xf32>
    %227 = vector.shape_cast %226 : vector<1x1x2x128xf32> to vector<2x128xf32>
    %cst_98 = arith.constant dense<0.000000e+00> : vector<2x128xf32>
    %228 = tpu.matmul %225, %8, %cst_98 {dimension_numbers = #tpu.dot_dimension_numbers<[1], [0], [0], [1], [0, 0, 1, 1], [], []>} : vector<2x24xf32>, vector<24x128xf32>, vector<2x128xf32> -> vector<2x128xf32>
    %229 = arith.addf %227, %228 : vector<2x128xf32>
    %cst_99 = arith.constant dense<0.000000e+00> : vector<2x128xf32>
    %230 = tpu.matmul %196, %10, %cst_99 {dimension_numbers = #tpu.dot_dimension_numbers<[1], [0], [0], [1], [0, 0, 1, 1], [], []>} : vector<2x32xf32>, vector<32x128xf32>, vector<2x128xf32> -> vector<2x128xf32>
    %231 = arith.addf %229, %230 : vector<2x128xf32>
    %232 = vector.broadcast %12 : vector<1x128xf32> to vector<2x128xf32>
    %233 = arith.addf %231, %232 : vector<2x128xf32>
    %234 = vector.extract_strided_slice %233 {offsets = [0, 0], sizes = [2, 32], strides = [1, 1]} : vector<2x128xf32> to vector<2x32xf32>
    %235 = arith.negf %234 : vector<2x32xf32>
    %236 = math.exp %235 : vector<2x32xf32>
    %cst_100 = arith.constant 1.000000e+00 : f32
    %237 = vector.broadcast %cst_100 : f32 to vector<2x32xf32>
    %238 = arith.addf %237, %236 : vector<2x32xf32>
    %239 = arith.divf %237, %238 : vector<2x32xf32>
    %240 = vector.extract_strided_slice %233 {offsets = [0, 32], sizes = [2, 32], strides = [1, 1]} : vector<2x128xf32> to vector<2x32xf32>
    %241 = arith.negf %240 : vector<2x32xf32>
    %242 = math.exp %241 : vector<2x32xf32>
    %cst_101 = arith.constant 1.000000e+00 : f32
    %243 = vector.broadcast %cst_101 : f32 to vector<2x32xf32>
    %244 = arith.addf %243, %242 : vector<2x32xf32>
    %245 = arith.divf %243, %244 : vector<2x32xf32>
    %246 = vector.extract_strided_slice %233 {offsets = [0, 64], sizes = [2, 32], strides = [1, 1]} : vector<2x128xf32> to vector<2x32xf32>
    %247 = math.tanh %246 : vector<2x32xf32>
    %248 = vector.extract_strided_slice %233 {offsets = [0, 96], sizes = [2, 32], strides = [1, 1]} : vector<2x128xf32> to vector<2x32xf32>
    %249 = arith.negf %248 : vector<2x32xf32>
    %250 = math.exp %249 : vector<2x32xf32>
    %cst_102 = arith.constant 1.000000e+00 : f32
    %251 = vector.broadcast %cst_102 : f32 to vector<2x32xf32>
    %252 = arith.addf %251, %250 : vector<2x32xf32>
    %253 = arith.divf %251, %252 : vector<2x32xf32>
    %254 = arith.mulf %245, %194 : vector<2x32xf32>
    %255 = arith.mulf %239, %247 : vector<2x32xf32>
    %256 = arith.addf %254, %255 : vector<2x32xf32>
    %257 = math.tanh %256 : vector<2x32xf32>
    %258 = arith.mulf %253, %257 : vector<2x32xf32>
    %c0_103 = arith.constant 0 : index
    %c3_104 = arith.constant 3 : index
    %c0_105 = arith.constant 0 : index
    %c0_106 = arith.constant 0 : index
    %259 = vector.load %arg11[%c0_103, %c3_104, %c0_105, %c0_106] : memref<1x8x2x32xf32, #tpu.memory_space<vmem>>, vector<1x1x2x32xf32>
    %260 = vector.shape_cast %259 : vector<1x1x2x32xf32> to vector<2x32xf32>
    %261 = vector.shape_cast %258 : vector<2x32xf32> to vector<1x1x2x32xf32>
    tpu.vector_store %arg11[%c0_103, %c3_104, %c0_105, %c0_106], %261 {strides = array<i32>} : memref<1x8x2x32xf32, #tpu.memory_space<vmem>>, vector<1x1x2x32xf32>,
    %c0_107 = arith.constant 0 : index
    %c3_108 = arith.constant 3 : index
    %c0_109 = arith.constant 0 : index
    %c0_110 = arith.constant 0 : index
    %262 = vector.load %arg12[%c0_107, %c3_108, %c0_109, %c0_110] : memref<1x8x2x32xf32, #tpu.memory_space<vmem>>, vector<1x1x2x32xf32>
    %263 = vector.shape_cast %262 : vector<1x1x2x32xf32> to vector<2x32xf32>
    %264 = vector.shape_cast %256 : vector<2x32xf32> to vector<1x1x2x32xf32>
    tpu.vector_store %arg12[%c0_107, %c3_108, %c0_109, %c0_110], %264 {strides = array<i32>} : memref<1x8x2x32xf32, #tpu.memory_space<vmem>>, vector<1x1x2x32xf32>,
    %cst_111 = arith.constant dense<0.000000e+00> : vector<2x32xf32>
    %265 = tpu.matmul %256, %6, %cst_111 {dimension_numbers = #tpu.dot_dimension_numbers<[1], [0], [0], [1], [0, 0, 1, 1], [], []>} : vector<2x32xf32>, vector<32x32xf32>, vector<2x32xf32> -> vector<2x32xf32>
    %266 = vector.shape_cast %265 : vector<2x32xf32> to vector<2x1x32xf32>
    %267 = vector.broadcast %266 : vector<2x1x32xf32> to vector<2x16x32xf32>
    %268 = arith.addf %2, %267 : vector<2x16x32xf32>
    %269 = math.tanh %268 : vector<2x16x32xf32>
    %270 = vector.shape_cast %4 : vector<1x32xf32> to vector<1x1x32xf32>
    %271 = vector.broadcast %270 : vector<1x1x32xf32> to vector<2x16x32xf32>
    %272 = arith.mulf %269, %271 : vector<2x16x32xf32>
    %cst_112 = arith.constant dense<0.000000e+00> : vector<2x16xf32>
    %273 = vector.multi_reduction <add>, %272, %cst_112 [2] : vector<2x16x32xf32> to vector<2x16xf32>
    %cst_113 = arith.constant dense<0xFF800000> : vector<2xf32>
    %274 = vector.multi_reduction <maximumf>, %273, %cst_113 [1] : vector<2x16xf32> to vector<2xf32>
    %275 = vector.shape_cast %274 : vector<2xf32> to vector<2x1xf32>
    %276 = vector.broadcast %275 : vector<2x1xf32> to vector<2x16xf32>
    %277 = arith.subf %273, %276 : vector<2x16xf32>
    %278 = math.exp %277 : vector<2x16xf32>
    %cst_114 = arith.constant dense<0.000000e+00> : vector<2xf32>
    %279 = vector.multi_reduction <add>, %278, %cst_114 [1] : vector<2x16xf32> to vector<2xf32>
    %280 = vector.shape_cast %279 : vector<2xf32> to vector<2x1xf32>
    %281 = tpu.reciprocal %280 {approx = true} : vector<2x1xf32> -> vector<2x1xf32>
    %282 = vector.broadcast %281 : vector<2x1xf32> to vector<2x16xf32>
    %283 = arith.mulf %278, %282 : vector<2x16xf32>
    %284 = vector.shape_cast %283 : vector<2x16xf32> to vector<2x16x1xf32>
    %285 = vector.broadcast %284 : vector<2x16x1xf32> to vector<2x16x24xf32>
    %286 = arith.mulf %285, %0 : vector<2x16x24xf32>
    %cst_115 = arith.constant dense<0.000000e+00> : vector<2x24xf32>
    %287 = vector.multi_reduction <add>, %286, %cst_115 [1] : vector<2x16x24xf32> to vector<2x24xf32>
    %c0_116 = arith.constant 0 : index
    %c4 = arith.constant 4 : index
    %c0_117 = arith.constant 0 : index
    %c0_118 = arith.constant 0 : index
    %288 = vector.load %arg1[%c0_116, %c4, %c0_117, %c0_118] : memref<1x8x2x128xf32, #tpu.memory_space<vmem>>, vector<1x1x2x128xf32>
    %289 = vector.shape_cast %288 : vector<1x1x2x128xf32> to vector<2x128xf32>
    %cst_119 = arith.constant dense<0.000000e+00> : vector<2x128xf32>
    %290 = tpu.matmul %287, %8, %cst_119 {dimension_numbers = #tpu.dot_dimension_numbers<[1], [0], [0], [1], [0, 0, 1, 1], [], []>} : vector<2x24xf32>, vector<24x128xf32>, vector<2x128xf32> -> vector<2x128xf32>
    %291 = arith.addf %289, %290 : vector<2x128xf32>
    %cst_120 = arith.constant dense<0.000000e+00> : vector<2x128xf32>
    %292 = tpu.matmul %258, %10, %cst_120 {dimension_numbers = #tpu.dot_dimension_numbers<[1], [0], [0], [1], [0, 0, 1, 1], [], []>} : vector<2x32xf32>, vector<32x128xf32>, vector<2x128xf32> -> vector<2x128xf32>
    %293 = arith.addf %291, %292 : vector<2x128xf32>
    %294 = vector.broadcast %12 : vector<1x128xf32> to vector<2x128xf32>
    %295 = arith.addf %293, %294 : vector<2x128xf32>
    %296 = vector.extract_strided_slice %295 {offsets = [0, 0], sizes = [2, 32], strides = [1, 1]} : vector<2x128xf32> to vector<2x32xf32>
    %297 = arith.negf %296 : vector<2x32xf32>
    %298 = math.exp %297 : vector<2x32xf32>
    %cst_121 = arith.constant 1.000000e+00 : f32
    %299 = vector.broadcast %cst_121 : f32 to vector<2x32xf32>
    %300 = arith.addf %299, %298 : vector<2x32xf32>
    %301 = arith.divf %299, %300 : vector<2x32xf32>
    %302 = vector.extract_strided_slice %295 {offsets = [0, 32], sizes = [2, 32], strides = [1, 1]} : vector<2x128xf32> to vector<2x32xf32>
    %303 = arith.negf %302 : vector<2x32xf32>
    %304 = math.exp %303 : vector<2x32xf32>
    %cst_122 = arith.constant 1.000000e+00 : f32
    %305 = vector.broadcast %cst_122 : f32 to vector<2x32xf32>
    %306 = arith.addf %305, %304 : vector<2x32xf32>
    %307 = arith.divf %305, %306 : vector<2x32xf32>
    %308 = vector.extract_strided_slice %295 {offsets = [0, 64], sizes = [2, 32], strides = [1, 1]} : vector<2x128xf32> to vector<2x32xf32>
    %309 = math.tanh %308 : vector<2x32xf32>
    %310 = vector.extract_strided_slice %295 {offsets = [0, 96], sizes = [2, 32], strides = [1, 1]} : vector<2x128xf32> to vector<2x32xf32>
    %311 = arith.negf %310 : vector<2x32xf32>
    %312 = math.exp %311 : vector<2x32xf32>
    %cst_123 = arith.constant 1.000000e+00 : f32
    %313 = vector.broadcast %cst_123 : f32 to vector<2x32xf32>
    %314 = arith.addf %313, %312 : vector<2x32xf32>
    %315 = arith.divf %313, %314 : vector<2x32xf32>
    %316 = arith.mulf %307, %256 : vector<2x32xf32>
    %317 = arith.mulf %301, %309 : vector<2x32xf32>
    %318 = arith.addf %316, %317 : vector<2x32xf32>
    %319 = math.tanh %318 : vector<2x32xf32>
    %320 = arith.mulf %315, %319 : vector<2x32xf32>
    %c0_124 = arith.constant 0 : index
    %c4_125 = arith.constant 4 : index
    %c0_126 = arith.constant 0 : index
    %c0_127 = arith.constant 0 : index
    %321 = vector.load %arg11[%c0_124, %c4_125, %c0_126, %c0_127] : memref<1x8x2x32xf32, #tpu.memory_space<vmem>>, vector<1x1x2x32xf32>
    %322 = vector.shape_cast %321 : vector<1x1x2x32xf32> to vector<2x32xf32>
    %323 = vector.shape_cast %320 : vector<2x32xf32> to vector<1x1x2x32xf32>
    tpu.vector_store %arg11[%c0_124, %c4_125, %c0_126, %c0_127], %323 {strides = array<i32>} : memref<1x8x2x32xf32, #tpu.memory_space<vmem>>, vector<1x1x2x32xf32>,
    %c0_128 = arith.constant 0 : index
    %c4_129 = arith.constant 4 : index
    %c0_130 = arith.constant 0 : index
    %c0_131 = arith.constant 0 : index
    %324 = vector.load %arg12[%c0_128, %c4_129, %c0_130, %c0_131] : memref<1x8x2x32xf32, #tpu.memory_space<vmem>>, vector<1x1x2x32xf32>
    %325 = vector.shape_cast %324 : vector<1x1x2x32xf32> to vector<2x32xf32>
    %326 = vector.shape_cast %318 : vector<2x32xf32> to vector<1x1x2x32xf32>
    tpu.vector_store %arg12[%c0_128, %c4_129, %c0_130, %c0_131], %326 {strides = array<i32>} : memref<1x8x2x32xf32, #tpu.memory_space<vmem>>, vector<1x1x2x32xf32>,
    %cst_132 = arith.constant dense<0.000000e+00> : vector<2x32xf32>
    %327 = tpu.matmul %318, %6, %cst_132 {dimension_numbers = #tpu.dot_dimension_numbers<[1], [0], [0], [1], [0, 0, 1, 1], [], []>} : vector<2x32xf32>, vector<32x32xf32>, vector<2x32xf32> -> vector<2x32xf32>
    %328 = vector.shape_cast %327 : vector<2x32xf32> to vector<2x1x32xf32>
    %329 = vector.broadcast %328 : vector<2x1x32xf32> to vector<2x16x32xf32>
    %330 = arith.addf %2, %329 : vector<2x16x32xf32>
    %331 = math.tanh %330 : vector<2x16x32xf32>
    %332 = vector.shape_cast %4 : vector<1x32xf32> to vector<1x1x32xf32>
    %333 = vector.broadcast %332 : vector<1x1x32xf32> to vector<2x16x32xf32>
    %334 = arith.mulf %331, %333 : vector<2x16x32xf32>
    %cst_133 = arith.constant dense<0.000000e+00> : vector<2x16xf32>
    %335 = vector.multi_reduction <add>, %334, %cst_133 [2] : vector<2x16x32xf32> to vector<2x16xf32>
    %cst_134 = arith.constant dense<0xFF800000> : vector<2xf32>
    %336 = vector.multi_reduction <maximumf>, %335, %cst_134 [1] : vector<2x16xf32> to vector<2xf32>
    %337 = vector.shape_cast %336 : vector<2xf32> to vector<2x1xf32>
    %338 = vector.broadcast %337 : vector<2x1xf32> to vector<2x16xf32>
    %339 = arith.subf %335, %338 : vector<2x16xf32>
    %340 = math.exp %339 : vector<2x16xf32>
    %cst_135 = arith.constant dense<0.000000e+00> : vector<2xf32>
    %341 = vector.multi_reduction <add>, %340, %cst_135 [1] : vector<2x16xf32> to vector<2xf32>
    %342 = vector.shape_cast %341 : vector<2xf32> to vector<2x1xf32>
    %343 = tpu.reciprocal %342 {approx = true} : vector<2x1xf32> -> vector<2x1xf32>
    %344 = vector.broadcast %343 : vector<2x1xf32> to vector<2x16xf32>
    %345 = arith.mulf %340, %344 : vector<2x16xf32>
    %346 = vector.shape_cast %345 : vector<2x16xf32> to vector<2x16x1xf32>
    %347 = vector.broadcast %346 : vector<2x16x1xf32> to vector<2x16x24xf32>
    %348 = arith.mulf %347, %0 : vector<2x16x24xf32>
    %cst_136 = arith.constant dense<0.000000e+00> : vector<2x24xf32>
    %349 = vector.multi_reduction <add>, %348, %cst_136 [1] : vector<2x16x24xf32> to vector<2x24xf32>
    %c0_137 = arith.constant 0 : index
    %c5 = arith.constant 5 : index
    %c0_138 = arith.constant 0 : index
    %c0_139 = arith.constant 0 : index
    %350 = vector.load %arg1[%c0_137, %c5, %c0_138, %c0_139] : memref<1x8x2x128xf32, #tpu.memory_space<vmem>>, vector<1x1x2x128xf32>
    %351 = vector.shape_cast %350 : vector<1x1x2x128xf32> to vector<2x128xf32>
    %cst_140 = arith.constant dense<0.000000e+00> : vector<2x128xf32>
    %352 = tpu.matmul %349, %8, %cst_140 {dimension_numbers = #tpu.dot_dimension_numbers<[1], [0], [0], [1], [0, 0, 1, 1], [], []>} : vector<2x24xf32>, vector<24x128xf32>, vector<2x128xf32> -> vector<2x128xf32>
    %353 = arith.addf %351, %352 : vector<2x128xf32>
    %cst_141 = arith.constant dense<0.000000e+00> : vector<2x128xf32>
    %354 = tpu.matmul %320, %10, %cst_141 {dimension_numbers = #tpu.dot_dimension_numbers<[1], [0], [0], [1], [0, 0, 1, 1], [], []>} : vector<2x32xf32>, vector<32x128xf32>, vector<2x128xf32> -> vector<2x128xf32>
    %355 = arith.addf %353, %354 : vector<2x128xf32>
    %356 = vector.broadcast %12 : vector<1x128xf32> to vector<2x128xf32>
    %357 = arith.addf %355, %356 : vector<2x128xf32>
    %358 = vector.extract_strided_slice %357 {offsets = [0, 0], sizes = [2, 32], strides = [1, 1]} : vector<2x128xf32> to vector<2x32xf32>
    %359 = arith.negf %358 : vector<2x32xf32>
    %360 = math.exp %359 : vector<2x32xf32>
    %cst_142 = arith.constant 1.000000e+00 : f32
    %361 = vector.broadcast %cst_142 : f32 to vector<2x32xf32>
    %362 = arith.addf %361, %360 : vector<2x32xf32>
    %363 = arith.divf %361, %362 : vector<2x32xf32>
    %364 = vector.extract_strided_slice %357 {offsets = [0, 32], sizes = [2, 32], strides = [1, 1]} : vector<2x128xf32> to vector<2x32xf32>
    %365 = arith.negf %364 : vector<2x32xf32>
    %366 = math.exp %365 : vector<2x32xf32>
    %cst_143 = arith.constant 1.000000e+00 : f32
    %367 = vector.broadcast %cst_143 : f32 to vector<2x32xf32>
    %368 = arith.addf %367, %366 : vector<2x32xf32>
    %369 = arith.divf %367, %368 : vector<2x32xf32>
    %370 = vector.extract_strided_slice %357 {offsets = [0, 64], sizes = [2, 32], strides = [1, 1]} : vector<2x128xf32> to vector<2x32xf32>
    %371 = math.tanh %370 : vector<2x32xf32>
    %372 = vector.extract_strided_slice %357 {offsets = [0, 96], sizes = [2, 32], strides = [1, 1]} : vector<2x128xf32> to vector<2x32xf32>
    %373 = arith.negf %372 : vector<2x32xf32>
    %374 = math.exp %373 : vector<2x32xf32>
    %cst_144 = arith.constant 1.000000e+00 : f32
    %375 = vector.broadcast %cst_144 : f32 to vector<2x32xf32>
    %376 = arith.addf %375, %374 : vector<2x32xf32>
    %377 = arith.divf %375, %376 : vector<2x32xf32>
    %378 = arith.mulf %369, %318 : vector<2x32xf32>
    %379 = arith.mulf %363, %371 : vector<2x32xf32>
    %380 = arith.addf %378, %379 : vector<2x32xf32>
    %381 = math.tanh %380 : vector<2x32xf32>
    %382 = arith.mulf %377, %381 : vector<2x32xf32>
    %c0_145 = arith.constant 0 : index
    %c5_146 = arith.constant 5 : index
    %c0_147 = arith.constant 0 : index
    %c0_148 = arith.constant 0 : index
    %383 = vector.load %arg11[%c0_145, %c5_146, %c0_147, %c0_148] : memref<1x8x2x32xf32, #tpu.memory_space<vmem>>, vector<1x1x2x32xf32>
    %384 = vector.shape_cast %383 : vector<1x1x2x32xf32> to vector<2x32xf32>
    %385 = vector.shape_cast %382 : vector<2x32xf32> to vector<1x1x2x32xf32>
    tpu.vector_store %arg11[%c0_145, %c5_146, %c0_147, %c0_148], %385 {strides = array<i32>} : memref<1x8x2x32xf32, #tpu.memory_space<vmem>>, vector<1x1x2x32xf32>,
    %c0_149 = arith.constant 0 : index
    %c5_150 = arith.constant 5 : index
    %c0_151 = arith.constant 0 : index
    %c0_152 = arith.constant 0 : index
    %386 = vector.load %arg12[%c0_149, %c5_150, %c0_151, %c0_152] : memref<1x8x2x32xf32, #tpu.memory_space<vmem>>, vector<1x1x2x32xf32>
    %387 = vector.shape_cast %386 : vector<1x1x2x32xf32> to vector<2x32xf32>
    %388 = vector.shape_cast %380 : vector<2x32xf32> to vector<1x1x2x32xf32>
    tpu.vector_store %arg12[%c0_149, %c5_150, %c0_151, %c0_152], %388 {strides = array<i32>} : memref<1x8x2x32xf32, #tpu.memory_space<vmem>>, vector<1x1x2x32xf32>,
    %cst_153 = arith.constant dense<0.000000e+00> : vector<2x32xf32>
    %389 = tpu.matmul %380, %6, %cst_153 {dimension_numbers = #tpu.dot_dimension_numbers<[1], [0], [0], [1], [0, 0, 1, 1], [], []>} : vector<2x32xf32>, vector<32x32xf32>, vector<2x32xf32> -> vector<2x32xf32>
    %390 = vector.shape_cast %389 : vector<2x32xf32> to vector<2x1x32xf32>
    %391 = vector.broadcast %390 : vector<2x1x32xf32> to vector<2x16x32xf32>
    %392 = arith.addf %2, %391 : vector<2x16x32xf32>
    %393 = math.tanh %392 : vector<2x16x32xf32>
    %394 = vector.shape_cast %4 : vector<1x32xf32> to vector<1x1x32xf32>
    %395 = vector.broadcast %394 : vector<1x1x32xf32> to vector<2x16x32xf32>
    %396 = arith.mulf %393, %395 : vector<2x16x32xf32>
    %cst_154 = arith.constant dense<0.000000e+00> : vector<2x16xf32>
    %397 = vector.multi_reduction <add>, %396, %cst_154 [2] : vector<2x16x32xf32> to vector<2x16xf32>
    %cst_155 = arith.constant dense<0xFF800000> : vector<2xf32>
    %398 = vector.multi_reduction <maximumf>, %397, %cst_155 [1] : vector<2x16xf32> to vector<2xf32>
    %399 = vector.shape_cast %398 : vector<2xf32> to vector<2x1xf32>
    %400 = vector.broadcast %399 : vector<2x1xf32> to vector<2x16xf32>
    %401 = arith.subf %397, %400 : vector<2x16xf32>
    %402 = math.exp %401 : vector<2x16xf32>
    %cst_156 = arith.constant dense<0.000000e+00> : vector<2xf32>
    %403 = vector.multi_reduction <add>, %402, %cst_156 [1] : vector<2x16xf32> to vector<2xf32>
    %404 = vector.shape_cast %403 : vector<2xf32> to vector<2x1xf32>
    %405 = tpu.reciprocal %404 {approx = true} : vector<2x1xf32> -> vector<2x1xf32>
    %406 = vector.broadcast %405 : vector<2x1xf32> to vector<2x16xf32>
    %407 = arith.mulf %402, %406 : vector<2x16xf32>
    %408 = vector.shape_cast %407 : vector<2x16xf32> to vector<2x16x1xf32>
    %409 = vector.broadcast %408 : vector<2x16x1xf32> to vector<2x16x24xf32>
    %410 = arith.mulf %409, %0 : vector<2x16x24xf32>
    %cst_157 = arith.constant dense<0.000000e+00> : vector<2x24xf32>
    %411 = vector.multi_reduction <add>, %410, %cst_157 [1] : vector<2x16x24xf32> to vector<2x24xf32>
    %c0_158 = arith.constant 0 : index
    %c6 = arith.constant 6 : index
    %c0_159 = arith.constant 0 : index
    %c0_160 = arith.constant 0 : index
    %412 = vector.load %arg1[%c0_158, %c6, %c0_159, %c0_160] : memref<1x8x2x128xf32, #tpu.memory_space<vmem>>, vector<1x1x2x128xf32>
    %413 = vector.shape_cast %412 : vector<1x1x2x128xf32> to vector<2x128xf32>
    %cst_161 = arith.constant dense<0.000000e+00> : vector<2x128xf32>
    %414 = tpu.matmul %411, %8, %cst_161 {dimension_numbers = #tpu.dot_dimension_numbers<[1], [0], [0], [1], [0, 0, 1, 1], [], []>} : vector<2x24xf32>, vector<24x128xf32>, vector<2x128xf32> -> vector<2x128xf32>
    %415 = arith.addf %413, %414 : vector<2x128xf32>
    %cst_162 = arith.constant dense<0.000000e+00> : vector<2x128xf32>
    %416 = tpu.matmul %382, %10, %cst_162 {dimension_numbers = #tpu.dot_dimension_numbers<[1], [0], [0], [1], [0, 0, 1, 1], [], []>} : vector<2x32xf32>, vector<32x128xf32>, vector<2x128xf32> -> vector<2x128xf32>
    %417 = arith.addf %415, %416 : vector<2x128xf32>
    %418 = vector.broadcast %12 : vector<1x128xf32> to vector<2x128xf32>
    %419 = arith.addf %417, %418 : vector<2x128xf32>
    %420 = vector.extract_strided_slice %419 {offsets = [0, 0], sizes = [2, 32], strides = [1, 1]} : vector<2x128xf32> to vector<2x32xf32>
    %421 = arith.negf %420 : vector<2x32xf32>
    %422 = math.exp %421 : vector<2x32xf32>
    %cst_163 = arith.constant 1.000000e+00 : f32
    %423 = vector.broadcast %cst_163 : f32 to vector<2x32xf32>
    %424 = arith.addf %423, %422 : vector<2x32xf32>
    %425 = arith.divf %423, %424 : vector<2x32xf32>
    %426 = vector.extract_strided_slice %419 {offsets = [0, 32], sizes = [2, 32], strides = [1, 1]} : vector<2x128xf32> to vector<2x32xf32>
    %427 = arith.negf %426 : vector<2x32xf32>
    %428 = math.exp %427 : vector<2x32xf32>
    %cst_164 = arith.constant 1.000000e+00 : f32
    %429 = vector.broadcast %cst_164 : f32 to vector<2x32xf32>
    %430 = arith.addf %429, %428 : vector<2x32xf32>
    %431 = arith.divf %429, %430 : vector<2x32xf32>
    %432 = vector.extract_strided_slice %419 {offsets = [0, 64], sizes = [2, 32], strides = [1, 1]} : vector<2x128xf32> to vector<2x32xf32>
    %433 = math.tanh %432 : vector<2x32xf32>
    %434 = vector.extract_strided_slice %419 {offsets = [0, 96], sizes = [2, 32], strides = [1, 1]} : vector<2x128xf32> to vector<2x32xf32>
    %435 = arith.negf %434 : vector<2x32xf32>
    %436 = math.exp %435 : vector<2x32xf32>
    %cst_165 = arith.constant 1.000000e+00 : f32
    %437 = vector.broadcast %cst_165 : f32 to vector<2x32xf32>
    %438 = arith.addf %437, %436 : vector<2x32xf32>
    %439 = arith.divf %437, %438 : vector<2x32xf32>
    %440 = arith.mulf %431, %380 : vector<2x32xf32>
    %441 = arith.mulf %425, %433 : vector<2x32xf32>
    %442 = arith.addf %440, %441 : vector<2x32xf32>
    %443 = math.tanh %442 : vector<2x32xf32>
    %444 = arith.mulf %439, %443 : vector<2x32xf32>
    %c0_166 = arith.constant 0 : index
    %c6_167 = arith.constant 6 : index
    %c0_168 = arith.constant 0 : index
    %c0_169 = arith.constant 0 : index
    %445 = vector.load %arg11[%c0_166, %c6_167, %c0_168, %c0_169] : memref<1x8x2x32xf32, #tpu.memory_space<vmem>>, vector<1x1x2x32xf32>
    %446 = vector.shape_cast %445 : vector<1x1x2x32xf32> to vector<2x32xf32>
    %447 = vector.shape_cast %444 : vector<2x32xf32> to vector<1x1x2x32xf32>
    tpu.vector_store %arg11[%c0_166, %c6_167, %c0_168, %c0_169], %447 {strides = array<i32>} : memref<1x8x2x32xf32, #tpu.memory_space<vmem>>, vector<1x1x2x32xf32>,
    %c0_170 = arith.constant 0 : index
    %c6_171 = arith.constant 6 : index
    %c0_172 = arith.constant 0 : index
    %c0_173 = arith.constant 0 : index
    %448 = vector.load %arg12[%c0_170, %c6_171, %c0_172, %c0_173] : memref<1x8x2x32xf32, #tpu.memory_space<vmem>>, vector<1x1x2x32xf32>
    %449 = vector.shape_cast %448 : vector<1x1x2x32xf32> to vector<2x32xf32>
    %450 = vector.shape_cast %442 : vector<2x32xf32> to vector<1x1x2x32xf32>
    tpu.vector_store %arg12[%c0_170, %c6_171, %c0_172, %c0_173], %450 {strides = array<i32>} : memref<1x8x2x32xf32, #tpu.memory_space<vmem>>, vector<1x1x2x32xf32>,
    %cst_174 = arith.constant dense<0.000000e+00> : vector<2x32xf32>
    %451 = tpu.matmul %442, %6, %cst_174 {dimension_numbers = #tpu.dot_dimension_numbers<[1], [0], [0], [1], [0, 0, 1, 1], [], []>} : vector<2x32xf32>, vector<32x32xf32>, vector<2x32xf32> -> vector<2x32xf32>
    %452 = vector.shape_cast %451 : vector<2x32xf32> to vector<2x1x32xf32>
    %453 = vector.broadcast %452 : vector<2x1x32xf32> to vector<2x16x32xf32>
    %454 = arith.addf %2, %453 : vector<2x16x32xf32>
    %455 = math.tanh %454 : vector<2x16x32xf32>
    %456 = vector.shape_cast %4 : vector<1x32xf32> to vector<1x1x32xf32>
    %457 = vector.broadcast %456 : vector<1x1x32xf32> to vector<2x16x32xf32>
    %458 = arith.mulf %455, %457 : vector<2x16x32xf32>
    %cst_175 = arith.constant dense<0.000000e+00> : vector<2x16xf32>
    %459 = vector.multi_reduction <add>, %458, %cst_175 [2] : vector<2x16x32xf32> to vector<2x16xf32>
    %cst_176 = arith.constant dense<0xFF800000> : vector<2xf32>
    %460 = vector.multi_reduction <maximumf>, %459, %cst_176 [1] : vector<2x16xf32> to vector<2xf32>
    %461 = vector.shape_cast %460 : vector<2xf32> to vector<2x1xf32>
    %462 = vector.broadcast %461 : vector<2x1xf32> to vector<2x16xf32>
    %463 = arith.subf %459, %462 : vector<2x16xf32>
    %464 = math.exp %463 : vector<2x16xf32>
    %cst_177 = arith.constant dense<0.000000e+00> : vector<2xf32>
    %465 = vector.multi_reduction <add>, %464, %cst_177 [1] : vector<2x16xf32> to vector<2xf32>
    %466 = vector.shape_cast %465 : vector<2xf32> to vector<2x1xf32>
    %467 = tpu.reciprocal %466 {approx = true} : vector<2x1xf32> -> vector<2x1xf32>
    %468 = vector.broadcast %467 : vector<2x1xf32> to vector<2x16xf32>
    %469 = arith.mulf %464, %468 : vector<2x16xf32>
    %470 = vector.shape_cast %469 : vector<2x16xf32> to vector<2x16x1xf32>
    %471 = vector.broadcast %470 : vector<2x16x1xf32> to vector<2x16x24xf32>
    %472 = arith.mulf %471, %0 : vector<2x16x24xf32>
    %cst_178 = arith.constant dense<0.000000e+00> : vector<2x24xf32>
    %473 = vector.multi_reduction <add>, %472, %cst_178 [1] : vector<2x16x24xf32> to vector<2x24xf32>
    %c0_179 = arith.constant 0 : index
    %c7 = arith.constant 7 : index
    %c0_180 = arith.constant 0 : index
    %c0_181 = arith.constant 0 : index
    %474 = vector.load %arg1[%c0_179, %c7, %c0_180, %c0_181] : memref<1x8x2x128xf32, #tpu.memory_space<vmem>>, vector<1x1x2x128xf32>
    %475 = vector.shape_cast %474 : vector<1x1x2x128xf32> to vector<2x128xf32>
    %cst_182 = arith.constant dense<0.000000e+00> : vector<2x128xf32>
    %476 = tpu.matmul %473, %8, %cst_182 {dimension_numbers = #tpu.dot_dimension_numbers<[1], [0], [0], [1], [0, 0, 1, 1], [], []>} : vector<2x24xf32>, vector<24x128xf32>, vector<2x128xf32> -> vector<2x128xf32>
    %477 = arith.addf %475, %476 : vector<2x128xf32>
    %cst_183 = arith.constant dense<0.000000e+00> : vector<2x128xf32>
    %478 = tpu.matmul %444, %10, %cst_183 {dimension_numbers = #tpu.dot_dimension_numbers<[1], [0], [0], [1], [0, 0, 1, 1], [], []>} : vector<2x32xf32>, vector<32x128xf32>, vector<2x128xf32> -> vector<2x128xf32>
    %479 = arith.addf %477, %478 : vector<2x128xf32>
    %480 = vector.broadcast %12 : vector<1x128xf32> to vector<2x128xf32>
    %481 = arith.addf %479, %480 : vector<2x128xf32>
    %482 = vector.extract_strided_slice %481 {offsets = [0, 0], sizes = [2, 32], strides = [1, 1]} : vector<2x128xf32> to vector<2x32xf32>
    %483 = arith.negf %482 : vector<2x32xf32>
    %484 = math.exp %483 : vector<2x32xf32>
    %cst_184 = arith.constant 1.000000e+00 : f32
    %485 = vector.broadcast %cst_184 : f32 to vector<2x32xf32>
    %486 = arith.addf %485, %484 : vector<2x32xf32>
    %487 = arith.divf %485, %486 : vector<2x32xf32>
    %488 = vector.extract_strided_slice %481 {offsets = [0, 32], sizes = [2, 32], strides = [1, 1]} : vector<2x128xf32> to vector<2x32xf32>
    %489 = arith.negf %488 : vector<2x32xf32>
    %490 = math.exp %489 : vector<2x32xf32>
    %cst_185 = arith.constant 1.000000e+00 : f32
    %491 = vector.broadcast %cst_185 : f32 to vector<2x32xf32>
    %492 = arith.addf %491, %490 : vector<2x32xf32>
    %493 = arith.divf %491, %492 : vector<2x32xf32>
    %494 = vector.extract_strided_slice %481 {offsets = [0, 64], sizes = [2, 32], strides = [1, 1]} : vector<2x128xf32> to vector<2x32xf32>
    %495 = math.tanh %494 : vector<2x32xf32>
    %496 = vector.extract_strided_slice %481 {offsets = [0, 96], sizes = [2, 32], strides = [1, 1]} : vector<2x128xf32> to vector<2x32xf32>
    %497 = arith.negf %496 : vector<2x32xf32>
    %498 = math.exp %497 : vector<2x32xf32>
    %cst_186 = arith.constant 1.000000e+00 : f32
    %499 = vector.broadcast %cst_186 : f32 to vector<2x32xf32>
    %500 = arith.addf %499, %498 : vector<2x32xf32>
    %501 = arith.divf %499, %500 : vector<2x32xf32>
    %502 = arith.mulf %493, %442 : vector<2x32xf32>
    %503 = arith.mulf %487, %495 : vector<2x32xf32>
    %504 = arith.addf %502, %503 : vector<2x32xf32>
    %505 = math.tanh %504 : vector<2x32xf32>
    %506 = arith.mulf %501, %505 : vector<2x32xf32>
    %c0_187 = arith.constant 0 : index
    %c7_188 = arith.constant 7 : index
    %c0_189 = arith.constant 0 : index
    %c0_190 = arith.constant 0 : index
    %507 = vector.load %arg11[%c0_187, %c7_188, %c0_189, %c0_190] : memref<1x8x2x32xf32, #tpu.memory_space<vmem>>, vector<1x1x2x32xf32>
    %508 = vector.shape_cast %507 : vector<1x1x2x32xf32> to vector<2x32xf32>
    %509 = vector.shape_cast %506 : vector<2x32xf32> to vector<1x1x2x32xf32>
    tpu.vector_store %arg11[%c0_187, %c7_188, %c0_189, %c0_190], %509 {strides = array<i32>} : memref<1x8x2x32xf32, #tpu.memory_space<vmem>>, vector<1x1x2x32xf32>,
    %c0_191 = arith.constant 0 : index
    %c7_192 = arith.constant 7 : index
    %c0_193 = arith.constant 0 : index
    %c0_194 = arith.constant 0 : index
    %510 = vector.load %arg12[%c0_191, %c7_192, %c0_193, %c0_194] : memref<1x8x2x32xf32, #tpu.memory_space<vmem>>, vector<1x1x2x32xf32>
    %511 = vector.shape_cast %510 : vector<1x1x2x32xf32> to vector<2x32xf32>
    %512 = vector.shape_cast %504 : vector<2x32xf32> to vector<1x1x2x32xf32>
    tpu.vector_store %arg12[%c0_191, %c7_192, %c0_193, %c0_194], %512 {strides = array<i32>} : memref<1x8x2x32xf32, #tpu.memory_space<vmem>>, vector<1x1x2x32xf32>,
    return
  }
  func.func @transform_0(%arg0: i32) -> (i32, i32, i32, i32) {
    %c0_i32 = arith.constant 0 : i32
    %c0_i32_0 = arith.constant 0 : i32
    %c0_i32_1 = arith.constant 0 : i32
    %c0_i32_2 = arith.constant 0 : i32
    return %arg0, %c0_i32, %c0_i32_0, %c0_i32_1 : i32, i32, i32, i32
  }
  func.func @transform_1(%arg0: i32) -> (i32, i32, i32, i32) {
    %c0_i32 = arith.constant 0 : i32
    %c0_i32_0 = arith.constant 0 : i32
    %c0_i32_1 = arith.constant 0 : i32
    %c0_i32_2 = arith.constant 0 : i32
    return %arg0, %c0_i32, %c0_i32_0, %c0_i32_1 : i32, i32, i32, i32
  }
  func.func @transform_2(%arg0: i32) -> (i32, i32, i32) {
    %c0_i32 = arith.constant 0 : i32
    %c0_i32_0 = arith.constant 0 : i32
    %c0_i32_1 = arith.constant 0 : i32
    %c0_i32_2 = arith.constant 0 : i32
    return %c0_i32, %c0_i32_0, %c0_i32_1 : i32, i32, i32
  }
  func.func @transform_3(%arg0: i32) -> (i32, i32, i32) {
    %c0_i32 = arith.constant 0 : i32
    %c0_i32_0 = arith.constant 0 : i32
    %c0_i32_1 = arith.constant 0 : i32
    return %arg0, %c0_i32, %c0_i32_0 : i32, i32, i32
  }
  func.func @transform_4(%arg0: i32) -> (i32, i32, i32) {
    %c0_i32 = arith.constant 0 : i32
    %c0_i32_0 = arith.constant 0 : i32
    %c0_i32_1 = arith.constant 0 : i32
    return %arg0, %c0_i32, %c0_i32_0 : i32, i32, i32
  }
  func.func @transform_5(%arg0: i32) -> (i32, i32, i32) {
    %c0_i32 = arith.constant 0 : i32
    %c0_i32_0 = arith.constant 0 : i32
    %c0_i32_1 = arith.constant 0 : i32
    return %arg0, %c0_i32, %c0_i32_0 : i32, i32, i32
  }
  func.func @transform_6(%arg0: i32) -> (i32, i32, i32) {
    %c0_i32 = arith.constant 0 : i32
    %c0_i32_0 = arith.constant 0 : i32
    %c0_i32_1 = arith.constant 0 : i32
    return %arg0, %c0_i32, %c0_i32_0 : i32, i32, i32
  }
  func.func @transform_7(%arg0: i32) -> (i32, i32, i32) {
    %c0_i32 = arith.constant 0 : i32
    %c0_i32_0 = arith.constant 0 : i32
    %c0_i32_1 = arith.constant 0 : i32
    return %arg0, %c0_i32, %c0_i32_0 : i32, i32, i32
  }
  func.func @transform_8(%arg0: i32) -> (i32, i32, i32) {
    %c0_i32 = arith.constant 0 : i32
    %c0_i32_0 = arith.constant 0 : i32
    %c0_i32_1 = arith.constant 0 : i32
    return %arg0, %c0_i32, %c0_i32_0 : i32, i32, i32
  }
  func.func @transform_9(%arg0: i32) -> (i32, i32, i32) {
    %c0_i32 = arith.constant 0 : i32
    %c0_i32_0 = arith.constant 0 : i32
    %c0_i32_1 = arith.constant 0 : i32
    return %arg0, %c0_i32, %c0_i32_0 : i32, i32, i32
  }
  func.func @transform_10(%arg0: i32) -> (i32, i32, i32, i32) {
    %c0_i32 = arith.constant 0 : i32
    %c0_i32_0 = arith.constant 0 : i32
    %c0_i32_1 = arith.constant 0 : i32
    %c0_i32_2 = arith.constant 0 : i32
    return %arg0, %c0_i32, %c0_i32_0, %c0_i32_1 : i32, i32, i32, i32
  }
  func.func @transform_11(%arg0: i32) -> (i32, i32, i32, i32) {
    %c0_i32 = arith.constant 0 : i32
    %c0_i32_0 = arith.constant 0 : i32
    %c0_i32_1 = arith.constant 0 : i32
    %c0_i32_2 = arith.constant 0 : i32
    return %arg0, %c0_i32, %c0_i32_0, %c0_i32_1 : i32, i32, i32, i32
  }
}

</mosaic_0001>

<llo_original>
// kernel: bidirectional_attn_lstm.1
$region0: #{bidirectional_attn_lstm.1}
  #allocation0 [shape = 'u32[]', space=smem, size = 0x4, offset = 0x4, fixed_abs, tag = 'smem constant byte address 0x4 - core index']
  #allocation1 [shape = 'u32[72,128]{1,0:T(1,128)}', space=vmem, size = 0x9000, scoped, tag = 'internal scratch']
  %s0 = inlined_call_operand.vmem [shape: f32[2,8,2,128], index: 0, kind: input, shape index: {}]
  %s1 = inlined_call_operand.vmem [shape: f32[2,2,16,32], index: 1, kind: input, shape index: {}]
  %s2 = inlined_call_operand.vmem [shape: f32[2,16,24], index: 2, kind: input, shape index: {}]
  %s3 = inlined_call_operand.vmem [shape: f32[2,2,32], index: 3, kind: input, shape index: {}, may-alias: {3,4}]
  %s4 = inlined_call_operand.vmem [shape: f32[2,2,32], index: 4, kind: input, shape index: {}, may-alias: {3,4}]
  %s5 = inlined_call_operand.vmem [shape: f32[2,32,32], index: 5, kind: input, shape index: {}]
  %s6 = inlined_call_operand.vmem [shape: f32[2,1,32], index: 6, kind: input, shape index: {}]
  %s7 = inlined_call_operand.vmem [shape: f32[2,24,128], index: 7, kind: input, shape index: {}]
  %s8 = inlined_call_operand.vmem [shape: f32[2,32,128], index: 8, kind: input, shape index: {}]
  %s9 = inlined_call_operand.vmem [shape: f32[2,1,128], index: 9, kind: input, shape index: {}]
  %s10 = inlined_call_operand.vmem [shape: f32[2,8,2,32], index: 10, kind: output, shape index: {0}]
  %s11 = inlined_call_operand.vmem [shape: f32[2,8,2,32], index: 11, kind: output, shape index: {1}]
  %12 = xla_tuple %s10, %s11
  %s13 = sld [smem:[#allocation0]]
  $region81: #{bidirectional_attn_lstm.1} parent=0
    _
  %s15 = ssub.s32 1, %s13
  %s16 = scalar_select 0, %s15, %s13
  loop: start=0, step=1, limit=4
  $region2: #{bidirectional_attn_lstm.1} parent=0 // loop_pre_header
    _
  $region3: #{bidirectional_attn_lstm.1} parent=0 // loop_header
    %s18 = sphi 0, %s22
    %p19 = scmp.ge.s32.totalorder %s18, 4
    %s28 = sphi 0, %s30
    %s31 = sphi 0, %s28
    %s32 = sphi 0, %s31
    %s48 = sphi 0, %s32
    %s54 = sphi 0, %s56
    %s57 = sphi 0, %s54
    %s58 = sphi 0, %s57
    %s74 = sphi 0, %s58
    %s78 = sphi 0, %s78
    %s80 = sphi 0, %s78
    %s81 = sphi 0, %s80
    %s95 = sphi 0, %s81
    %s101 = sphi 0, %s103
    %s104 = sphi 0, %s101
    %s105 = sphi 0, %s104
    %s121 = sphi 0, %s105
    %s127 = sphi 0, %s129
    %s130 = sphi 0, %s127
    %s131 = sphi 0, %s130
    %s147 = sphi 0, %s131
    %s153 = sphi 0, %s155
    %s156 = sphi 0, %s153
    %s157 = sphi 0, %s156
    %s173 = sphi 0, %s157
    %s179 = sphi 0, %s181
    %s182 = sphi 0, %s179
    %s183 = sphi 0, %s182
    %s199 = sphi 0, %s183
    %s205 = sphi 0, %s207
    %s208 = sphi 0, %s205
    %s209 = sphi 0, %s208
    %s225 = sphi 0, %s209
    %s231 = sphi 0, %s233
    %s234 = sphi 0, %s231
    %s235 = sphi 0, %s234
    %s251 = sphi 0, %s235
    %s257 = sphi 0, %s259
    %s260 = sphi 0, %s257
    %s261 = sphi 0, %s260
    %s277 = sphi 0, %s261
    %s283 = sphi 0, %s285
    %s286 = sphi 0, %s283
    %s287 = sphi 0, %s286
    %s303 = sphi 0, %s287
    %s309 = sphi 0, %s311
    %s312 = sphi 0, %s309
    %s313 = sphi 0, %s312
    %s329 = sphi 0, %s313
  $region4: #{bidirectional_attn_lstm.1} parent=0 // loop_header_branch
    %21 = sbr.rel (%p19) target = $region8
  $region5: #{bidirectional_attn_lstm.1} parent=0 // loop_body
    %s23 = ssub.s32 %s18, 1
    %s24 = ssub.s32 %s18, 2
    %s25 = sadd.s32 %s18, 1
    %s26 = ssub.s32 %s18, %s25
    %p27 = scmp.eq.s32.totalorder %s26, 0
    %s29 = sadd.s32 %s28, 1
    %s30 = scalar_select %p27, %s28, %s29
    %p33 = pneg %p27
    %p34 = scmp.eq.s32.totalorder %s18, 1
    %p35 = por %p33, %p34
    %p36 = scmp.ne.s32.totalorder %s28, %s31
    %p37 = scmp.eq.s32.totalorder %s18, 0
    %p38 = por %p36, %p37
    %p39 = scmp.ne.s32.totalorder %s28, %s31
    %p40 = scmp.eq.s32.totalorder %s23, 1
    %p41 = por %p39, %p40
    %p42 = scmp.ne.s32.totalorder %s31, %s32
    %p43 = scmp.eq.s32.totalorder %s23, 0
    %p44 = por %p42, %p43
    %p45 = scmp.ne.s32.totalorder %s31, %s32
    %p46 = scmp.eq.s32.totalorder %s24, 1
    %p47 = por %p45, %p46
    %p49 = scmp.ne.s32.totalorder %s32, %s48
    %p50 = scmp.eq.s32.totalorder %s24, 0
    %p51 = por %p49, %p50
    %s52 = ssub.s32 %s18, %s25
    %p53 = scmp.eq.s32.totalorder %s52, 0
    %s55 = sadd.s32 %s54, 1
    %s56 = scalar_select %p53, %s54, %s55
    %p59 = pneg %p53
    %p60 = scmp.eq.s32.totalorder %s18, 1
    %p61 = por %p59, %p60
    %p62 = scmp.ne.s32.totalorder %s54, %s57
    %p63 = scmp.eq.s32.totalorder %s18, 0
    %p64 = por %p62, %p63
    %p65 = scmp.ne.s32.totalorder %s54, %s57
    %p66 = scmp.eq.s32.totalorder %s23, 1
    %p67 = por %p65, %p66
    %p68 = scmp.ne.s32.totalorder %s57, %s58
    %p69 = scmp.eq.s32.totalorder %s23, 0
    %p70 = por %p68, %p69
    %p71 = scmp.ne.s32.totalorder %s57, %s58
    %p72 = scmp.eq.s32.totalorder %s24, 1
    %p73 = por %p71, %p72
    %p75 = scmp.ne.s32.totalorder %s58, %s74
    %p76 = scmp.eq.s32.totalorder %s24, 0
    %p77 = por %p75, %p76
    %s79 = sadd.s32 %s78, 1
    %p82 = scmp.eq.s32.totalorder %s18, 1
    %p83 = scmp.ne.s32.totalorder %s78, %s80
    %p84 = scmp.eq.s32.totalorder %s18, 0
    %p85 = por %p83, %p84
    %p86 = scmp.ne.s32.totalorder %s78, %s80
    %p87 = scmp.eq.s32.totalorder %s23, 1
    %p88 = por %p86, %p87
    %p89 = scmp.ne.s32.totalorder %s80, %s81
    %p90 = scmp.eq.s32.totalorder %s23, 0
    %p91 = por %p89, %p90
    %p92 = scmp.ne.s32.totalorder %s80, %s81
    %p93 = scmp.eq.s32.totalorder %s24, 1
    %p94 = por %p92, %p93
    %p96 = scmp.ne.s32.totalorder %s81, %s95
    %p97 = scmp.eq.s32.totalorder %s24, 0
    %p98 = por %p96, %p97
    %s99 = ssub.s32 %s18, %s25
    %p100 = scmp.eq.s32.totalorder %s99, 0
    %s102 = sadd.s32 %s101, 1
    %s103 = scalar_select %p100, %s101, %s102
    %p106 = pneg %p100
    %p107 = scmp.eq.s32.totalorder %s18, 1
    %p108 = por %p106, %p107
    %p109 = scmp.ne.s32.totalorder %s101, %s104
    %p110 = scmp.eq.s32.totalorder %s18, 0
    %p111 = por %p109, %p110
    %p112 = scmp.ne.s32.totalorder %s101, %s104
    %p113 = scmp.eq.s32.totalorder %s23, 1
    %p114 = por %p112, %p113
    %p115 = scmp.ne.s32.totalorder %s104, %s105
    %p116 = scmp.eq.s32.totalorder %s23, 0
    %p117 = por %p115, %p116
    %p118 = scmp.ne.s32.totalorder %s104, %s105
    %p119 = scmp.eq.s32.totalorder %s24, 1
    %p120 = por %p118, %p119
    %p122 = scmp.ne.s32.totalorder %s105, %s121
    %p123 = scmp.eq.s32.totalorder %s24, 0
    %p124 = por %p122, %p123
    %s125 = ssub.s32 %s18, %s25
    %p126 = scmp.eq.s32.totalorder %s125, 0
    %s128 = sadd.s32 %s127, 1
    %s129 = scalar_select %p126, %s127, %s128
    %p132 = pneg %p126
    %p133 = scmp.eq.s32.totalorder %s18, 1
    %p134 = por %p132, %p133
    %p135 = scmp.ne.s32.totalorder %s127, %s130
    %p136 = scmp.eq.s32.totalorder %s18, 0
    %p137 = por %p135, %p136
    %p138 = scmp.ne.s32.totalorder %s127, %s130
    %p139 = scmp.eq.s32.totalorder %s23, 1
    %p140 = por %p138, %p139
    %p141 = scmp.ne.s32.totalorder %s130, %s131
    %p142 = scmp.eq.s32.totalorder %s23, 0
    %p143 = por %p141, %p142
    %p144 = scmp.ne.s32.totalorder %s130, %s131
    %p145 = scmp.eq.s32.totalorder %s24, 1
    %p146 = por %p144, %p145
    %p148 = scmp.ne.s32.totalorder %s131, %s147
    %p149 = scmp.eq.s32.totalorder %s24, 0
    %p150 = por %p148, %p149
    %s151 = ssub.s32 %s18, %s25
    %p152 = scmp.eq.s32.totalorder %s151, 0
    %s154 = sadd.s32 %s153, 1
    %s155 = scalar_select %p152, %s153, %s154
    %p158 = pneg %p152
    %p159 = scmp.eq.s32.totalorder %s18, 1
    %p160 = por %p158, %p159
    %p161 = scmp.ne.s32.totalorder %s153, %s156
    %p162 = scmp.eq.s32.totalorder %s18, 0
    %p163 = por %p161, %p162
    %p164 = scmp.ne.s32.totalorder %s153, %s156
    %p165 = scmp.eq.s32.totalorder %s23, 1
    %p166 = por %p164, %p165
    %p167 = scmp.ne.s32.totalorder %s156, %s157
    %p168 = scmp.eq.s32.totalorder %s23, 0
    %p169 = por %p167, %p168
    %p170 = scmp.ne.s32.totalorder %s156, %s157
    %p171 = scmp.eq.s32.totalorder %s24, 1
    %p172 = por %p170, %p171
    %p174 = scmp.ne.s32.totalorder %s157, %s173
    %p175 = scmp.eq.s32.totalorder %s24, 0
    %p176 = por %p174, %p175
    %s177 = ssub.s32 %s18, %s25
    %p178 = scmp.eq.s32.totalorder %s177, 0
    %s180 = sadd.s32 %s179, 1
    %s181 = scalar_select %p178, %s179, %s180
    %p184 = pneg %p178
    %p185 = scmp.eq.s32.totalorder %s18, 1
    %p186 = por %p184, %p185
    %p187 = scmp.ne.s32.totalorder %s179, %s182
    %p188 = scmp.eq.s32.totalorder %s18, 0
    %p189 = por %p187, %p188
    %p190 = scmp.ne.s32.totalorder %s179, %s182
    %p191 = scmp.eq.s32.totalorder %s23, 1
    %p192 = por %p190, %p191
    %p193 = scmp.ne.s32.totalorder %s182, %s183
    %p194 = scmp.eq.s32.totalorder %s23, 0
    %p195 = por %p193, %p194
    %p196 = scmp.ne.s32.totalorder %s182, %s183
    %p197 = scmp.eq.s32.totalorder %s24, 1
    %p198 = por %p196, %p197
    %p200 = scmp.ne.s32.totalorder %s183, %s199
    %p201 = scmp.eq.s32.totalorder %s24, 0
    %p202 = por %p200, %p201
    %s203 = ssub.s32 %s18, %s25
    %p204 = scmp.eq.s32.totalorder %s203, 0
    %s206 = sadd.s32 %s205, 1
    %s207 = scalar_select %p204, %s205, %s206
    %p210 = pneg %p204
    %p211 = scmp.eq.s32.totalorder %s18, 1
    %p212 = por %p210, %p211
    %p213 = scmp.ne.s32.totalorder %s205, %s208
    %p214 = scmp.eq.s32.totalorder %s18, 0
    %p215 = por %p213, %p214
    %p216 = scmp.ne.s32.totalorder %s205, %s208
    %p217 = scmp.eq.s32.totalorder %s23, 1
    %p218 = por %p216, %p217
    %p219 = scmp.ne.s32.totalorder %s208, %s209
    %p220 = scmp.eq.s32.totalorder %s23, 0
    %p221 = por %p219, %p220
    %p222 = scmp.ne.s32.totalorder %s208, %s209
    %p223 = scmp.eq.s32.totalorder %s24, 1
    %p224 = por %p222, %p223
    %p226 = scmp.ne.s32.totalorder %s209, %s225
    %p227 = scmp.eq.s32.totalorder %s24, 0
    %p228 = por %p226, %p227
    %s229 = ssub.s32 %s18, %s25
    %p230 = scmp.eq.s32.totalorder %s229, 0
    %s232 = sadd.s32 %s231, 1
    %s233 = scalar_select %p230, %s231, %s232
    %p236 = pneg %p230
    %p237 = scmp.eq.s32.totalorder %s18, 1
    %p238 = por %p236, %p237
    %p239 = scmp.ne.s32.totalorder %s231, %s234
    %p240 = scmp.eq.s32.totalorder %s18, 0
    %p241 = por %p239, %p240
    %p242 = scmp.ne.s32.totalorder %s231, %s234
    %p243 = scmp.eq.s32.totalorder %s23, 1
    %p244 = por %p242, %p243
    %p245 = scmp.ne.s32.totalorder %s234, %s235
    %p246 = scmp.eq.s32.totalorder %s23, 0
    %p247 = por %p245, %p246
    %p248 = scmp.ne.s32.totalorder %s234, %s235
    %p249 = scmp.eq.s32.totalorder %s24, 1
    %p250 = por %p248, %p249
    %p252 = scmp.ne.s32.totalorder %s235, %s251
    %p253 = scmp.eq.s32.totalorder %s24, 0
    %p254 = por %p252, %p253
    %s255 = ssub.s32 %s18, %s25
    %p256 = scmp.eq.s32.totalorder %s255, 0
    %s258 = sadd.s32 %s257, 1
    %s259 = scalar_select %p256, %s257, %s258
    %p262 = pneg %p256
    %p263 = scmp.eq.s32.totalorder %s18, 1
    %p264 = por %p262, %p263
    %p265 = scmp.ne.s32.totalorder %s257, %s260
    %p266 = scmp.eq.s32.totalorder %s18, 0
    %p267 = por %p265, %p266
    %p268 = scmp.ne.s32.totalorder %s257, %s260
    %p269 = scmp.eq.s32.totalorder %s23, 1
    %p270 = por %p268, %p269
    %p271 = scmp.ne.s32.totalorder %s260, %s261
    %p272 = scmp.eq.s32.totalorder %s23, 0
    %p273 = por %p271, %p272
    %p274 = scmp.ne.s32.totalorder %s260, %s261
    %p275 = scmp.eq.s32.totalorder %s24, 1
    %p276 = por %p274, %p275
    %p278 = scmp.ne.s32.totalorder %s261, %s277
    %p279 = scmp.eq.s32.totalorder %s24, 0
    %p280 = por %p278, %p279
    %s281 = ssub.s32 %s18, %s25
    %p282 = scmp.eq.s32.totalorder %s281, 0
    %s284 = sadd.s32 %s283, 1
    %s285 = scalar_select %p282, %s283, %s284
    %p288 = pneg %p282
    %p289 = scmp.eq.s32.totalorder %s18, 1
    %p290 = por %p288, %p289
    %p291 = scmp.ne.s32.totalorder %s283, %s286
    %p292 = scmp.eq.s32.totalorder %s18, 0
    %p293 = por %p291, %p292
    %p294 = scmp.ne.s32.totalorder %s283, %s286
    %p295 = scmp.eq.s32.totalorder %s23, 1
    %p296 = por %p294, %p295
    %p297 = scmp.ne.s32.totalorder %s286, %s287
    %p298 = scmp.eq.s32.totalorder %s23, 0
    %p299 = por %p297, %p298
    %p300 = scmp.ne.s32.totalorder %s286, %s287
    %p301 = scmp.eq.s32.totalorder %s24, 1
    %p302 = por %p300, %p301
    %p304 = scmp.ne.s32.totalorder %s287, %s303
    %p305 = scmp.eq.s32.totalorder %s24, 0
    %p306 = por %p304, %p305
    %s307 = ssub.s32 %s18, %s25
    %p308 = scmp.eq.s32.totalorder %s307, 0
    %s310 = sadd.s32 %s309, 1
    %s311 = scalar_select %p308, %s309, %s310
    %p314 = pneg %p308
    %p315 = scmp.eq.s32.totalorder %s18, 1
    %p316 = por %p314, %p315
    %p317 = scmp.ne.s32.totalorder %s309, %s312
    %p318 = scmp.eq.s32.totalorder %s18, 0
    %p319 = por %p317, %p318
    %p320 = scmp.ne.s32.totalorder %s309, %s312
    %p321 = scmp.eq.s32.totalorder %s23, 1
    %p322 = por %p320, %p321
    %p323 = scmp.ne.s32.totalorder %s312, %s313
    %p324 = scmp.eq.s32.totalorder %s23, 0
    %p325 = por %p323, %p324
    %p326 = scmp.ne.s32.totalorder %s312, %s313
    %p327 = scmp.eq.s32.totalorder %s24, 1
    %p328 = por %p326, %p327
    %p330 = scmp.ne.s32.totalorder %s313, %s329
    %p331 = scmp.eq.s32.totalorder %s24, 0
    %p332 = por %p330, %p331
    %p333 = scmp.le.s32.totalorder 1, %s18
    %p334 = scmp.lt.s32.totalorder %s18, 3
    %p335 = pnand %p333, %p334
    %p336 = pneg %p335
    // Predicated region
    $region9: #{bidirectional_attn_lstm.1} parent=5 // pred_check
      _
    $region10: #{bidirectional_attn_lstm.1} parent=5 // pred_check_branch
      %338 = sbr.rel (%p335) target = $region12
    $region11: #{bidirectional_attn_lstm.1} parent=5 // pred_region
      %s339 = ssub.s32 %s18, 1
      // Predicated region
      $region13: #{bidirectional_attn_lstm.1} parent=11 // pred_check
        %p340 = pneg %p91
      $region14: #{bidirectional_attn_lstm.1} parent=11 // pred_check_branch
        %342 = sbr.rel (%p340) target = $region16
      $region15: #{bidirectional_attn_lstm.1} parent=11 // pred_region
        _
      $region16: #{bidirectional_attn_lstm.1} parent=11 // pred_fallthru
        _
    $region12: #{bidirectional_attn_lstm.1} parent=5 // pred_fallthru
      _
    %p343 = scmp.lt.s32.totalorder %s18, 2
    // Predicated region
    $region17: #{bidirectional_attn_lstm.1} parent=5 // pred_check
      %p344 = pneg %p343
    $region18: #{bidirectional_attn_lstm.1} parent=5 // pred_check_branch
      %346 = sbr.rel (%p344) target = $region20
    $region19: #{bidirectional_attn_lstm.1} parent=5 // pred_region
      // Predicated region
      $region21: #{bidirectional_attn_lstm.1} parent=19 // pred_check
        %p347 = pneg %p38
      $region22: #{bidirectional_attn_lstm.1} parent=19 // pred_check_branch
        %349 = sbr.rel (%p347) target = $region24
      $region23: #{bidirectional_attn_lstm.1} parent=19 // pred_region
        %p350 = scmp.lt.s32.totalorder %s18, 1
        %s351 = scalar_select %p350, %s18, 1
        %s352 = smul.addr %s351, 8
        %s353 = smul.addr %s352, 2
        %s354 = scalar_lea.vmem %s0, %s353
      $region24: #{bidirectional_attn_lstm.1} parent=19 // pred_fallthru
        _
      // Predicated region
      $region25: #{bidirectional_attn_lstm.1} parent=19 // pred_check
        %p355 = pneg %p64
      $region26: #{bidirectional_attn_lstm.1} parent=19 // pred_check_branch
        %357 = sbr.rel (%p355) target = $region28
      $region27: #{bidirectional_attn_lstm.1} parent=19 // pred_region
        %p358 = scmp.lt.s32.totalorder %s18, 1
        %s359 = scalar_select %p358, %s18, 1
        %s360 = smul.addr %s359, 4
        %s361 = smul.addr %s360, 8
        %s362 = scalar_lea.vmem %s1, %s361
      $region28: #{bidirectional_attn_lstm.1} parent=19 // pred_fallthru
        _
      // Predicated region
      $region29: #{bidirectional_attn_lstm.1} parent=19 // pred_check
        %p363 = pneg %p111
      $region30: #{bidirectional_attn_lstm.1} parent=19 // pred_check_branch
        %365 = sbr.rel (%p363) target = $region32
      $region31: #{bidirectional_attn_lstm.1} parent=19 // pred_region
        %p366 = scmp.lt.s32.totalorder %s18, 1
        %s367 = scalar_select %p366, %s18, 1
        %s368 = smul.addr %s367, 2
        %s369 = scalar_lea.vmem %s3, %s368
      $region32: #{bidirectional_attn_lstm.1} parent=19 // pred_fallthru
        _
      // Predicated region
      $region33: #{bidirectional_attn_lstm.1} parent=19 // pred_check
        %p370 = pneg %p137
      $region34: #{bidirectional_attn_lstm.1} parent=19 // pred_check_branch
        %372 = sbr.rel (%p370) target = $region36
      $region35: #{bidirectional_attn_lstm.1} parent=19 // pred_region
        %p373 = scmp.lt.s32.totalorder %s18, 1
        %s374 = scalar_select %p373, %s18, 1
        %s375 = smul.addr %s374, 2
        %s376 = scalar_lea.vmem %s4, %s375
      $region36: #{bidirectional_attn_lstm.1} parent=19 // pred_fallthru
        _
      // Predicated region
      $region37: #{bidirectional_attn_lstm.1} parent=19 // pred_check
        %p377 = pneg %p163
      $region38: #{bidirectional_attn_lstm.1} parent=19 // pred_check_branch
        %379 = sbr.rel (%p377) target = $region40
      $region39: #{bidirectional_attn_lstm.1} parent=19 // pred_region
        %p380 = scmp.lt.s32.totalorder %s18, 1
        %s381 = scalar_select %p380, %s18, 1
        %s382 = smul.addr %s381, 4
        %s383 = smul.addr %s382, 8
        %s384 = scalar_lea.vmem %s5, %s383
      $region40: #{bidirectional_attn_lstm.1} parent=19 // pred_fallthru
        _
      // Predicated region
      $region41: #{bidirectional_attn_lstm.1} parent=19 // pred_check
        %p385 = pneg %p189
      $region42: #{bidirectional_attn_lstm.1} parent=19 // pred_check_branch
        %387 = sbr.rel (%p385) target = $region44
      $region43: #{bidirectional_attn_lstm.1} parent=19 // pred_region
        %p388 = scmp.lt.s32.totalorder %s18, 1
        %s389 = scalar_select %p388, %s18, 1
        %s390 = scalar_lea.vmem %s6, %s389
      $region44: #{bidirectional_attn_lstm.1} parent=19 // pred_fallthru
        _
      // Predicated region
      $region45: #{bidirectional_attn_lstm.1} parent=19 // pred_check
        %p391 = pneg %p215
      $region46: #{bidirectional_attn_lstm.1} parent=19 // pred_check_branch
        %393 = sbr.rel (%p391) target = $region48
      $region47: #{bidirectional_attn_lstm.1} parent=19 // pred_region
        %p394 = scmp.lt.s32.totalorder %s18, 1
        %s395 = scalar_select %p394, %s18, 1
        %s396 = smul.addr %s395, 3
        %s397 = smul.addr %s396, 8
        %s398 = scalar_lea.vmem %s7, %s397
      $region48: #{bidirectional_attn_lstm.1} parent=19 // pred_fallthru
        _
      // Predicated region
      $region49: #{bidirectional_attn_lstm.1} parent=19 // pred_check
        %p399 = pneg %p241
      $region50: #{bidirectional_attn_lstm.1} parent=19 // pred_check_branch
        %401 = sbr.rel (%p399) target = $region52
      $region51: #{bidirectional_attn_lstm.1} parent=19 // pred_region
        %p402 = scmp.lt.s32.totalorder %s18, 1
        %s403 = scalar_select %p402, %s18, 1
        %s404 = smul.addr %s403, 4
        %s405 = smul.addr %s404, 8
        %s406 = scalar_lea.vmem %s8, %s405
      $region52: #{bidirectional_attn_lstm.1} parent=19 // pred_fallthru
        _
      // Predicated region
      $region53: #{bidirectional_attn_lstm.1} parent=19 // pred_check
        %p407 = pneg %p267
      $region54: #{bidirectional_attn_lstm.1} parent=19 // pred_check_branch
        %409 = sbr.rel (%p407) target = $region56
      $region55: #{bidirectional_attn_lstm.1} parent=19 // pred_region
        %p410 = scmp.lt.s32.totalorder %s18, 1
        %s411 = scalar_select %p410, %s18, 1
        %s412 = scalar_lea.vmem %s9, %s411
      $region56: #{bidirectional_attn_lstm.1} parent=19 // pred_fallthru
        _
    $region20: #{bidirectional_attn_lstm.1} parent=5 // pred_fallthru
      _
    %p413 = scmp.le.s32.totalorder 1, %s18
    %p414 = scmp.lt.s32.totalorder %s18, 3
    %p415 = pnand %p413, %p414
    %p416 = pneg %p415
    // Predicated region
    $region57: #{bidirectional_attn_lstm.1} parent=5 // pred_check
      _
    $region58: #{bidirectional_attn_lstm.1} parent=5 // pred_check_branch
      %418 = sbr.rel (%p415) target = $region60
    $region59: #{bidirectional_attn_lstm.1} parent=5 // pred_region
      %s419 = ssub.s32 %s18, 1
      %p420 = scmp.lt.s32.totalorder %s23, 1
      %s421 = scalar_select %p420, %s23, 1
      %s422 = smul.addr %s421, 8
      %s423 = smul.addr %s422, 2
      %s424 = scalar_lea.vmem %s0, %s423
      %p425 = pneg %p44
      %p426 = pneg %p41
      %p427 = scmp.lt.s32.totalorder %s23, 1
      %s428 = scalar_select %p427, %s23, 1
      %s429 = smul.addr %s428, 4
      %s430 = smul.addr %s429, 8
      %s431 = scalar_lea.vmem %s1, %s430
      %p432 = pneg %p70
      %p433 = pneg %p67
      %p434 = pneg %p91
      %p435 = pneg %p88
      %p436 = scmp.lt.s32.totalorder %s23, 1
      %s437 = scalar_select %p436, %s23, 1
      %s438 = smul.addr %s437, 2
      %s439 = scalar_lea.vmem %s3, %s438
      %p440 = pneg %p117
      %p441 = pneg %p114
      %p442 = scmp.lt.s32.totalorder %s23, 1
      %s443 = scalar_select %p442, %s23, 1
      %s444 = smul.addr %s443, 2
      %s445 = scalar_lea.vmem %s4, %s444
      %p446 = pneg %p143
      %p447 = pneg %p140
      %p448 = scmp.lt.s32.totalorder %s23, 1
      %s449 = scalar_select %p448, %s23, 1
      %s450 = smul.addr %s449, 4
      %s451 = smul.addr %s450, 8
      %s452 = scalar_lea.vmem %s5, %s451
      %p453 = pneg %p169
      %p454 = pneg %p166
      %p455 = scmp.lt.s32.totalorder %s23, 1
      %s456 = scalar_select %p455, %s23, 1
      %s457 = scalar_lea.vmem %s6, %s456
      %p458 = pneg %p195
      %p459 = pneg %p192
      %p460 = scmp.lt.s32.totalorder %s23, 1
      %s461 = scalar_select %p460, %s23, 1
      %s462 = smul.addr %s461, 3
      %s463 = smul.addr %s462, 8
      %s464 = scalar_lea.vmem %s7, %s463
      %p465 = pneg %p221
      %p466 = pneg %p218
      %p467 = scmp.lt.s32.totalorder %s23, 1
      %s468 = scalar_select %p467, %s23, 1
      %s469 = smul.addr %s468, 4
      %s470 = smul.addr %s469, 8
      %s471 = scalar_lea.vmem %s8, %s470
      %p472 = pneg %p247
      %p473 = pneg %p244
      %p474 = scmp.lt.s32.totalorder %s23, 1
      %s475 = scalar_select %p474, %s23, 1
      %s476 = scalar_lea.vmem %s9, %s475
      %p477 = pneg %p273
      %p478 = pneg %p270
      %p479 = pneg %p299
      %p480 = pneg %p296
      %p481 = scmp.lt.s32.totalorder %s23, 1
      %s482 = scalar_select %p481, %s23, 1
      %s483 = smul.addr %s482, 8
      %s484 = smul.addr %s483, 2
      %s485 = scalar_lea.vmem %s10, %s484
      %p486 = pneg %p325
      %p487 = pneg %p322
      %p488 = scmp.lt.s32.totalorder %s23, 1
      %s489 = scalar_select %p488, %s23, 1
      %s490 = smul.addr %s489, 8
      %s491 = smul.addr %s490, 2
      %s492 = scalar_lea.vmem %s11, %s491
      %p493 = scmp.lt.s32.totalorder %s23, 1
      %s494 = scalar_select %p493, %s23, 1
      %s495 = smul.addr %s494, 8
      %s496 = smul.addr %s495, 2
      %s497 = scalar_lea.vmem %s0, %s496
      %p498 = scmp.lt.s32.totalorder %s23, 1
      %s499 = scalar_select %p498, %s23, 1
      %s500 = smul.addr %s499, 4
      %s501 = smul.addr %s500, 8
      %s502 = scalar_lea.vmem %s1, %s501
      %p503 = scmp.lt.s32.totalorder %s23, 1
      %s504 = scalar_select %p503, %s23, 1
      %s505 = smul.addr %s504, 2
      %s506 = scalar_lea.vmem %s3, %s505
      %p507 = scmp.lt.s32.totalorder %s23, 1
      %s508 = scalar_select %p507, %s23, 1
      %s509 = smul.addr %s508, 2
      %s510 = scalar_lea.vmem %s4, %s509
      %p511 = scmp.lt.s32.totalorder %s23, 1
      %s512 = scalar_select %p511, %s23, 1
      %s513 = smul.addr %s512, 4
      %s514 = smul.addr %s513, 8
      %s515 = scalar_lea.vmem %s5, %s514
      %p516 = scmp.lt.s32.totalorder %s23, 1
      %s517 = scalar_select %p516, %s23, 1
      %s518 = scalar_lea.vmem %s6, %s517
      %p519 = scmp.lt.s32.totalorder %s23, 1
      %s520 = scalar_select %p519, %s23, 1
      %s521 = smul.addr %s520, 3
      %s522 = smul.addr %s521, 8
      %s523 = scalar_lea.vmem %s7, %s522
      %p524 = scmp.lt.s32.totalorder %s23, 1
      %s525 = scalar_select %p524, %s23, 1
      %s526 = smul.addr %s525, 4
      %s527 = smul.addr %s526, 8
      %s528 = scalar_lea.vmem %s8, %s527
      %p529 = scmp.lt.s32.totalorder %s23, 1
      %s530 = scalar_select %p529, %s23, 1
      %s531 = scalar_lea.vmem %s9, %s530
      %p532 = scmp.lt.s32.totalorder %s23, 1
      %s533 = scalar_select %p532, %s23, 1
      %s534 = smul.addr %s533, 8
      %s535 = smul.addr %s534, 2
      %s536 = scalar_lea.vmem %s10, %s535
      %p537 = scmp.lt.s32.totalorder %s23, 1
      %s538 = scalar_select %p537, %s23, 1
      %s539 = smul.addr %s538, 8
      %s540 = smul.addr %s539, 2
      %s541 = scalar_lea.vmem %s11, %s540
      %v542 = vld [vmem:[%s2] sm:$0xff]
      %v543 = vld [vmem:[%s2 + $0x8] sm:$0xff]
      %v544 = vld [vmem:[%s2 + $0x10] sm:$0xff]
      %v545 = vld [vmem:[%s2 + $0x18] sm:$0xff]
      %v546 = vld [vmem:[%s502] sm:$0xff]
      %v547 = vld [vmem:[%s502 + $0x8] sm:$0xff]
      %v548 = vld [vmem:[%s502 + $0x10] sm:$0xff]
      %v549 = vld [vmem:[%s502 + $0x18] sm:$0xff]
      %v550 = vld [vmem:[%s518] sm:$0x1]
      %v551 = vld [vmem:[%s515] sm:$0xff]
      %v552 = vld [vmem:[%s515 + $0x8] sm:$0xff]
      %v553 = vld [vmem:[%s515 + $0x10] sm:$0xff]
      %v554 = vld [vmem:[%s515 + $0x18] sm:$0xff]
      %v555 = vld [vmem:[%s523] sm:$0xff]
      %v556 = vld [vmem:[%s523 + $0x8] sm:$0xff]
      %v557 = vld [vmem:[%s523 + $0x10] sm:$0xff]
      %v558 = vld [vmem:[%s528] sm:$0xff]
      %v559 = vld [vmem:[%s528 + $0x8] sm:$0xff]
      %v560 = vld [vmem:[%s528 + $0x10] sm:$0xff]
      %v561 = vld [vmem:[%s528 + $0x18] sm:$0xff]
      %v562 = vld [vmem:[%s531] sm:$0x1]
      %v563 = vld [vmem:[%s506] sm:$0x3]
      %v564 = vld [vmem:[%s510] sm:$0x3]
      %vm565 = vcmask 261120
      %v567 = vsel %vm565, %v564, 0
      %569 = vmatpush.msra.mxu0 0.0
      %570 = vmatpush.msra.mxu0 0.0
      %571 = vmatpush.msra.mxu0 0.0
      %572 = vmatpush.msra.mxu0 0.0
      %573 = vmatpush.msra.mxu0 0.0
      %574 = vmatpush.msra.mxu0 0.0
      %575 = vmatpush.msra.mxu0 0.0
      %576 = vmatpush.msra.mxu0 0.0
      %577 = vmatpush.msra.mxu0 0.0
      %578 = vmatpush.msra.mxu0 0.0
      %579 = vmatpush.msra.mxu0 0.0
      %580 = vmatpush.msra.mxu0 0.0
      %581 = vmatpush.msra.mxu0 %v554
      %582 = vmatpush.msra.mxu0 %v553
      %583 = vmatpush.msra.mxu0 %v552
      %584 = vmatpush.msra.mxu0 %v551
      %585 = vmatmul.f32.gmra.mxu0 %v567
      %v586 = vpop.f32.mrf.mxu0
      %v587 = vadd.f32 0.0, %v586
      %588 = vdwg.mxu0
      %v590 = vrot.slane %v587, 1
      %v591 = vperm.slane %v587, 0
      %v592 = vperm.slane %v590, 0
      %v595 = vadd.f32 %v546, %v591
      %v596 = vadd.f32 %v547, %v591
      %v597 = vadd.f32 %v548, %v592
      %v598 = vadd.f32 %v549, %v592
      %v599 = vtanh.pop %v595
      %v600 = vtanh.pop %v596
      %v601 = vtanh.pop %v597
      %v602 = vtanh.pop %v598
      %v604 = vperm.slane %v550, 0
      %v606 = vmul.f32 %v599, %v604
      %v607 = vmul.f32 %v600, %v604
      %v608 = vmul.f32 %v601, %v604
      %v609 = vmul.f32 %v602, %v604
      %v610 = vsel %vm565, %v606, 0.0
      %611 = vadd.xlane.f32.xlu0 %v610
      %v612 = vpop.xlane.xlu0 %611
      %v613 = vsel %vm565, %v607, 0.0
      %614 = vadd.xlane.f32.xlu0 %v613
      %v615 = vpop.xlane.xlu0 %614
      %v616 = vsel %vm565, %v608, 0.0
      %617 = vadd.xlane.f32.xlu0 %v616
      %v618 = vpop.xlane.xlu0 %617
      %v619 = vsel %vm565, %v609, 0.0
      %620 = vadd.xlane.f32.xlu0 %v619
      %v621 = vpop.xlane.xlu0 %620
      %v626 = vlaneseq
      %v627 = vand.u32 %v626, 127
      %v628 = vperm.slane %v612, %v627
      %v629 = vadd.s32 %v627, 4294967288
      %v630 = vperm.slane %v615, %v629
      %vm631 = vcmask 130112
      %v632 = vsel %vm631, %v630, %v628
      %v633 = vperm.slane %v618, %v627
      %v634 = vperm.slane %v621, %v629
      %v635 = vsel %vm631, %v634, %v633
      %vm636 = vcmask 1041409
      %v637 = vsel %vm636, %v635, %v632
      %vm639 = vcmask 123904
      %v640 = vsel %vm639, %v637, -inf
      %641 = vmax.xlane.f32.xlu0 %v640
      %v642 = vpop.xlane.xlu0 %641
      %v644 = vperm.slane %v642, 0
      %v645 = vperm.slane %v642, 1
      %v648 = vsub.f32 %v612, %v644
      %v649 = vsub.f32 %v615, %v644
      %v650 = vsub.f32 %v618, %v645
      %v651 = vsub.f32 %v621, %v645
      %v652 = vmul.f32 %v648, 1.442695
      %v653 = vpow.pop %v652
      %v654 = vmul.f32 %v649, 1.442695
      %v655 = vpow.pop %v654
      %v656 = vmul.f32 %v650, 1.442695
      %v657 = vpow.pop %v656
      %v658 = vmul.f32 %v651, 1.442695
      %v659 = vpow.pop %v658
      %664 = vset.pattern.permute.xlu0 0
      %665 = vperm.xlu0 %664, %v653
      %v666 = vpop.permute.xlu0 %665
      %667 = vset.pattern.permute.xlu0 0
      %668 = vperm.xlu0 %667, %v655
      %v669 = vpop.permute.xlu0 %668
      %670 = vset.pattern.permute.xlu0 0
      %671 = vperm.xlu0 %670, %v657
      %v672 = vpop.permute.xlu0 %671
      %673 = vset.pattern.permute.xlu0 0
      %674 = vperm.xlu0 %673, %v659
      %v675 = vpop.permute.xlu0 %674
      %v676 = vperm.slane %v666, %v627
      %v677 = vperm.slane %v669, %v629
      %v678 = vsel %vm631, %v677, %v676
      %v679 = vperm.slane %v672, %v627
      %v680 = vperm.slane %v675, %v629
      %v681 = vsel %vm631, %v680, %v679
      %v682 = vsel %vm636, %v681, %v678
      %v684 = vsel %vm639, %v682, 0.0
      %685 = vadd.xlane.f32.xlu0 %v684
      %v686 = vpop.xlane.xlu0 %685
      %v687 = vrcp.pop %v686
      %v689 = vperm.slane %v687, 0
      %v690 = vperm.slane %v687, 1
      %v693 = vmul.f32 %v653, %v689
      %v694 = vmul.f32 %v655, %v689
      %v695 = vmul.f32 %v657, %v690
      %v696 = vmul.f32 %v659, %v690
      %698 = vset.pattern.permute.xlu0 0
      %699 = vperm.xlu0 %698, %v693
      %v700 = vpop.permute.xlu0 %699
      %703 = vset.pattern.permute.xlu0 0
      %704 = vperm.xlu0 %703, %v694
      %v705 = vpop.permute.xlu0 %704
      %708 = vset.pattern.permute.xlu0 0
      %709 = vperm.xlu0 %708, %v695
      %v710 = vpop.permute.xlu0 %709
      %713 = vset.pattern.permute.xlu0 0
      %714 = vperm.xlu0 %713, %v696
      %v715 = vpop.permute.xlu0 %714
      %v717 = vmul.f32 %v700, %v542
      %v718 = vmul.f32 %v705, %v543
      %v719 = vmul.f32 %v710, %v544
      %v720 = vmul.f32 %v715, %v545
      %vm721 = vcmask 195584
      %v722 = vsel %vm721, %v717, 0.0
      %v723 = vsel %vm721, %v718, 0.0
      %v724 = vadd.f32 %v722, %v723
      %v725 = vrot.slane %v724, 4
      %v726 = vadd.f32 %v724, %v725
      %v727 = vrot.slane %v726, 2
      %v728 = vadd.f32 %v726, %v727
      %v729 = vrot.slane %v728, 1
      %v730 = vadd.f32 %v728, %v729
      %v731 = vsel %vm721, %v719, 0.0
      %v732 = vsel %vm721, %v720, 0.0
      %v733 = vadd.f32 %v731, %v732
      %v734 = vrot.slane %v733, 4
      %v735 = vadd.f32 %v733, %v734
      %v736 = vrot.slane %v735, 2
      %v737 = vadd.f32 %v735, %v736
      %v738 = vrot.slane %v737, 1
      %v739 = vadd.f32 %v737, %v738
      %v740 = vld [vmem:[%s497] sm:$0x3]
      %v743 = vsel %vm636, %v739, %v730
      %v744 = vsel %vm721, %v743, 0
      %746 = vmatpush.msra.mxu0 0.0
      %747 = vmatpush.msra.mxu0 0.0
      %748 = vmatpush.msra.mxu0 0.0
      %749 = vmatpush.msra.mxu0 0.0
      %750 = vmatpush.msra.mxu0 0.0
      %751 = vmatpush.msra.mxu0 0.0
      %752 = vmatpush.msra.mxu0 0.0
      %753 = vmatpush.msra.mxu0 0.0
      %754 = vmatpush.msra.mxu0 0.0
      %755 = vmatpush.msra.mxu0 0.0
      %756 = vmatpush.msra.mxu0 0.0
      %757 = vmatpush.msra.mxu0 0.0
      %758 = vmatpush.msra.mxu0 0.0
      %759 = vmatpush.msra.mxu0 %v557
      %760 = vmatpush.msra.mxu0 %v556
      %761 = vmatpush.msra.mxu0 %v555
      %762 = vmatmul.f32.gmra.mxu0 %v744
      %v763 = vpop.f32.mrf.mxu0
      %v764 = vadd.f32 0.0, %v763
      %765 = vdwg.mxu0
      %v766 = vadd.f32 %v740, %v764
      %v768 = vsel %vm565, %v563, 0
      %770 = vmatpush.msra.mxu0 0.0
      %771 = vmatpush.msra.mxu0 0.0
      %772 = vmatpush.msra.mxu0 0.0
      %773 = vmatpush.msra.mxu0 0.0
      %774 = vmatpush.msra.mxu0 0.0
      %775 = vmatpush.msra.mxu0 0.0
      %776 = vmatpush.msra.mxu0 0.0
      %777 = vmatpush.msra.mxu0 0.0
      %778 = vmatpush.msra.mxu0 0.0
      %779 = vmatpush.msra.mxu0 0.0
      %780 = vmatpush.msra.mxu0 0.0
      %781 = vmatpush.msra.mxu0 0.0
      %782 = vmatpush.msra.mxu0 %v561
      %783 = vmatpush.msra.mxu0 %v560
      %784 = vmatpush.msra.mxu0 %v559
      %785 = vmatpush.msra.mxu0 %v558
      %786 = vmatmul.f32.gmra.mxu0 %v768
      %v787 = vpop.f32.mrf.mxu0
      %v788 = vadd.f32 0.0, %v787
      %789 = vdwg.mxu0
      %v790 = vadd.f32 %v766, %v788
      %v792 = vperm.slane %v562, 0
      %v794 = vadd.f32 %v790, %v792
      %v795 = vxor.u32 %v794, 2147483648
      %v796 = vmul.f32 %v795, 1.442695
      %v797 = vpow.pop %v796
      %v798 = vadd.f32 %v797, 1.0
      %v799 = vrcp.pop %v798
      %v800 = vmul.f32 %v798, %v799
      %v801 = vsub.f32 1.0, %v800
      %v802 = vmul.f32 %v799, %v801
      %v803 = vadd.f32 %v799, %v802
      %vm804 = vweird.f32 %v798
      %vm805 = vweird.f32 %v799
      %vm806 = vmor %vm804, %vm805
      %v807 = vsel %vm806, %v799, %v803
      %v808 = vand.u32 2147483647, %v798
      %vm809 = vcmp.eq.f32.partialorder %v808, 8.507059e+37
      %v810 = vand.u32 %v798, 2147483648
      %v811 = vor.u32 1.1754944e-38, %v810
      %v812 = vsel %vm809, %v811, %v807
      %v813 = vmul.f32 1.0, %v812
      %v814 = vtanh.pop %v794
      %815 = vrot.lane.b32.xlu0 %v564, 32
      %v816 = vpop.permute.xlu0 %815
      %v818 = vmul.f32 %v813, %v816
      %820 = vrot.lane.b32.xlu0 %v814, 64
      %v821 = vpop.permute.xlu0 %820
      %v823 = vmul.f32 %v813, %v821
      %825 = vrot.lane.b32.xlu0 %v823, 32
      %v826 = vpop.permute.xlu0 %825
      %v828 = vadd.f32 %v818, %v826
      %v829 = vtanh.pop %v828
      %831 = vrot.lane.b32.xlu0 %v829, 64
      %v832 = vpop.permute.xlu0 %831
      %v834 = vmul.f32 %v813, %v832
      %836 = vrot.lane.b32.xlu0 %v834, 32
      %v837 = vpop.permute.xlu0 %836
      %vm839 = vcmask 254976
      %840 = vst.msk [vmem:[%s536] sm:$0x3] %vm839, %v837
      %842 = vrot.lane.b32.xlu0 %v828, 96
      %v843 = vpop.permute.xlu0 %842
      %845 = vst.msk [vmem:[%s541] sm:$0x3] %vm839, %v843
      %v846 = vsel %vm565, %v843, 0
      %848 = vmatpush.msra.mxu0 0.0
      %849 = vmatpush.msra.mxu0 0.0
      %850 = vmatpush.msra.mxu0 0.0
      %851 = vmatpush.msra.mxu0 0.0
      %852 = vmatpush.msra.mxu0 0.0
      %853 = vmatpush.msra.mxu0 0.0
      %854 = vmatpush.msra.mxu0 0.0
      %855 = vmatpush.msra.mxu0 0.0
      %856 = vmatpush.msra.mxu0 0.0
      %857 = vmatpush.msra.mxu0 0.0
      %858 = vmatpush.msra.mxu0 0.0
      %859 = vmatpush.msra.mxu0 0.0
      %860 = vmatpush.msra.mxu0 %v554
      %861 = vmatpush.msra.mxu0 %v553
      %862 = vmatpush.msra.mxu0 %v552
      %863 = vmatpush.msra.mxu0 %v551
      %864 = vmatmul.f32.gmra.mxu0 %v846
      %v865 = vpop.f32.mrf.mxu0
      %v866 = vadd.f32 0.0, %v865
      %867 = vdwg.mxu0
      %v869 = vrot.slane %v866, 1
      %v870 = vperm.slane %v866, 0
      %v871 = vperm.slane %v869, 0
      %v874 = vadd.f32 %v546, %v870
      %v875 = vadd.f32 %v547, %v870
      %v876 = vadd.f32 %v548, %v871
      %v877 = vadd.f32 %v549, %v871
      %v878 = vtanh.pop %v874
      %v879 = vtanh.pop %v875
      %v880 = vtanh.pop %v876
      %v881 = vtanh.pop %v877
      %v882 = vmul.f32 %v878, %v604
      %v883 = vmul.f32 %v879, %v604
      %v884 = vmul.f32 %v880, %v604
      %v885 = vmul.f32 %v881, %v604
      %v886 = vsel %vm565, %v882, 0.0
      %887 = vadd.xlane.f32.xlu0 %v886
      %v888 = vpop.xlane.xlu0 %887
      %v889 = vsel %vm565, %v883, 0.0
      %890 = vadd.xlane.f32.xlu0 %v889
      %v891 = vpop.xlane.xlu0 %890
      %v892 = vsel %vm565, %v884, 0.0
      %893 = vadd.xlane.f32.xlu0 %v892
      %v894 = vpop.xlane.xlu0 %893
      %v895 = vsel %vm565, %v885, 0.0
      %896 = vadd.xlane.f32.xlu0 %v895
      %v897 = vpop.xlane.xlu0 %896
      %v902 = vperm.slane %v888, %v627
      %v903 = vperm.slane %v891, %v629
      %v904 = vsel %vm631, %v903, %v902
      %v905 = vperm.slane %v894, %v627
      %v906 = vperm.slane %v897, %v629
      %v907 = vsel %vm631, %v906, %v905
      %v908 = vsel %vm636, %v907, %v904
      %v910 = vsel %vm639, %v908, -inf
      %911 = vmax.xlane.f32.xlu0 %v910
      %v912 = vpop.xlane.xlu0 %911
      %v914 = vperm.slane %v912, 0
      %v915 = vperm.slane %v912, 1
      %v918 = vsub.f32 %v888, %v914
      %v919 = vsub.f32 %v891, %v914
      %v920 = vsub.f32 %v894, %v915
      %v921 = vsub.f32 %v897, %v915
      %v922 = vmul.f32 %v918, 1.442695
      %v923 = vpow.pop %v922
      %v924 = vmul.f32 %v919, 1.442695
      %v925 = vpow.pop %v924
      %v926 = vmul.f32 %v920, 1.442695
      %v927 = vpow.pop %v926
      %v928 = vmul.f32 %v921, 1.442695
      %v929 = vpow.pop %v928
      %934 = vset.pattern.permute.xlu0 0
      %935 = vperm.xlu0 %934, %v923
      %v936 = vpop.permute.xlu0 %935
      %937 = vset.pattern.permute.xlu0 0
      %938 = vperm.xlu0 %937, %v925
      %v939 = vpop.permute.xlu0 %938
      %940 = vset.pattern.permute.xlu0 0
      %941 = vperm.xlu0 %940, %v927
      %v942 = vpop.permute.xlu0 %941
      %943 = vset.pattern.permute.xlu0 0
      %944 = vperm.xlu0 %943, %v929
      %v945 = vpop.permute.xlu0 %944
      %v946 = vperm.slane %v936, %v627
      %v947 = vperm.slane %v939, %v629
      %v948 = vsel %vm631, %v947, %v946
      %v949 = vperm.slane %v942, %v627
      %v950 = vperm.slane %v945, %v629
      %v951 = vsel %vm631, %v950, %v949
      %v952 = vsel %vm636, %v951, %v948
      %v954 = vsel %vm639, %v952, 0.0
      %955 = vadd.xlane.f32.xlu0 %v954
      %v956 = vpop.xlane.xlu0 %955
      %v957 = vrcp.pop %v956
      %v959 = vperm.slane %v957, 0
      %v960 = vperm.slane %v957, 1
      %v963 = vmul.f32 %v923, %v959
      %v964 = vmul.f32 %v925, %v959
      %v965 = vmul.f32 %v927, %v960
      %v966 = vmul.f32 %v929, %v960
      %968 = vset.pattern.permute.xlu0 0
      %969 = vperm.xlu0 %968, %v963
      %v970 = vpop.permute.xlu0 %969
      %973 = vset.pattern.permute.xlu0 0
      %974 = vperm.xlu0 %973, %v964
      %v975 = vpop.permute.xlu0 %974
      %978 = vset.pattern.permute.xlu0 0
      %979 = vperm.xlu0 %978, %v965
      %v980 = vpop.permute.xlu0 %979
      %983 = vset.pattern.permute.xlu0 0
      %984 = vperm.xlu0 %983, %v966
      %v985 = vpop.permute.xlu0 %984
      %v987 = vmul.f32 %v970, %v542
      %v988 = vmul.f32 %v975, %v543
      %v989 = vmul.f32 %v980, %v544
      %v990 = vmul.f32 %v985, %v545
      %v991 = vsel %vm721, %v987, 0.0
      %v992 = vsel %vm721, %v988, 0.0
      %v993 = vadd.f32 %v991, %v992
      %v994 = vrot.slane %v993, 4
      %v995 = vadd.f32 %v993, %v994
      %v996 = vrot.slane %v995, 2
      %v997 = vadd.f32 %v995, %v996
      %v998 = vrot.slane %v997, 1
      %v999 = vadd.f32 %v997, %v998
      %v1000 = vsel %vm721, %v989, 0.0
      %v1001 = vsel %vm721, %v990, 0.0
      %v1002 = vadd.f32 %v1000, %v1001
      %v1003 = vrot.slane %v1002, 4
      %v1004 = vadd.f32 %v1002, %v1003
      %v1005 = vrot.slane %v1004, 2
      %v1006 = vadd.f32 %v1004, %v1005
      %v1007 = vrot.slane %v1006, 1
      %v1008 = vadd.f32 %v1006, %v1007
      %s1009 = scalar_lea.vmem %s497, 2
      %v1010 = vld [vmem:[%s1009] sm:$0x3]
      %v1013 = vsel %vm636, %v1008, %v999
      %v1014 = vsel %vm721, %v1013, 0
      %1016 = vmatpush.msra.mxu0 0.0
      %1017 = vmatpush.msra.mxu0 0.0
      %1018 = vmatpush.msra.mxu0 0.0
      %1019 = vmatpush.msra.mxu0 0.0
      %1020 = vmatpush.msra.mxu0 0.0
      %1021 = vmatpush.msra.mxu0 0.0
      %1022 = vmatpush.msra.mxu0 0.0
      %1023 = vmatpush.msra.mxu0 0.0
      %1024 = vmatpush.msra.mxu0 0.0
      %1025 = vmatpush.msra.mxu0 0.0
      %1026 = vmatpush.msra.mxu0 0.0
      %1027 = vmatpush.msra.mxu0 0.0
      %1028 = vmatpush.msra.mxu0 0.0
      %1029 = vmatpush.msra.mxu0 %v557
      %1030 = vmatpush.msra.mxu0 %v556
      %1031 = vmatpush.msra.mxu0 %v555
      %1032 = vmatmul.f32.gmra.mxu0 %v1014
      %v1033 = vpop.f32.mrf.mxu0
      %v1034 = vadd.f32 0.0, %v1033
      %1035 = vdwg.mxu0
      %v1036 = vadd.f32 %v1010, %v1034
      %v1037 = vsel %vm565, %v837, 0
      %1039 = vmatpush.msra.mxu0 0.0
      %1040 = vmatpush.msra.mxu0 0.0
      %1041 = vmatpush.msra.mxu0 0.0
      %1042 = vmatpush.msra.mxu0 0.0
      %1043 = vmatpush.msra.mxu0 0.0
      %1044 = vmatpush.msra.mxu0 0.0
      %1045 = vmatpush.msra.mxu0 0.0
      %1046 = vmatpush.msra.mxu0 0.0
      %1047 = vmatpush.msra.mxu0 0.0
      %1048 = vmatpush.msra.mxu0 0.0
      %1049 = vmatpush.msra.mxu0 0.0
      %1050 = vmatpush.msra.mxu0 0.0
      %1051 = vmatpush.msra.mxu0 %v561
      %1052 = vmatpush.msra.mxu0 %v560
      %1053 = vmatpush.msra.mxu0 %v559
      %1054 = vmatpush.msra.mxu0 %v558
      %1055 = vmatmul.f32.gmra.mxu0 %v1037
      %v1056 = vpop.f32.mrf.mxu0
      %v1057 = vadd.f32 0.0, %v1056
      %1058 = vdwg.mxu0
      %v1059 = vadd.f32 %v1036, %v1057
      %v1060 = vadd.f32 %v1059, %v792
      %v1061 = vxor.u32 %v1060, 2147483648
      %v1062 = vmul.f32 %v1061, 1.442695
      %v1063 = vpow.pop %v1062
      %v1064 = vadd.f32 %v1063, 1.0
      %v1065 = vrcp.pop %v1064
      %v1066 = vmul.f32 %v1064, %v1065
      %v1067 = vsub.f32 1.0, %v1066
      %v1068 = vmul.f32 %v1065, %v1067
      %v1069 = vadd.f32 %v1065, %v1068
      %vm1070 = vweird.f32 %v1064
      %vm1071 = vweird.f32 %v1065
      %vm1072 = vmor %vm1070, %vm1071
      %v1073 = vsel %vm1072, %v1065, %v1069
      %v1074 = vand.u32 2147483647, %v1064
      %vm1075 = vcmp.eq.f32.partialorder %v1074, 8.507059e+37
      %v1076 = vand.u32 %v1064, 2147483648
      %v1077 = vor.u32 1.1754944e-38, %v1076
      %v1078 = vsel %vm1075, %v1077, %v1073
      %v1079 = vmul.f32 1.0, %v1078
      %v1080 = vtanh.pop %v1060
      %v1081 = vmul.f32 %v1079, %v828
      %1083 = vrot.lane.b32.xlu0 %v1080, 64
      %v1084 = vpop.permute.xlu0 %1083
      %v1086 = vmul.f32 %v1079, %v1084
      %1088 = vrot.lane.b32.xlu0 %v1086, 32
      %v1089 = vpop.permute.xlu0 %1088
      %v1091 = vadd.f32 %v1081, %v1089
      %v1092 = vtanh.pop %v1091
      %1094 = vrot.lane.b32.xlu0 %v1092, 64
      %v1095 = vpop.permute.xlu0 %1094
      %v1097 = vmul.f32 %v1079, %v1095
      %1099 = vrot.lane.b32.xlu0 %v1097, 32
      %v1100 = vpop.permute.xlu0 %1099
      %s1102 = scalar_lea.vmem %s536, 2
      %1103 = vst.msk [vmem:[%s1102] sm:$0x3] %vm839, %v1100
      %1105 = vrot.lane.b32.xlu0 %v1091, 96
      %v1106 = vpop.permute.xlu0 %1105
      %s1108 = scalar_lea.vmem %s541, 2
      %1109 = vst.msk [vmem:[%s1108] sm:$0x3] %vm839, %v1106
      %v1110 = vsel %vm565, %v1106, 0
      %1112 = vmatpush.msra.mxu0 0.0
      %1113 = vmatpush.msra.mxu0 0.0
      %1114 = vmatpush.msra.mxu0 0.0
      %1115 = vmatpush.msra.mxu0 0.0
      %1116 = vmatpush.msra.mxu0 0.0
      %1117 = vmatpush.msra.mxu0 0.0
      %1118 = vmatpush.msra.mxu0 0.0
      %1119 = vmatpush.msra.mxu0 0.0
      %1120 = vmatpush.msra.mxu0 0.0
      %1121 = vmatpush.msra.mxu0 0.0
      %1122 = vmatpush.msra.mxu0 0.0
      %1123 = vmatpush.msra.mxu0 0.0
      %1124 = vmatpush.msra.mxu0 %v554
      %1125 = vmatpush.msra.mxu0 %v553
      %1126 = vmatpush.msra.mxu0 %v552
      %1127 = vmatpush.msra.mxu0 %v551
      %1128 = vmatmul.f32.gmra.mxu0 %v1110
      %v1129 = vpop.f32.mrf.mxu0
      %v1130 = vadd.f32 0.0, %v1129
      %1131 = vdwg.mxu0
      %v1133 = vrot.slane %v1130, 1
      %v1134 = vperm.slane %v1130, 0
      %v1135 = vperm.slane %v1133, 0
      %v1138 = vadd.f32 %v546, %v1134
      %v1139 = vadd.f32 %v547, %v1134
      %v1140 = vadd.f32 %v548, %v1135
      %v1141 = vadd.f32 %v549, %v1135
      %v1142 = vtanh.pop %v1138
      %v1143 = vtanh.pop %v1139
      %v1144 = vtanh.pop %v1140
      %v1145 = vtanh.pop %v1141
      %v1146 = vmul.f32 %v1142, %v604
      %v1147 = vmul.f32 %v1143, %v604
      %v1148 = vmul.f32 %v1144, %v604
      %v1149 = vmul.f32 %v1145, %v604
      %v1150 = vsel %vm565, %v1146, 0.0
      %1151 = vadd.xlane.f32.xlu0 %v1150
      %v1152 = vpop.xlane.xlu0 %1151
      %v1153 = vsel %vm565, %v1147, 0.0
      %1154 = vadd.xlane.f32.xlu0 %v1153
      %v1155 = vpop.xlane.xlu0 %1154
      %v1156 = vsel %vm565, %v1148, 0.0
      %1157 = vadd.xlane.f32.xlu0 %v1156
      %v1158 = vpop.xlane.xlu0 %1157
      %v1159 = vsel %vm565, %v1149, 0.0
      %1160 = vadd.xlane.f32.xlu0 %v1159
      %v1161 = vpop.xlane.xlu0 %1160
      %v1166 = vperm.slane %v1152, %v627
      %v1167 = vperm.slane %v1155, %v629
      %v1168 = vsel %vm631, %v1167, %v1166
      %v1169 = vperm.slane %v1158, %v627
      %v1170 = vperm.slane %v1161, %v629
      %v1171 = vsel %vm631, %v1170, %v1169
      %v1172 = vsel %vm636, %v1171, %v1168
      %v1174 = vsel %vm639, %v1172, -inf
      %1175 = vmax.xlane.f32.xlu0 %v1174
      %v1176 = vpop.xlane.xlu0 %1175
      %v1178 = vperm.slane %v1176, 0
      %v1179 = vperm.slane %v1176, 1
      %v1182 = vsub.f32 %v1152, %v1178
      %v1183 = vsub.f32 %v1155, %v1178
      %v1184 = vsub.f32 %v1158, %v1179
      %v1185 = vsub.f32 %v1161, %v1179
      %v1186 = vmul.f32 %v1182, 1.442695
      %v1187 = vpow.pop %v1186
      %v1188 = vmul.f32 %v1183, 1.442695
      %v1189 = vpow.pop %v1188
      %v1190 = vmul.f32 %v1184, 1.442695
      %v1191 = vpow.pop %v1190
      %v1192 = vmul.f32 %v1185, 1.442695
      %v1193 = vpow.pop %v1192
      %1198 = vset.pattern.permute.xlu0 0
      %1199 = vperm.xlu0 %1198, %v1187
      %v1200 = vpop.permute.xlu0 %1199
      %1201 = vset.pattern.permute.xlu0 0
      %1202 = vperm.xlu0 %1201, %v1189
      %v1203 = vpop.permute.xlu0 %1202
      %1204 = vset.pattern.permute.xlu0 0
      %1205 = vperm.xlu0 %1204, %v1191
      %v1206 = vpop.permute.xlu0 %1205
      %1207 = vset.pattern.permute.xlu0 0
      %1208 = vperm.xlu0 %1207, %v1193
      %v1209 = vpop.permute.xlu0 %1208
      %v1210 = vperm.slane %v1200, %v627
      %v1211 = vperm.slane %v1203, %v629
      %v1212 = vsel %vm631, %v1211, %v1210
      %v1213 = vperm.slane %v1206, %v627
      %v1214 = vperm.slane %v1209, %v629
      %v1215 = vsel %vm631, %v1214, %v1213
      %v1216 = vsel %vm636, %v1215, %v1212
      %v1218 = vsel %vm639, %v1216, 0.0
      %1219 = vadd.xlane.f32.xlu0 %v1218
      %v1220 = vpop.xlane.xlu0 %1219
      %v1221 = vrcp.pop %v1220
      %v1223 = vperm.slane %v1221, 0
      %v1224 = vperm.slane %v1221, 1
      %v1227 = vmul.f32 %v1187, %v1223
      %v1228 = vmul.f32 %v1189, %v1223
      %v1229 = vmul.f32 %v1191, %v1224
      %v1230 = vmul.f32 %v1193, %v1224
      %1232 = vset.pattern.permute.xlu0 0
      %1233 = vperm.xlu0 %1232, %v1227
      %v1234 = vpop.permute.xlu0 %1233
      %1237 = vset.pattern.permute.xlu0 0
      %1238 = vperm.xlu0 %1237, %v1228
      %v1239 = vpop.permute.xlu0 %1238
      %1242 = vset.pattern.permute.xlu0 0
      %1243 = vperm.xlu0 %1242, %v1229
      %v1244 = vpop.permute.xlu0 %1243
      %1247 = vset.pattern.permute.xlu0 0
      %1248 = vperm.xlu0 %1247, %v1230
      %v1249 = vpop.permute.xlu0 %1248
      %v1251 = vmul.f32 %v1234, %v542
      %v1252 = vmul.f32 %v1239, %v543
      %v1253 = vmul.f32 %v1244, %v544
      %v1254 = vmul.f32 %v1249, %v545
      %v1255 = vsel %vm721, %v1251, 0.0
      %v1256 = vsel %vm721, %v1252, 0.0
      %v1257 = vadd.f32 %v1255, %v1256
      %v1258 = vrot.slane %v1257, 4
      %v1259 = vadd.f32 %v1257, %v1258
      %v1260 = vrot.slane %v1259, 2
      %v1261 = vadd.f32 %v1259, %v1260
      %v1262 = vrot.slane %v1261, 1
      %v1263 = vadd.f32 %v1261, %v1262
      %v1264 = vsel %vm721, %v1253, 0.0
      %v1265 = vsel %vm721, %v1254, 0.0
      %v1266 = vadd.f32 %v1264, %v1265
      %v1267 = vrot.slane %v1266, 4
      %v1268 = vadd.f32 %v1266, %v1267
      %v1269 = vrot.slane %v1268, 2
      %v1270 = vadd.f32 %v1268, %v1269
      %v1271 = vrot.slane %v1270, 1
      %v1272 = vadd.f32 %v1270, %v1271
      %s1273 = scalar_lea.vmem %s497, 4
      %v1274 = vld [vmem:[%s1273] sm:$0x3]
      %v1277 = vsel %vm636, %v1272, %v1263
      %v1278 = vsel %vm721, %v1277, 0
      %1280 = vmatpush.msra.mxu0 0.0
      %1281 = vmatpush.msra.mxu0 0.0
      %1282 = vmatpush.msra.mxu0 0.0
      %1283 = vmatpush.msra.mxu0 0.0
      %1284 = vmatpush.msra.mxu0 0.0
      %1285 = vmatpush.msra.mxu0 0.0
      %1286 = vmatpush.msra.mxu0 0.0
      %1287 = vmatpush.msra.mxu0 0.0
      %1288 = vmatpush.msra.mxu0 0.0
      %1289 = vmatpush.msra.mxu0 0.0
      %1290 = vmatpush.msra.mxu0 0.0
      %1291 = vmatpush.msra.mxu0 0.0
      %1292 = vmatpush.msra.mxu0 0.0
      %1293 = vmatpush.msra.mxu0 %v557
      %1294 = vmatpush.msra.mxu0 %v556
      %1295 = vmatpush.msra.mxu0 %v555
      %1296 = vmatmul.f32.gmra.mxu0 %v1278
      %v1297 = vpop.f32.mrf.mxu0
      %v1298 = vadd.f32 0.0, %v1297
      %1299 = vdwg.mxu0
      %v1300 = vadd.f32 %v1274, %v1298
      %v1301 = vsel %vm565, %v1100, 0
      %1303 = vmatpush.msra.mxu0 0.0
      %1304 = vmatpush.msra.mxu0 0.0
      %1305 = vmatpush.msra.mxu0 0.0
      %1306 = vmatpush.msra.mxu0 0.0
      %1307 = vmatpush.msra.mxu0 0.0
      %1308 = vmatpush.msra.mxu0 0.0
      %1309 = vmatpush.msra.mxu0 0.0
      %1310 = vmatpush.msra.mxu0 0.0
      %1311 = vmatpush.msra.mxu0 0.0
      %1312 = vmatpush.msra.mxu0 0.0
      %1313 = vmatpush.msra.mxu0 0.0
      %1314 = vmatpush.msra.mxu0 0.0
      %1315 = vmatpush.msra.mxu0 %v561
      %1316 = vmatpush.msra.mxu0 %v560
      %1317 = vmatpush.msra.mxu0 %v559
      %1318 = vmatpush.msra.mxu0 %v558
      %1319 = vmatmul.f32.gmra.mxu0 %v1301
      %v1320 = vpop.f32.mrf.mxu0
      %v1321 = vadd.f32 0.0, %v1320
      %1322 = vdwg.mxu0
      %v1323 = vadd.f32 %v1300, %v1321
      %v1324 = vadd.f32 %v1323, %v792
      %v1325 = vxor.u32 %v1324, 2147483648
      %v1326 = vmul.f32 %v1325, 1.442695
      %v1327 = vpow.pop %v1326
      %v1328 = vadd.f32 %v1327, 1.0
      %v1329 = vrcp.pop %v1328
      %v1330 = vmul.f32 %v1328, %v1329
      %v1331 = vsub.f32 1.0, %v1330
      %v1332 = vmul.f32 %v1329, %v1331
      %v1333 = vadd.f32 %v1329, %v1332
      %vm1334 = vweird.f32 %v1328
      %vm1335 = vweird.f32 %v1329
      %vm1336 = vmor %vm1334, %vm1335
      %v1337 = vsel %vm1336, %v1329, %v1333
      %v1338 = vand.u32 2147483647, %v1328
      %vm1339 = vcmp.eq.f32.partialorder %v1338, 8.507059e+37
      %v1340 = vand.u32 %v1328, 2147483648
      %v1341 = vor.u32 1.1754944e-38, %v1340
      %v1342 = vsel %vm1339, %v1341, %v1337
      %v1343 = vmul.f32 1.0, %v1342
      %v1344 = vtanh.pop %v1324
      %v1345 = vmul.f32 %v1343, %v1091
      %1347 = vrot.lane.b32.xlu0 %v1344, 64
      %v1348 = vpop.permute.xlu0 %1347
      %v1350 = vmul.f32 %v1343, %v1348
      %1352 = vrot.lane.b32.xlu0 %v1350, 32
      %v1353 = vpop.permute.xlu0 %1352
      %v1355 = vadd.f32 %v1345, %v1353
      %v1356 = vtanh.pop %v1355
      %1358 = vrot.lane.b32.xlu0 %v1356, 64
      %v1359 = vpop.permute.xlu0 %1358
      %v1361 = vmul.f32 %v1343, %v1359
      %1363 = vrot.lane.b32.xlu0 %v1361, 32
      %v1364 = vpop.permute.xlu0 %1363
      %s1366 = scalar_lea.vmem %s536, 4
      %1367 = vst.msk [vmem:[%s1366] sm:$0x3] %vm839, %v1364
      %1369 = vrot.lane.b32.xlu0 %v1355, 96
      %v1370 = vpop.permute.xlu0 %1369
      %s1372 = scalar_lea.vmem %s541, 4
      %1373 = vst.msk [vmem:[%s1372] sm:$0x3] %vm839, %v1370
      %v1374 = vsel %vm565, %v1370, 0
      %1376 = vmatpush.msra.mxu0 0.0
      %1377 = vmatpush.msra.mxu0 0.0
      %1378 = vmatpush.msra.mxu0 0.0
      %1379 = vmatpush.msra.mxu0 0.0
      %1380 = vmatpush.msra.mxu0 0.0
      %1381 = vmatpush.msra.mxu0 0.0
      %1382 = vmatpush.msra.mxu0 0.0
      %1383 = vmatpush.msra.mxu0 0.0
      %1384 = vmatpush.msra.mxu0 0.0
      %1385 = vmatpush.msra.mxu0 0.0
      %1386 = vmatpush.msra.mxu0 0.0
      %1387 = vmatpush.msra.mxu0 0.0
      %1388 = vmatpush.msra.mxu0 %v554
      %1389 = vmatpush.msra.mxu0 %v553
      %1390 = vmatpush.msra.mxu0 %v552
      %1391 = vmatpush.msra.mxu0 %v551
      %1392 = vmatmul.f32.gmra.mxu0 %v1374
      %v1393 = vpop.f32.mrf.mxu0
      %v1394 = vadd.f32 0.0, %v1393
      %1395 = vdwg.mxu0
      %v1397 = vrot.slane %v1394, 1
      %v1398 = vperm.slane %v1394, 0
      %v1399 = vperm.slane %v1397, 0
      %v1402 = vadd.f32 %v546, %v1398
      %v1403 = vadd.f32 %v547, %v1398
      %v1404 = vadd.f32 %v548, %v1399
      %v1405 = vadd.f32 %v549, %v1399
      %v1406 = vtanh.pop %v1402
      %v1407 = vtanh.pop %v1403
      %v1408 = vtanh.pop %v1404
      %v1409 = vtanh.pop %v1405
      %v1410 = vmul.f32 %v1406, %v604
      %v1411 = vmul.f32 %v1407, %v604
      %v1412 = vmul.f32 %v1408, %v604
      %v1413 = vmul.f32 %v1409, %v604
      %v1414 = vsel %vm565, %v1410, 0.0
      %1415 = vadd.xlane.f32.xlu0 %v1414
      %v1416 = vpop.xlane.xlu0 %1415
      %v1417 = vsel %vm565, %v1411, 0.0
      %1418 = vadd.xlane.f32.xlu0 %v1417
      %v1419 = vpop.xlane.xlu0 %1418
      %v1420 = vsel %vm565, %v1412, 0.0
      %1421 = vadd.xlane.f32.xlu0 %v1420
      %v1422 = vpop.xlane.xlu0 %1421
      %v1423 = vsel %vm565, %v1413, 0.0
      %1424 = vadd.xlane.f32.xlu0 %v1423
      %v1425 = vpop.xlane.xlu0 %1424
      %v1430 = vperm.slane %v1416, %v627
      %v1431 = vperm.slane %v1419, %v629
      %v1432 = vsel %vm631, %v1431, %v1430
      %v1433 = vperm.slane %v1422, %v627
      %v1434 = vperm.slane %v1425, %v629
      %v1435 = vsel %vm631, %v1434, %v1433
      %v1436 = vsel %vm636, %v1435, %v1432
      %v1438 = vsel %vm639, %v1436, -inf
      %1439 = vmax.xlane.f32.xlu0 %v1438
      %v1440 = vpop.xlane.xlu0 %1439
      %v1442 = vperm.slane %v1440, 0
      %v1443 = vperm.slane %v1440, 1
      %v1446 = vsub.f32 %v1416, %v1442
      %v1447 = vsub.f32 %v1419, %v1442
      %v1448 = vsub.f32 %v1422, %v1443
      %v1449 = vsub.f32 %v1425, %v1443
      %v1450 = vmul.f32 %v1446, 1.442695
      %v1451 = vpow.pop %v1450
      %v1452 = vmul.f32 %v1447, 1.442695
      %v1453 = vpow.pop %v1452
      %v1454 = vmul.f32 %v1448, 1.442695
      %v1455 = vpow.pop %v1454
      %v1456 = vmul.f32 %v1449, 1.442695
      %v1457 = vpow.pop %v1456
      %1462 = vset.pattern.permute.xlu0 0
      %1463 = vperm.xlu0 %1462, %v1451
      %v1464 = vpop.permute.xlu0 %1463
      %1465 = vset.pattern.permute.xlu0 0
      %1466 = vperm.xlu0 %1465, %v1453
      %v1467 = vpop.permute.xlu0 %1466
      %1468 = vset.pattern.permute.xlu0 0
      %1469 = vperm.xlu0 %1468, %v1455
      %v1470 = vpop.permute.xlu0 %1469
      %1471 = vset.pattern.permute.xlu0 0
      %1472 = vperm.xlu0 %1471, %v1457
      %v1473 = vpop.permute.xlu0 %1472
      %v1474 = vperm.slane %v1464, %v627
      %v1475 = vperm.slane %v1467, %v629
      %v1476 = vsel %vm631, %v1475, %v1474
      %v1477 = vperm.slane %v1470, %v627
      %v1478 = vperm.slane %v1473, %v629
      %v1479 = vsel %vm631, %v1478, %v1477
      %v1480 = vsel %vm636, %v1479, %v1476
      %v1482 = vsel %vm639, %v1480, 0.0
      %1483 = vadd.xlane.f32.xlu0 %v1482
      %v1484 = vpop.xlane.xlu0 %1483
      %v1485 = vrcp.pop %v1484
      %v1487 = vperm.slane %v1485, 0
      %v1488 = vperm.slane %v1485, 1
      %v1491 = vmul.f32 %v1451, %v1487
      %v1492 = vmul.f32 %v1453, %v1487
      %v1493 = vmul.f32 %v1455, %v1488
      %v1494 = vmul.f32 %v1457, %v1488
      %1496 = vset.pattern.permute.xlu0 0
      %1497 = vperm.xlu0 %1496, %v1491
      %v1498 = vpop.permute.xlu0 %1497
      %1501 = vset.pattern.permute.xlu0 0
      %1502 = vperm.xlu0 %1501, %v1492
      %v1503 = vpop.permute.xlu0 %1502
      %1506 = vset.pattern.permute.xlu0 0
      %1507 = vperm.xlu0 %1506, %v1493
      %v1508 = vpop.permute.xlu0 %1507
      %1511 = vset.pattern.permute.xlu0 0
      %1512 = vperm.xlu0 %1511, %v1494
      %v1513 = vpop.permute.xlu0 %1512
      %v1515 = vmul.f32 %v1498, %v542
      %v1516 = vmul.f32 %v1503, %v543
      %v1517 = vmul.f32 %v1508, %v544
      %v1518 = vmul.f32 %v1513, %v545
      %v1519 = vsel %vm721, %v1515, 0.0
      %v1520 = vsel %vm721, %v1516, 0.0
      %v1521 = vadd.f32 %v1519, %v1520
      %v1522 = vrot.slane %v1521, 4
      %v1523 = vadd.f32 %v1521, %v1522
      %v1524 = vrot.slane %v1523, 2
      %v1525 = vadd.f32 %v1523, %v1524
      %v1526 = vrot.slane %v1525, 1
      %v1527 = vadd.f32 %v1525, %v1526
      %v1528 = vsel %vm721, %v1517, 0.0
      %v1529 = vsel %vm721, %v1518, 0.0
      %v1530 = vadd.f32 %v1528, %v1529
      %v1531 = vrot.slane %v1530, 4
      %v1532 = vadd.f32 %v1530, %v1531
      %v1533 = vrot.slane %v1532, 2
      %v1534 = vadd.f32 %v1532, %v1533
      %v1535 = vrot.slane %v1534, 1
      %v1536 = vadd.f32 %v1534, %v1535
      %s1537 = scalar_lea.vmem %s497, 6
      %v1538 = vld [vmem:[%s1537] sm:$0x3]
      %v1541 = vsel %vm636, %v1536, %v1527
      %v1542 = vsel %vm721, %v1541, 0
      %1544 = vmatpush.msra.mxu0 0.0
      %1545 = vmatpush.msra.mxu0 0.0
      %1546 = vmatpush.msra.mxu0 0.0
      %1547 = vmatpush.msra.mxu0 0.0
      %1548 = vmatpush.msra.mxu0 0.0
      %1549 = vmatpush.msra.mxu0 0.0
      %1550 = vmatpush.msra.mxu0 0.0
      %1551 = vmatpush.msra.mxu0 0.0
      %1552 = vmatpush.msra.mxu0 0.0
      %1553 = vmatpush.msra.mxu0 0.0
      %1554 = vmatpush.msra.mxu0 0.0
      %1555 = vmatpush.msra.mxu0 0.0
      %1556 = vmatpush.msra.mxu0 0.0
      %1557 = vmatpush.msra.mxu0 %v557
      %1558 = vmatpush.msra.mxu0 %v556
      %1559 = vmatpush.msra.mxu0 %v555
      %1560 = vmatmul.f32.gmra.mxu0 %v1542
      %v1561 = vpop.f32.mrf.mxu0
      %v1562 = vadd.f32 0.0, %v1561
      %1563 = vdwg.mxu0
      %v1564 = vadd.f32 %v1538, %v1562
      %v1565 = vsel %vm565, %v1364, 0
      %1567 = vmatpush.msra.mxu0 0.0
      %1568 = vmatpush.msra.mxu0 0.0
      %1569 = vmatpush.msra.mxu0 0.0
      %1570 = vmatpush.msra.mxu0 0.0
      %1571 = vmatpush.msra.mxu0 0.0
      %1572 = vmatpush.msra.mxu0 0.0
      %1573 = vmatpush.msra.mxu0 0.0
      %1574 = vmatpush.msra.mxu0 0.0
      %1575 = vmatpush.msra.mxu0 0.0
      %1576 = vmatpush.msra.mxu0 0.0
      %1577 = vmatpush.msra.mxu0 0.0
      %1578 = vmatpush.msra.mxu0 0.0
      %1579 = vmatpush.msra.mxu0 %v561
      %1580 = vmatpush.msra.mxu0 %v560
      %1581 = vmatpush.msra.mxu0 %v559
      %1582 = vmatpush.msra.mxu0 %v558
      %1583 = vmatmul.f32.gmra.mxu0 %v1565
      %v1584 = vpop.f32.mrf.mxu0
      %v1585 = vadd.f32 0.0, %v1584
      %1586 = vdwg.mxu0
      %v1587 = vadd.f32 %v1564, %v1585
      %v1588 = vadd.f32 %v1587, %v792
      %v1589 = vxor.u32 %v1588, 2147483648
      %v1590 = vmul.f32 %v1589, 1.442695
      %v1591 = vpow.pop %v1590
      %v1592 = vadd.f32 %v1591, 1.0
      %v1593 = vrcp.pop %v1592
      %v1594 = vmul.f32 %v1592, %v1593
      %v1595 = vsub.f32 1.0, %v1594
      %v1596 = vmul.f32 %v1593, %v1595
      %v1597 = vadd.f32 %v1593, %v1596
      %vm1598 = vweird.f32 %v1592
      %vm1599 = vweird.f32 %v1593
      %vm1600 = vmor %vm1598, %vm1599
      %v1601 = vsel %vm1600, %v1593, %v1597
      %v1602 = vand.u32 2147483647, %v1592
      %vm1603 = vcmp.eq.f32.partialorder %v1602, 8.507059e+37
      %v1604 = vand.u32 %v1592, 2147483648
      %v1605 = vor.u32 1.1754944e-38, %v1604
      %v1606 = vsel %vm1603, %v1605, %v1601
      %v1607 = vmul.f32 1.0, %v1606
      %v1608 = vtanh.pop %v1588
      %v1609 = vmul.f32 %v1607, %v1355
      %1611 = vrot.lane.b32.xlu0 %v1608, 64
      %v1612 = vpop.permute.xlu0 %1611
      %v1614 = vmul.f32 %v1607, %v1612
      %1616 = vrot.lane.b32.xlu0 %v1614, 32
      %v1617 = vpop.permute.xlu0 %1616
      %v1619 = vadd.f32 %v1609, %v1617
      %v1620 = vtanh.pop %v1619
      %1622 = vrot.lane.b32.xlu0 %v1620, 64
      %v1623 = vpop.permute.xlu0 %1622
      %v1625 = vmul.f32 %v1607, %v1623
      %1627 = vrot.lane.b32.xlu0 %v1625, 32
      %v1628 = vpop.permute.xlu0 %1627
      %s1630 = scalar_lea.vmem %s536, 6
      %1631 = vst.msk [vmem:[%s1630] sm:$0x3] %vm839, %v1628
      %1633 = vrot.lane.b32.xlu0 %v1619, 96
      %v1634 = vpop.permute.xlu0 %1633
      %s1636 = scalar_lea.vmem %s541, 6
      %1637 = vst.msk [vmem:[%s1636] sm:$0x3] %vm839, %v1634
      %v1638 = vsel %vm565, %v1634, 0
      %1640 = vmatpush.msra.mxu0 0.0
      %1641 = vmatpush.msra.mxu0 0.0
      %1642 = vmatpush.msra.mxu0 0.0
      %1643 = vmatpush.msra.mxu0 0.0
      %1644 = vmatpush.msra.mxu0 0.0
      %1645 = vmatpush.msra.mxu0 0.0
      %1646 = vmatpush.msra.mxu0 0.0
      %1647 = vmatpush.msra.mxu0 0.0
      %1648 = vmatpush.msra.mxu0 0.0
      %1649 = vmatpush.msra.mxu0 0.0
      %1650 = vmatpush.msra.mxu0 0.0
      %1651 = vmatpush.msra.mxu0 0.0
      %1652 = vmatpush.msra.mxu0 %v554
      %1653 = vmatpush.msra.mxu0 %v553
      %1654 = vmatpush.msra.mxu0 %v552
      %1655 = vmatpush.msra.mxu0 %v551
      %1656 = vmatmul.f32.gmra.mxu0 %v1638
      %v1657 = vpop.f32.mrf.mxu0
      %v1658 = vadd.f32 0.0, %v1657
      %1659 = vdwg.mxu0
      %v1661 = vrot.slane %v1658, 1
      %v1662 = vperm.slane %v1658, 0
      %v1663 = vperm.slane %v1661, 0
      %v1666 = vadd.f32 %v546, %v1662
      %v1667 = vadd.f32 %v547, %v1662
      %v1668 = vadd.f32 %v548, %v1663
      %v1669 = vadd.f32 %v549, %v1663
      %v1670 = vtanh.pop %v1666
      %v1671 = vtanh.pop %v1667
      %v1672 = vtanh.pop %v1668
      %v1673 = vtanh.pop %v1669
      %v1674 = vmul.f32 %v1670, %v604
      %v1675 = vmul.f32 %v1671, %v604
      %v1676 = vmul.f32 %v1672, %v604
      %v1677 = vmul.f32 %v1673, %v604
      %v1678 = vsel %vm565, %v1674, 0.0
      %1679 = vadd.xlane.f32.xlu0 %v1678
      %v1680 = vpop.xlane.xlu0 %1679
      %v1681 = vsel %vm565, %v1675, 0.0
      %1682 = vadd.xlane.f32.xlu0 %v1681
      %v1683 = vpop.xlane.xlu0 %1682
      %v1684 = vsel %vm565, %v1676, 0.0
      %1685 = vadd.xlane.f32.xlu0 %v1684
      %v1686 = vpop.xlane.xlu0 %1685
      %v1687 = vsel %vm565, %v1677, 0.0
      %1688 = vadd.xlane.f32.xlu0 %v1687
      %v1689 = vpop.xlane.xlu0 %1688
      %v1694 = vperm.slane %v1680, %v627
      %v1695 = vperm.slane %v1683, %v629
      %v1696 = vsel %vm631, %v1695, %v1694
      %v1697 = vperm.slane %v1686, %v627
      %v1698 = vperm.slane %v1689, %v629
      %v1699 = vsel %vm631, %v1698, %v1697
      %v1700 = vsel %vm636, %v1699, %v1696
      %v1702 = vsel %vm639, %v1700, -inf
      %1703 = vmax.xlane.f32.xlu0 %v1702
      %v1704 = vpop.xlane.xlu0 %1703
      %v1706 = vperm.slane %v1704, 0
      %v1707 = vperm.slane %v1704, 1
      %v1710 = vsub.f32 %v1680, %v1706
      %v1711 = vsub.f32 %v1683, %v1706
      %v1712 = vsub.f32 %v1686, %v1707
      %v1713 = vsub.f32 %v1689, %v1707
      %v1714 = vmul.f32 %v1710, 1.442695
      %v1715 = vpow.pop %v1714
      %v1716 = vmul.f32 %v1711, 1.442695
      %v1717 = vpow.pop %v1716
      %v1718 = vmul.f32 %v1712, 1.442695
      %v1719 = vpow.pop %v1718
      %v1720 = vmul.f32 %v1713, 1.442695
      %v1721 = vpow.pop %v1720
      %1726 = vset.pattern.permute.xlu0 0
      %1727 = vperm.xlu0 %1726, %v1715
      %v1728 = vpop.permute.xlu0 %1727
      %1729 = vset.pattern.permute.xlu0 0
      %1730 = vperm.xlu0 %1729, %v1717
      %v1731 = vpop.permute.xlu0 %1730
      %1732 = vset.pattern.permute.xlu0 0
      %1733 = vperm.xlu0 %1732, %v1719
      %v1734 = vpop.permute.xlu0 %1733
      %1735 = vset.pattern.permute.xlu0 0
      %1736 = vperm.xlu0 %1735, %v1721
      %v1737 = vpop.permute.xlu0 %1736
      %v1738 = vperm.slane %v1728, %v627
      %v1739 = vperm.slane %v1731, %v629
      %v1740 = vsel %vm631, %v1739, %v1738
      %v1741 = vperm.slane %v1734, %v627
      %v1742 = vperm.slane %v1737, %v629
      %v1743 = vsel %vm631, %v1742, %v1741
      %v1744 = vsel %vm636, %v1743, %v1740
      %v1746 = vsel %vm639, %v1744, 0.0
      %1747 = vadd.xlane.f32.xlu0 %v1746
      %v1748 = vpop.xlane.xlu0 %1747
      %v1749 = vrcp.pop %v1748
      %v1751 = vperm.slane %v1749, 0
      %v1752 = vperm.slane %v1749, 1
      %v1755 = vmul.f32 %v1715, %v1751
      %v1756 = vmul.f32 %v1717, %v1751
      %v1757 = vmul.f32 %v1719, %v1752
      %v1758 = vmul.f32 %v1721, %v1752
      %1760 = vset.pattern.permute.xlu0 0
      %1761 = vperm.xlu0 %1760, %v1755
      %v1762 = vpop.permute.xlu0 %1761
      %1765 = vset.pattern.permute.xlu0 0
      %1766 = vperm.xlu0 %1765, %v1756
      %v1767 = vpop.permute.xlu0 %1766
      %1770 = vset.pattern.permute.xlu0 0
      %1771 = vperm.xlu0 %1770, %v1757
      %v1772 = vpop.permute.xlu0 %1771
      %1775 = vset.pattern.permute.xlu0 0
      %1776 = vperm.xlu0 %1775, %v1758
      %v1777 = vpop.permute.xlu0 %1776
      %v1779 = vmul.f32 %v1762, %v542
      %v1780 = vmul.f32 %v1767, %v543
      %v1781 = vmul.f32 %v1772, %v544
      %v1782 = vmul.f32 %v1777, %v545
      %v1783 = vsel %vm721, %v1779, 0.0
      %v1784 = vsel %vm721, %v1780, 0.0
      %v1785 = vadd.f32 %v1783, %v1784
      %v1786 = vrot.slane %v1785, 4
      %v1787 = vadd.f32 %v1785, %v1786
      %v1788 = vrot.slane %v1787, 2
      %v1789 = vadd.f32 %v1787, %v1788
      %v1790 = vrot.slane %v1789, 1
      %v1791 = vadd.f32 %v1789, %v1790
      %v1792 = vsel %vm721, %v1781, 0.0
      %v1793 = vsel %vm721, %v1782, 0.0
      %v1794 = vadd.f32 %v1792, %v1793
      %v1795 = vrot.slane %v1794, 4
      %v1796 = vadd.f32 %v1794, %v1795
      %v1797 = vrot.slane %v1796, 2
      %v1798 = vadd.f32 %v1796, %v1797
      %v1799 = vrot.slane %v1798, 1
      %v1800 = vadd.f32 %v1798, %v1799
      %s1801 = scalar_lea.vmem %s497, 8
      %v1802 = vld [vmem:[%s1801] sm:$0x3]
      %v1805 = vsel %vm636, %v1800, %v1791
      %v1806 = vsel %vm721, %v1805, 0
      %1808 = vmatpush.msra.mxu0 0.0
      %1809 = vmatpush.msra.mxu0 0.0
      %1810 = vmatpush.msra.mxu0 0.0
      %1811 = vmatpush.msra.mxu0 0.0
      %1812 = vmatpush.msra.mxu0 0.0
      %1813 = vmatpush.msra.mxu0 0.0
      %1814 = vmatpush.msra.mxu0 0.0
      %1815 = vmatpush.msra.mxu0 0.0
      %1816 = vmatpush.msra.mxu0 0.0
      %1817 = vmatpush.msra.mxu0 0.0
      %1818 = vmatpush.msra.mxu0 0.0
      %1819 = vmatpush.msra.mxu0 0.0
      %1820 = vmatpush.msra.mxu0 0.0
      %1821 = vmatpush.msra.mxu0 %v557
      %1822 = vmatpush.msra.mxu0 %v556
      %1823 = vmatpush.msra.mxu0 %v555
      %1824 = vmatmul.f32.gmra.mxu0 %v1806
      %v1825 = vpop.f32.mrf.mxu0
      %v1826 = vadd.f32 0.0, %v1825
      %1827 = vdwg.mxu0
      %v1828 = vadd.f32 %v1802, %v1826
      %v1829 = vsel %vm565, %v1628, 0
      %1831 = vmatpush.msra.mxu0 0.0
      %1832 = vmatpush.msra.mxu0 0.0
      %1833 = vmatpush.msra.mxu0 0.0
      %1834 = vmatpush.msra.mxu0 0.0
      %1835 = vmatpush.msra.mxu0 0.0
      %1836 = vmatpush.msra.mxu0 0.0
      %1837 = vmatpush.msra.mxu0 0.0
      %1838 = vmatpush.msra.mxu0 0.0
      %1839 = vmatpush.msra.mxu0 0.0
      %1840 = vmatpush.msra.mxu0 0.0
      %1841 = vmatpush.msra.mxu0 0.0
      %1842 = vmatpush.msra.mxu0 0.0
      %1843 = vmatpush.msra.mxu0 %v561
      %1844 = vmatpush.msra.mxu0 %v560
      %1845 = vmatpush.msra.mxu0 %v559
      %1846 = vmatpush.msra.mxu0 %v558
      %1847 = vmatmul.f32.gmra.mxu0 %v1829
      %v1848 = vpop.f32.mrf.mxu0
      %v1849 = vadd.f32 0.0, %v1848
      %1850 = vdwg.mxu0
      %v1851 = vadd.f32 %v1828, %v1849
      %v1852 = vadd.f32 %v1851, %v792
      %v1853 = vxor.u32 %v1852, 2147483648
      %v1854 = vmul.f32 %v1853, 1.442695
      %v1855 = vpow.pop %v1854
      %v1856 = vadd.f32 %v1855, 1.0
      %v1857 = vrcp.pop %v1856
      %v1858 = vmul.f32 %v1856, %v1857
      %v1859 = vsub.f32 1.0, %v1858
      %v1860 = vmul.f32 %v1857, %v1859
      %v1861 = vadd.f32 %v1857, %v1860
      %vm1862 = vweird.f32 %v1856
      %vm1863 = vweird.f32 %v1857
      %vm1864 = vmor %vm1862, %vm1863
      %v1865 = vsel %vm1864, %v1857, %v1861
      %v1866 = vand.u32 2147483647, %v1856
      %vm1867 = vcmp.eq.f32.partialorder %v1866, 8.507059e+37
      %v1868 = vand.u32 %v1856, 2147483648
      %v1869 = vor.u32 1.1754944e-38, %v1868
      %v1870 = vsel %vm1867, %v1869, %v1865
      %v1871 = vmul.f32 1.0, %v1870
      %v1872 = vtanh.pop %v1852
      %v1873 = vmul.f32 %v1871, %v1619
      %1875 = vrot.lane.b32.xlu0 %v1872, 64
      %v1876 = vpop.permute.xlu0 %1875
      %v1878 = vmul.f32 %v1871, %v1876
      %1880 = vrot.lane.b32.xlu0 %v1878, 32
      %v1881 = vpop.permute.xlu0 %1880
      %v1883 = vadd.f32 %v1873, %v1881
      %v1884 = vtanh.pop %v1883
      %1886 = vrot.lane.b32.xlu0 %v1884, 64
      %v1887 = vpop.permute.xlu0 %1886
      %v1889 = vmul.f32 %v1871, %v1887
      %1891 = vrot.lane.b32.xlu0 %v1889, 32
      %v1892 = vpop.permute.xlu0 %1891
      %s1894 = scalar_lea.vmem %s536, 8
      %1895 = vst.msk [vmem:[%s1894] sm:$0x3] %vm839, %v1892
      %1897 = vrot.lane.b32.xlu0 %v1883, 96
      %v1898 = vpop.permute.xlu0 %1897
      %s1900 = scalar_lea.vmem %s541, 8
      %1901 = vst.msk [vmem:[%s1900] sm:$0x3] %vm839, %v1898
      %v1902 = vsel %vm565, %v1898, 0
      %1904 = vmatpush.msra.mxu0 0.0
      %1905 = vmatpush.msra.mxu0 0.0
      %1906 = vmatpush.msra.mxu0 0.0
      %1907 = vmatpush.msra.mxu0 0.0
      %1908 = vmatpush.msra.mxu0 0.0
      %1909 = vmatpush.msra.mxu0 0.0
      %1910 = vmatpush.msra.mxu0 0.0
      %1911 = vmatpush.msra.mxu0 0.0
      %1912 = vmatpush.msra.mxu0 0.0
      %1913 = vmatpush.msra.mxu0 0.0
      %1914 = vmatpush.msra.mxu0 0.0
      %1915 = vmatpush.msra.mxu0 0.0
      %1916 = vmatpush.msra.mxu0 %v554
      %1917 = vmatpush.msra.mxu0 %v553
      %1918 = vmatpush.msra.mxu0 %v552
      %1919 = vmatpush.msra.mxu0 %v551
      %1920 = vmatmul.f32.gmra.mxu0 %v1902
      %v1921 = vpop.f32.mrf.mxu0
      %v1922 = vadd.f32 0.0, %v1921
      %1923 = vdwg.mxu0
      %v1925 = vrot.slane %v1922, 1
      %v1926 = vperm.slane %v1922, 0
      %v1927 = vperm.slane %v1925, 0
      %v1930 = vadd.f32 %v546, %v1926
      %v1931 = vadd.f32 %v547, %v1926
      %v1932 = vadd.f32 %v548, %v1927
      %v1933 = vadd.f32 %v549, %v1927
      %v1934 = vtanh.pop %v1930
      %v1935 = vtanh.pop %v1931
      %v1936 = vtanh.pop %v1932
      %v1937 = vtanh.pop %v1933
      %v1938 = vmul.f32 %v1934, %v604
      %v1939 = vmul.f32 %v1935, %v604
      %v1940 = vmul.f32 %v1936, %v604
      %v1941 = vmul.f32 %v1937, %v604
      %v1942 = vsel %vm565, %v1938, 0.0
      %1943 = vadd.xlane.f32.xlu0 %v1942
      %v1944 = vpop.xlane.xlu0 %1943
      %v1945 = vsel %vm565, %v1939, 0.0
      %1946 = vadd.xlane.f32.xlu0 %v1945
      %v1947 = vpop.xlane.xlu0 %1946
      %v1948 = vsel %vm565, %v1940, 0.0
      %1949 = vadd.xlane.f32.xlu0 %v1948
      %v1950 = vpop.xlane.xlu0 %1949
      %v1951 = vsel %vm565, %v1941, 0.0
      %1952 = vadd.xlane.f32.xlu0 %v1951
      %v1953 = vpop.xlane.xlu0 %1952
      %v1958 = vperm.slane %v1944, %v627
      %v1959 = vperm.slane %v1947, %v629
      %v1960 = vsel %vm631, %v1959, %v1958
      %v1961 = vperm.slane %v1950, %v627
      %v1962 = vperm.slane %v1953, %v629
      %v1963 = vsel %vm631, %v1962, %v1961
      %v1964 = vsel %vm636, %v1963, %v1960
      %v1966 = vsel %vm639, %v1964, -inf
      %1967 = vmax.xlane.f32.xlu0 %v1966
      %v1968 = vpop.xlane.xlu0 %1967
      %v1970 = vperm.slane %v1968, 0
      %v1971 = vperm.slane %v1968, 1
      %v1974 = vsub.f32 %v1944, %v1970
      %v1975 = vsub.f32 %v1947, %v1970
      %v1976 = vsub.f32 %v1950, %v1971
      %v1977 = vsub.f32 %v1953, %v1971
      %v1978 = vmul.f32 %v1974, 1.442695
      %v1979 = vpow.pop %v1978
      %v1980 = vmul.f32 %v1975, 1.442695
      %v1981 = vpow.pop %v1980
      %v1982 = vmul.f32 %v1976, 1.442695
      %v1983 = vpow.pop %v1982
      %v1984 = vmul.f32 %v1977, 1.442695
      %v1985 = vpow.pop %v1984
      %1990 = vset.pattern.permute.xlu0 0
      %1991 = vperm.xlu0 %1990, %v1979
      %v1992 = vpop.permute.xlu0 %1991
      %1993 = vset.pattern.permute.xlu0 0
      %1994 = vperm.xlu0 %1993, %v1981
      %v1995 = vpop.permute.xlu0 %1994
      %1996 = vset.pattern.permute.xlu0 0
      %1997 = vperm.xlu0 %1996, %v1983
      %v1998 = vpop.permute.xlu0 %1997
      %1999 = vset.pattern.permute.xlu0 0
      %2000 = vperm.xlu0 %1999, %v1985
      %v2001 = vpop.permute.xlu0 %2000
      %v2002 = vperm.slane %v1992, %v627
      %v2003 = vperm.slane %v1995, %v629
      %v2004 = vsel %vm631, %v2003, %v2002
      %v2005 = vperm.slane %v1998, %v627
      %v2006 = vperm.slane %v2001, %v629
      %v2007 = vsel %vm631, %v2006, %v2005
      %v2008 = vsel %vm636, %v2007, %v2004
      %v2010 = vsel %vm639, %v2008, 0.0
      %2011 = vadd.xlane.f32.xlu0 %v2010
      %v2012 = vpop.xlane.xlu0 %2011
      %v2013 = vrcp.pop %v2012
      %v2015 = vperm.slane %v2013, 0
      %v2016 = vperm.slane %v2013, 1
      %v2019 = vmul.f32 %v1979, %v2015
      %v2020 = vmul.f32 %v1981, %v2015
      %v2021 = vmul.f32 %v1983, %v2016
      %v2022 = vmul.f32 %v1985, %v2016
      %2024 = vset.pattern.permute.xlu0 0
      %2025 = vperm.xlu0 %2024, %v2019
      %v2026 = vpop.permute.xlu0 %2025
      %2029 = vset.pattern.permute.xlu0 0
      %2030 = vperm.xlu0 %2029, %v2020
      %v2031 = vpop.permute.xlu0 %2030
      %2034 = vset.pattern.permute.xlu0 0
      %2035 = vperm.xlu0 %2034, %v2021
      %v2036 = vpop.permute.xlu0 %2035
      %2039 = vset.pattern.permute.xlu0 0
      %2040 = vperm.xlu0 %2039, %v2022
      %v2041 = vpop.permute.xlu0 %2040
      %v2043 = vmul.f32 %v2026, %v542
      %v2044 = vmul.f32 %v2031, %v543
      %v2045 = vmul.f32 %v2036, %v544
      %v2046 = vmul.f32 %v2041, %v545
      %v2047 = vsel %vm721, %v2043, 0.0
      %v2048 = vsel %vm721, %v2044, 0.0
      %v2049 = vadd.f32 %v2047, %v2048
      %v2050 = vrot.slane %v2049, 4
      %v2051 = vadd.f32 %v2049, %v2050
      %v2052 = vrot.slane %v2051, 2
      %v2053 = vadd.f32 %v2051, %v2052
      %v2054 = vrot.slane %v2053, 1
      %v2055 = vadd.f32 %v2053, %v2054
      %v2056 = vsel %vm721, %v2045, 0.0
      %v2057 = vsel %vm721, %v2046, 0.0
      %v2058 = vadd.f32 %v2056, %v2057
      %v2059 = vrot.slane %v2058, 4
      %v2060 = vadd.f32 %v2058, %v2059
      %v2061 = vrot.slane %v2060, 2
      %v2062 = vadd.f32 %v2060, %v2061
      %v2063 = vrot.slane %v2062, 1
      %v2064 = vadd.f32 %v2062, %v2063
      %s2065 = scalar_lea.vmem %s497, 10
      %v2066 = vld [vmem:[%s2065] sm:$0x3]
      %v2069 = vsel %vm636, %v2064, %v2055
      %v2070 = vsel %vm721, %v2069, 0
      %2072 = vmatpush.msra.mxu0 0.0
      %2073 = vmatpush.msra.mxu0 0.0
      %2074 = vmatpush.msra.mxu0 0.0
      %2075 = vmatpush.msra.mxu0 0.0
      %2076 = vmatpush.msra.mxu0 0.0
      %2077 = vmatpush.msra.mxu0 0.0
      %2078 = vmatpush.msra.mxu0 0.0
      %2079 = vmatpush.msra.mxu0 0.0
      %2080 = vmatpush.msra.mxu0 0.0
      %2081 = vmatpush.msra.mxu0 0.0
      %2082 = vmatpush.msra.mxu0 0.0
      %2083 = vmatpush.msra.mxu0 0.0
      %2084 = vmatpush.msra.mxu0 0.0
      %2085 = vmatpush.msra.mxu0 %v557
      %2086 = vmatpush.msra.mxu0 %v556
      %2087 = vmatpush.msra.mxu0 %v555
      %2088 = vmatmul.f32.gmra.mxu0 %v2070
      %v2089 = vpop.f32.mrf.mxu0
      %v2090 = vadd.f32 0.0, %v2089
      %2091 = vdwg.mxu0
      %v2092 = vadd.f32 %v2066, %v2090
      %v2093 = vsel %vm565, %v1892, 0
      %2095 = vmatpush.msra.mxu0 0.0
      %2096 = vmatpush.msra.mxu0 0.0
      %2097 = vmatpush.msra.mxu0 0.0
      %2098 = vmatpush.msra.mxu0 0.0
      %2099 = vmatpush.msra.mxu0 0.0
      %2100 = vmatpush.msra.mxu0 0.0
      %2101 = vmatpush.msra.mxu0 0.0
      %2102 = vmatpush.msra.mxu0 0.0
      %2103 = vmatpush.msra.mxu0 0.0
      %2104 = vmatpush.msra.mxu0 0.0
      %2105 = vmatpush.msra.mxu0 0.0
      %2106 = vmatpush.msra.mxu0 0.0
      %2107 = vmatpush.msra.mxu0 %v561
      %2108 = vmatpush.msra.mxu0 %v560
      %2109 = vmatpush.msra.mxu0 %v559
      %2110 = vmatpush.msra.mxu0 %v558
      %2111 = vmatmul.f32.gmra.mxu0 %v2093
      %v2112 = vpop.f32.mrf.mxu0
      %v2113 = vadd.f32 0.0, %v2112
      %2114 = vdwg.mxu0
      %v2115 = vadd.f32 %v2092, %v2113
      %v2116 = vadd.f32 %v2115, %v792
      %v2117 = vxor.u32 %v2116, 2147483648
      %v2118 = vmul.f32 %v2117, 1.442695
      %v2119 = vpow.pop %v2118
      %v2120 = vadd.f32 %v2119, 1.0
      %v2121 = vrcp.pop %v2120
      %v2122 = vmul.f32 %v2120, %v2121
      %v2123 = vsub.f32 1.0, %v2122
      %v2124 = vmul.f32 %v2121, %v2123
      %v2125 = vadd.f32 %v2121, %v2124
      %vm2126 = vweird.f32 %v2120
      %vm2127 = vweird.f32 %v2121
      %vm2128 = vmor %vm2126, %vm2127
      %v2129 = vsel %vm2128, %v2121, %v2125
      %v2130 = vand.u32 2147483647, %v2120
      %vm2131 = vcmp.eq.f32.partialorder %v2130, 8.507059e+37
      %v2132 = vand.u32 %v2120, 2147483648
      %v2133 = vor.u32 1.1754944e-38, %v2132
      %v2134 = vsel %vm2131, %v2133, %v2129
      %v2135 = vmul.f32 1.0, %v2134
      %v2136 = vtanh.pop %v2116
      %v2137 = vmul.f32 %v2135, %v1883
      %2139 = vrot.lane.b32.xlu0 %v2136, 64
      %v2140 = vpop.permute.xlu0 %2139
      %v2142 = vmul.f32 %v2135, %v2140
      %2144 = vrot.lane.b32.xlu0 %v2142, 32
      %v2145 = vpop.permute.xlu0 %2144
      %v2147 = vadd.f32 %v2137, %v2145
      %v2148 = vtanh.pop %v2147
      %2150 = vrot.lane.b32.xlu0 %v2148, 64
      %v2151 = vpop.permute.xlu0 %2150
      %v2153 = vmul.f32 %v2135, %v2151
      %2155 = vrot.lane.b32.xlu0 %v2153, 32
      %v2156 = vpop.permute.xlu0 %2155
      %s2158 = scalar_lea.vmem %s536, 10
      %2159 = vst.msk [vmem:[%s2158] sm:$0x3] %vm839, %v2156
      %2161 = vrot.lane.b32.xlu0 %v2147, 96
      %v2162 = vpop.permute.xlu0 %2161
      %s2164 = scalar_lea.vmem %s541, 10
      %2165 = vst.msk [vmem:[%s2164] sm:$0x3] %vm839, %v2162
      %v2166 = vsel %vm565, %v2162, 0
      %2168 = vmatpush.msra.mxu0 0.0
      %2169 = vmatpush.msra.mxu0 0.0
      %2170 = vmatpush.msra.mxu0 0.0
      %2171 = vmatpush.msra.mxu0 0.0
      %2172 = vmatpush.msra.mxu0 0.0
      %2173 = vmatpush.msra.mxu0 0.0
      %2174 = vmatpush.msra.mxu0 0.0
      %2175 = vmatpush.msra.mxu0 0.0
      %2176 = vmatpush.msra.mxu0 0.0
      %2177 = vmatpush.msra.mxu0 0.0
      %2178 = vmatpush.msra.mxu0 0.0
      %2179 = vmatpush.msra.mxu0 0.0
      %2180 = vmatpush.msra.mxu0 %v554
      %2181 = vmatpush.msra.mxu0 %v553
      %2182 = vmatpush.msra.mxu0 %v552
      %2183 = vmatpush.msra.mxu0 %v551
      %2184 = vmatmul.f32.gmra.mxu0 %v2166
      %v2185 = vpop.f32.mrf.mxu0
      %v2186 = vadd.f32 0.0, %v2185
      %2187 = vdwg.mxu0
      %v2189 = vrot.slane %v2186, 1
      %v2190 = vperm.slane %v2186, 0
      %v2191 = vperm.slane %v2189, 0
      %v2194 = vadd.f32 %v546, %v2190
      %v2195 = vadd.f32 %v547, %v2190
      %v2196 = vadd.f32 %v548, %v2191
      %v2197 = vadd.f32 %v549, %v2191
      %v2198 = vtanh.pop %v2194
      %v2199 = vtanh.pop %v2195
      %v2200 = vtanh.pop %v2196
      %v2201 = vtanh.pop %v2197
      %v2202 = vmul.f32 %v2198, %v604
      %v2203 = vmul.f32 %v2199, %v604
      %v2204 = vmul.f32 %v2200, %v604
      %v2205 = vmul.f32 %v2201, %v604
      %v2206 = vsel %vm565, %v2202, 0.0
      %2207 = vadd.xlane.f32.xlu0 %v2206
      %v2208 = vpop.xlane.xlu0 %2207
      %v2209 = vsel %vm565, %v2203, 0.0
      %2210 = vadd.xlane.f32.xlu0 %v2209
      %v2211 = vpop.xlane.xlu0 %2210
      %v2212 = vsel %vm565, %v2204, 0.0
      %2213 = vadd.xlane.f32.xlu0 %v2212
      %v2214 = vpop.xlane.xlu0 %2213
      %v2215 = vsel %vm565, %v2205, 0.0
      %2216 = vadd.xlane.f32.xlu0 %v2215
      %v2217 = vpop.xlane.xlu0 %2216
      %v2222 = vperm.slane %v2208, %v627
      %v2223 = vperm.slane %v2211, %v629
      %v2224 = vsel %vm631, %v2223, %v2222
      %v2225 = vperm.slane %v2214, %v627
      %v2226 = vperm.slane %v2217, %v629
      %v2227 = vsel %vm631, %v2226, %v2225
      %v2228 = vsel %vm636, %v2227, %v2224
      %v2230 = vsel %vm639, %v2228, -inf
      %2231 = vmax.xlane.f32.xlu0 %v2230
      %v2232 = vpop.xlane.xlu0 %2231
      %v2234 = vperm.slane %v2232, 0
      %v2235 = vperm.slane %v2232, 1
      %v2238 = vsub.f32 %v2208, %v2234
      %v2239 = vsub.f32 %v2211, %v2234
      %v2240 = vsub.f32 %v2214, %v2235
      %v2241 = vsub.f32 %v2217, %v2235
      %v2242 = vmul.f32 %v2238, 1.442695
      %v2243 = vpow.pop %v2242
      %v2244 = vmul.f32 %v2239, 1.442695
      %v2245 = vpow.pop %v2244
      %v2246 = vmul.f32 %v2240, 1.442695
      %v2247 = vpow.pop %v2246
      %v2248 = vmul.f32 %v2241, 1.442695
      %v2249 = vpow.pop %v2248
      %2254 = vset.pattern.permute.xlu0 0
      %2255 = vperm.xlu0 %2254, %v2243
      %v2256 = vpop.permute.xlu0 %2255
      %2257 = vset.pattern.permute.xlu0 0
      %2258 = vperm.xlu0 %2257, %v2245
      %v2259 = vpop.permute.xlu0 %2258
      %2260 = vset.pattern.permute.xlu0 0
      %2261 = vperm.xlu0 %2260, %v2247
      %v2262 = vpop.permute.xlu0 %2261
      %2263 = vset.pattern.permute.xlu0 0
      %2264 = vperm.xlu0 %2263, %v2249
      %v2265 = vpop.permute.xlu0 %2264
      %v2266 = vperm.slane %v2256, %v627
      %v2267 = vperm.slane %v2259, %v629
      %v2268 = vsel %vm631, %v2267, %v2266
      %v2269 = vperm.slane %v2262, %v627
      %v2270 = vperm.slane %v2265, %v629
      %v2271 = vsel %vm631, %v2270, %v2269
      %v2272 = vsel %vm636, %v2271, %v2268
      %v2274 = vsel %vm639, %v2272, 0.0
      %2275 = vadd.xlane.f32.xlu0 %v2274
      %v2276 = vpop.xlane.xlu0 %2275
      %v2277 = vrcp.pop %v2276
      %v2279 = vperm.slane %v2277, 0
      %v2280 = vperm.slane %v2277, 1
      %v2283 = vmul.f32 %v2243, %v2279
      %v2284 = vmul.f32 %v2245, %v2279
      %v2285 = vmul.f32 %v2247, %v2280
      %v2286 = vmul.f32 %v2249, %v2280
      %2288 = vset.pattern.permute.xlu0 0
      %2289 = vperm.xlu0 %2288, %v2283
      %v2290 = vpop.permute.xlu0 %2289
      %2293 = vset.pattern.permute.xlu0 0
      %2294 = vperm.xlu0 %2293, %v2284
      %v2295 = vpop.permute.xlu0 %2294
      %2298 = vset.pattern.permute.xlu0 0
      %2299 = vperm.xlu0 %2298, %v2285
      %v2300 = vpop.permute.xlu0 %2299
      %2303 = vset.pattern.permute.xlu0 0
      %2304 = vperm.xlu0 %2303, %v2286
      %v2305 = vpop.permute.xlu0 %2304
      %v2307 = vmul.f32 %v2290, %v542
      %v2308 = vmul.f32 %v2295, %v543
      %v2309 = vmul.f32 %v2300, %v544
      %v2310 = vmul.f32 %v2305, %v545
      %v2311 = vsel %vm721, %v2307, 0.0
      %v2312 = vsel %vm721, %v2308, 0.0
      %v2313 = vadd.f32 %v2311, %v2312
      %v2314 = vrot.slane %v2313, 4
      %v2315 = vadd.f32 %v2313, %v2314
      %v2316 = vrot.slane %v2315, 2
      %v2317 = vadd.f32 %v2315, %v2316
      %v2318 = vrot.slane %v2317, 1
      %v2319 = vadd.f32 %v2317, %v2318
      %v2320 = vsel %vm721, %v2309, 0.0
      %v2321 = vsel %vm721, %v2310, 0.0
      %v2322 = vadd.f32 %v2320, %v2321
      %v2323 = vrot.slane %v2322, 4
      %v2324 = vadd.f32 %v2322, %v2323
      %v2325 = vrot.slane %v2324, 2
      %v2326 = vadd.f32 %v2324, %v2325
      %v2327 = vrot.slane %v2326, 1
      %v2328 = vadd.f32 %v2326, %v2327
      %s2329 = scalar_lea.vmem %s497, 12
      %v2330 = vld [vmem:[%s2329] sm:$0x3]
      %v2333 = vsel %vm636, %v2328, %v2319
      %v2334 = vsel %vm721, %v2333, 0
      %2336 = vmatpush.msra.mxu0 0.0
      %2337 = vmatpush.msra.mxu0 0.0
      %2338 = vmatpush.msra.mxu0 0.0
      %2339 = vmatpush.msra.mxu0 0.0
      %2340 = vmatpush.msra.mxu0 0.0
      %2341 = vmatpush.msra.mxu0 0.0
      %2342 = vmatpush.msra.mxu0 0.0
      %2343 = vmatpush.msra.mxu0 0.0
      %2344 = vmatpush.msra.mxu0 0.0
      %2345 = vmatpush.msra.mxu0 0.0
      %2346 = vmatpush.msra.mxu0 0.0
      %2347 = vmatpush.msra.mxu0 0.0
      %2348 = vmatpush.msra.mxu0 0.0
      %2349 = vmatpush.msra.mxu0 %v557
      %2350 = vmatpush.msra.mxu0 %v556
      %2351 = vmatpush.msra.mxu0 %v555
      %2352 = vmatmul.f32.gmra.mxu0 %v2334
      %v2353 = vpop.f32.mrf.mxu0
      %v2354 = vadd.f32 0.0, %v2353
      %2355 = vdwg.mxu0
      %v2356 = vadd.f32 %v2330, %v2354
      %v2357 = vsel %vm565, %v2156, 0
      %2359 = vmatpush.msra.mxu0 0.0
      %2360 = vmatpush.msra.mxu0 0.0
      %2361 = vmatpush.msra.mxu0 0.0
      %2362 = vmatpush.msra.mxu0 0.0
      %2363 = vmatpush.msra.mxu0 0.0
      %2364 = vmatpush.msra.mxu0 0.0
      %2365 = vmatpush.msra.mxu0 0.0
      %2366 = vmatpush.msra.mxu0 0.0
      %2367 = vmatpush.msra.mxu0 0.0
      %2368 = vmatpush.msra.mxu0 0.0
      %2369 = vmatpush.msra.mxu0 0.0
      %2370 = vmatpush.msra.mxu0 0.0
      %2371 = vmatpush.msra.mxu0 %v561
      %2372 = vmatpush.msra.mxu0 %v560
      %2373 = vmatpush.msra.mxu0 %v559
      %2374 = vmatpush.msra.mxu0 %v558
      %2375 = vmatmul.f32.gmra.mxu0 %v2357
      %v2376 = vpop.f32.mrf.mxu0
      %v2377 = vadd.f32 0.0, %v2376
      %2378 = vdwg.mxu0
      %v2379 = vadd.f32 %v2356, %v2377
      %v2380 = vadd.f32 %v2379, %v792
      %v2381 = vxor.u32 %v2380, 2147483648
      %v2382 = vmul.f32 %v2381, 1.442695
      %v2383 = vpow.pop %v2382
      %v2384 = vadd.f32 %v2383, 1.0
      %v2385 = vrcp.pop %v2384
      %v2386 = vmul.f32 %v2384, %v2385
      %v2387 = vsub.f32 1.0, %v2386
      %v2388 = vmul.f32 %v2385, %v2387
      %v2389 = vadd.f32 %v2385, %v2388
      %vm2390 = vweird.f32 %v2384
      %vm2391 = vweird.f32 %v2385
      %vm2392 = vmor %vm2390, %vm2391
      %v2393 = vsel %vm2392, %v2385, %v2389
      %v2394 = vand.u32 2147483647, %v2384
      %vm2395 = vcmp.eq.f32.partialorder %v2394, 8.507059e+37
      %v2396 = vand.u32 %v2384, 2147483648
      %v2397 = vor.u32 1.1754944e-38, %v2396
      %v2398 = vsel %vm2395, %v2397, %v2393
      %v2399 = vmul.f32 1.0, %v2398
      %v2400 = vtanh.pop %v2380
      %v2401 = vmul.f32 %v2399, %v2147
      %2403 = vrot.lane.b32.xlu0 %v2400, 64
      %v2404 = vpop.permute.xlu0 %2403
      %v2406 = vmul.f32 %v2399, %v2404
      %2408 = vrot.lane.b32.xlu0 %v2406, 32
      %v2409 = vpop.permute.xlu0 %2408
      %v2411 = vadd.f32 %v2401, %v2409
      %v2412 = vtanh.pop %v2411
      %2414 = vrot.lane.b32.xlu0 %v2412, 64
      %v2415 = vpop.permute.xlu0 %2414
      %v2417 = vmul.f32 %v2399, %v2415
      %2419 = vrot.lane.b32.xlu0 %v2417, 32
      %v2420 = vpop.permute.xlu0 %2419
      %s2422 = scalar_lea.vmem %s536, 12
      %2423 = vst.msk [vmem:[%s2422] sm:$0x3] %vm839, %v2420
      %2425 = vrot.lane.b32.xlu0 %v2411, 96
      %v2426 = vpop.permute.xlu0 %2425
      %s2428 = scalar_lea.vmem %s541, 12
      %2429 = vst.msk [vmem:[%s2428] sm:$0x3] %vm839, %v2426
      %v2430 = vsel %vm565, %v2426, 0
      %2432 = vmatpush.msra.mxu0 0.0
      %2433 = vmatpush.msra.mxu0 0.0
      %2434 = vmatpush.msra.mxu0 0.0
      %2435 = vmatpush.msra.mxu0 0.0
      %2436 = vmatpush.msra.mxu0 0.0
      %2437 = vmatpush.msra.mxu0 0.0
      %2438 = vmatpush.msra.mxu0 0.0
      %2439 = vmatpush.msra.mxu0 0.0
      %2440 = vmatpush.msra.mxu0 0.0
      %2441 = vmatpush.msra.mxu0 0.0
      %2442 = vmatpush.msra.mxu0 0.0
      %2443 = vmatpush.msra.mxu0 0.0
      %2444 = vmatpush.msra.mxu0 %v554
      %2445 = vmatpush.msra.mxu0 %v553
      %2446 = vmatpush.msra.mxu0 %v552
      %2447 = vmatpush.msra.mxu0 %v551
      %2448 = vmatmul.f32.gmra.mxu0 %v2430
      %v2449 = vpop.f32.mrf.mxu0
      %v2450 = vadd.f32 0.0, %v2449
      %2451 = vdwg.mxu0
      %v2453 = vrot.slane %v2450, 1
      %v2454 = vperm.slane %v2450, 0
      %v2455 = vperm.slane %v2453, 0
      %v2458 = vadd.f32 %v546, %v2454
      %v2459 = vadd.f32 %v547, %v2454
      %v2460 = vadd.f32 %v548, %v2455
      %v2461 = vadd.f32 %v549, %v2455
      %v2462 = vtanh.pop %v2458
      %v2463 = vtanh.pop %v2459
      %v2464 = vtanh.pop %v2460
      %v2465 = vtanh.pop %v2461
      %v2466 = vmul.f32 %v2462, %v604
      %v2467 = vmul.f32 %v2463, %v604
      %v2468 = vmul.f32 %v2464, %v604
      %v2469 = vmul.f32 %v2465, %v604
      %v2470 = vsel %vm565, %v2466, 0.0
      %2471 = vadd.xlane.f32.xlu0 %v2470
      %v2472 = vpop.xlane.xlu0 %2471
      %v2473 = vsel %vm565, %v2467, 0.0
      %2474 = vadd.xlane.f32.xlu0 %v2473
      %v2475 = vpop.xlane.xlu0 %2474
      %v2476 = vsel %vm565, %v2468, 0.0
      %2477 = vadd.xlane.f32.xlu0 %v2476
      %v2478 = vpop.xlane.xlu0 %2477
      %v2479 = vsel %vm565, %v2469, 0.0
      %2480 = vadd.xlane.f32.xlu0 %v2479
      %v2481 = vpop.xlane.xlu0 %2480
      %v2486 = vperm.slane %v2472, %v627
      %v2487 = vperm.slane %v2475, %v629
      %v2488 = vsel %vm631, %v2487, %v2486
      %v2489 = vperm.slane %v2478, %v627
      %v2490 = vperm.slane %v2481, %v629
      %v2491 = vsel %vm631, %v2490, %v2489
      %v2492 = vsel %vm636, %v2491, %v2488
      %v2494 = vsel %vm639, %v2492, -inf
      %2495 = vmax.xlane.f32.xlu0 %v2494
      %v2496 = vpop.xlane.xlu0 %2495
      %v2498 = vperm.slane %v2496, 0
      %v2499 = vperm.slane %v2496, 1
      %v2502 = vsub.f32 %v2472, %v2498
      %v2503 = vsub.f32 %v2475, %v2498
      %v2504 = vsub.f32 %v2478, %v2499
      %v2505 = vsub.f32 %v2481, %v2499
      %v2506 = vmul.f32 %v2502, 1.442695
      %v2507 = vpow.pop %v2506
      %v2508 = vmul.f32 %v2503, 1.442695
      %v2509 = vpow.pop %v2508
      %v2510 = vmul.f32 %v2504, 1.442695
      %v2511 = vpow.pop %v2510
      %v2512 = vmul.f32 %v2505, 1.442695
      %v2513 = vpow.pop %v2512
      %2518 = vset.pattern.permute.xlu0 0
      %2519 = vperm.xlu0 %2518, %v2507
      %v2520 = vpop.permute.xlu0 %2519
      %2521 = vset.pattern.permute.xlu0 0
      %2522 = vperm.xlu0 %2521, %v2509
      %v2523 = vpop.permute.xlu0 %2522
      %2524 = vset.pattern.permute.xlu0 0
      %2525 = vperm.xlu0 %2524, %v2511
      %v2526 = vpop.permute.xlu0 %2525
      %2527 = vset.pattern.permute.xlu0 0
      %2528 = vperm.xlu0 %2527, %v2513
      %v2529 = vpop.permute.xlu0 %2528
      %v2530 = vperm.slane %v2520, %v627
      %v2531 = vperm.slane %v2523, %v629
      %v2532 = vsel %vm631, %v2531, %v2530
      %v2533 = vperm.slane %v2526, %v627
      %v2534 = vperm.slane %v2529, %v629
      %v2535 = vsel %vm631, %v2534, %v2533
      %v2536 = vsel %vm636, %v2535, %v2532
      %v2538 = vsel %vm639, %v2536, 0.0
      %2539 = vadd.xlane.f32.xlu0 %v2538
      %v2540 = vpop.xlane.xlu0 %2539
      %v2541 = vrcp.pop %v2540
      %v2543 = vperm.slane %v2541, 0
      %v2544 = vperm.slane %v2541, 1
      %v2547 = vmul.f32 %v2507, %v2543
      %v2548 = vmul.f32 %v2509, %v2543
      %v2549 = vmul.f32 %v2511, %v2544
      %v2550 = vmul.f32 %v2513, %v2544
      %2552 = vset.pattern.permute.xlu0 0
      %2553 = vperm.xlu0 %2552, %v2547
      %v2554 = vpop.permute.xlu0 %2553
      %2557 = vset.pattern.permute.xlu0 0
      %2558 = vperm.xlu0 %2557, %v2548
      %v2559 = vpop.permute.xlu0 %2558
      %2562 = vset.pattern.permute.xlu0 0
      %2563 = vperm.xlu0 %2562, %v2549
      %v2564 = vpop.permute.xlu0 %2563
      %2567 = vset.pattern.permute.xlu0 0
      %2568 = vperm.xlu0 %2567, %v2550
      %v2569 = vpop.permute.xlu0 %2568
      %v2571 = vmul.f32 %v2554, %v542
      %v2572 = vmul.f32 %v2559, %v543
      %v2573 = vmul.f32 %v2564, %v544
      %v2574 = vmul.f32 %v2569, %v545
      %v2575 = vsel %vm721, %v2571, 0.0
      %v2576 = vsel %vm721, %v2572, 0.0
      %v2577 = vadd.f32 %v2575, %v2576
      %v2578 = vrot.slane %v2577, 4
      %v2579 = vadd.f32 %v2577, %v2578
      %v2580 = vrot.slane %v2579, 2
      %v2581 = vadd.f32 %v2579, %v2580
      %v2582 = vrot.slane %v2581, 1
      %v2583 = vadd.f32 %v2581, %v2582
      %v2584 = vsel %vm721, %v2573, 0.0
      %v2585 = vsel %vm721, %v2574, 0.0
      %v2586 = vadd.f32 %v2584, %v2585
      %v2587 = vrot.slane %v2586, 4
      %v2588 = vadd.f32 %v2586, %v2587
      %v2589 = vrot.slane %v2588, 2
      %v2590 = vadd.f32 %v2588, %v2589
      %v2591 = vrot.slane %v2590, 1
      %v2592 = vadd.f32 %v2590, %v2591
      %s2593 = scalar_lea.vmem %s497, 14
      %v2594 = vld [vmem:[%s2593] sm:$0x3]
      %v2597 = vsel %vm636, %v2592, %v2583
      %v2598 = vsel %vm721, %v2597, 0
      %2600 = vmatpush.msra.mxu0 0.0
      %2601 = vmatpush.msra.mxu0 0.0
      %2602 = vmatpush.msra.mxu0 0.0
      %2603 = vmatpush.msra.mxu0 0.0
      %2604 = vmatpush.msra.mxu0 0.0
      %2605 = vmatpush.msra.mxu0 0.0
      %2606 = vmatpush.msra.mxu0 0.0
      %2607 = vmatpush.msra.mxu0 0.0
      %2608 = vmatpush.msra.mxu0 0.0
      %2609 = vmatpush.msra.mxu0 0.0
      %2610 = vmatpush.msra.mxu0 0.0
      %2611 = vmatpush.msra.mxu0 0.0
      %2612 = vmatpush.msra.mxu0 0.0
      %2613 = vmatpush.msra.mxu0 %v557
      %2614 = vmatpush.msra.mxu0 %v556
      %2615 = vmatpush.msra.mxu0 %v555
      %2616 = vmatmul.f32.gmra.mxu0 %v2598
      %v2617 = vpop.f32.mrf.mxu0
      %v2618 = vadd.f32 0.0, %v2617
      %2619 = vdwg.mxu0
      %v2620 = vadd.f32 %v2594, %v2618
      %v2621 = vsel %vm565, %v2420, 0
      %2623 = vmatpush.msra.mxu0 0.0
      %2624 = vmatpush.msra.mxu0 0.0
      %2625 = vmatpush.msra.mxu0 0.0
      %2626 = vmatpush.msra.mxu0 0.0
      %2627 = vmatpush.msra.mxu0 0.0
      %2628 = vmatpush.msra.mxu0 0.0
      %2629 = vmatpush.msra.mxu0 0.0
      %2630 = vmatpush.msra.mxu0 0.0
      %2631 = vmatpush.msra.mxu0 0.0
      %2632 = vmatpush.msra.mxu0 0.0
      %2633 = vmatpush.msra.mxu0 0.0
      %2634 = vmatpush.msra.mxu0 0.0
      %2635 = vmatpush.msra.mxu0 %v561
      %2636 = vmatpush.msra.mxu0 %v560
      %2637 = vmatpush.msra.mxu0 %v559
      %2638 = vmatpush.msra.mxu0 %v558
      %2639 = vmatmul.f32.gmra.mxu0 %v2621
      %v2640 = vpop.f32.mrf.mxu0
      %v2641 = vadd.f32 0.0, %v2640
      %2642 = vdwg.mxu0
      %v2643 = vadd.f32 %v2620, %v2641
      %v2644 = vadd.f32 %v2643, %v792
      %v2645 = vxor.u32 %v2644, 2147483648
      %v2646 = vmul.f32 %v2645, 1.442695
      %v2647 = vpow.pop %v2646
      %v2648 = vadd.f32 %v2647, 1.0
      %v2649 = vrcp.pop %v2648
      %v2650 = vmul.f32 %v2648, %v2649
      %v2651 = vsub.f32 1.0, %v2650
      %v2652 = vmul.f32 %v2649, %v2651
      %v2653 = vadd.f32 %v2649, %v2652
      %vm2654 = vweird.f32 %v2648
      %vm2655 = vweird.f32 %v2649
      %vm2656 = vmor %vm2654, %vm2655
      %v2657 = vsel %vm2656, %v2649, %v2653
      %v2658 = vand.u32 2147483647, %v2648
      %vm2659 = vcmp.eq.f32.partialorder %v2658, 8.507059e+37
      %v2660 = vand.u32 %v2648, 2147483648
      %v2661 = vor.u32 1.1754944e-38, %v2660
      %v2662 = vsel %vm2659, %v2661, %v2657
      %v2663 = vmul.f32 1.0, %v2662
      %v2664 = vtanh.pop %v2644
      %v2665 = vmul.f32 %v2663, %v2411
      %2667 = vrot.lane.b32.xlu0 %v2664, 64
      %v2668 = vpop.permute.xlu0 %2667
      %v2670 = vmul.f32 %v2663, %v2668
      %2672 = vrot.lane.b32.xlu0 %v2670, 32
      %v2673 = vpop.permute.xlu0 %2672
      %v2675 = vadd.f32 %v2665, %v2673
      %v2676 = vtanh.pop %v2675
      %2678 = vrot.lane.b32.xlu0 %v2676, 64
      %v2679 = vpop.permute.xlu0 %2678
      %v2681 = vmul.f32 %v2663, %v2679
      %2683 = vrot.lane.b32.xlu0 %v2681, 32
      %v2684 = vpop.permute.xlu0 %2683
      %s2686 = scalar_lea.vmem %s536, 14
      %2687 = vst.msk [vmem:[%s2686] sm:$0x3] %vm839, %v2684
      %2689 = vrot.lane.b32.xlu0 %v2675, 96
      %v2690 = vpop.permute.xlu0 %2689
      %s2692 = scalar_lea.vmem %s541, 14
      %2693 = vst.msk [vmem:[%s2692] sm:$0x3] %vm839, %v2690
      %p2694 = scmp.lt.s32.totalorder %s23, 1
      %s2695 = scalar_select %p2694, %s23, 1
      %s2696 = smul.addr %s2695, 8
      %s2697 = smul.addr %s2696, 2
      %s2698 = scalar_lea.vmem %s10, %s2697
      %p2699 = scmp.lt.s32.totalorder %s23, 1
      %s2700 = scalar_select %p2699, %s23, 1
      %s2701 = smul.addr %s2700, 8
      %s2702 = smul.addr %s2701, 2
      %s2703 = scalar_lea.vmem %s11, %s2702
      // Predicated region
      $region61: #{bidirectional_attn_lstm.1} parent=59 // pred_check
        %p2704 = pneg %p296
      $region62: #{bidirectional_attn_lstm.1} parent=59 // pred_check_branch
        %2706 = sbr.rel (%p2704) target = $region64
      $region63: #{bidirectional_attn_lstm.1} parent=59 // pred_region
        _
      $region64: #{bidirectional_attn_lstm.1} parent=59 // pred_fallthru
        _
      // Predicated region
      $region65: #{bidirectional_attn_lstm.1} parent=59 // pred_check
        %p2707 = pneg %p322
      $region66: #{bidirectional_attn_lstm.1} parent=59 // pred_check_branch
        %2709 = sbr.rel (%p2707) target = $region68
      $region67: #{bidirectional_attn_lstm.1} parent=59 // pred_region
        _
      $region68: #{bidirectional_attn_lstm.1} parent=59 // pred_fallthru
        _
    $region60: #{bidirectional_attn_lstm.1} parent=5 // pred_fallthru
      _
    %p2710 = scmp.le.s32.totalorder 2, %s18
    // Predicated region
    $region69: #{bidirectional_attn_lstm.1} parent=5 // pred_check
      %p2711 = pneg %p2710
    $region70: #{bidirectional_attn_lstm.1} parent=5 // pred_check_branch
      %2713 = sbr.rel (%p2711) target = $region72
    $region71: #{bidirectional_attn_lstm.1} parent=5 // pred_region
      %s2714 = ssub.s32 %s18, 2
      // Predicated region
      $region73: #{bidirectional_attn_lstm.1} parent=71 // pred_check
        %p2715 = pneg %p302
      $region74: #{bidirectional_attn_lstm.1} parent=71 // pred_check_branch
        %2717 = sbr.rel (%p2715) target = $region76
      $region75: #{bidirectional_attn_lstm.1} parent=71 // pred_region
        %p2718 = scmp.lt.s32.totalorder %s24, 1
        %s2719 = scalar_select %p2718, %s24, 1
        %s2720 = smul.addr %s2719, 8
        %s2721 = smul.addr %s2720, 2
        %s2722 = scalar_lea.vmem %s10, %s2721
      $region76: #{bidirectional_attn_lstm.1} parent=71 // pred_fallthru
        _
      // Predicated region
      $region77: #{bidirectional_attn_lstm.1} parent=71 // pred_check
        %p2723 = pneg %p328
      $region78: #{bidirectional_attn_lstm.1} parent=71 // pred_check_branch
        %2725 = sbr.rel (%p2723) target = $region80
      $region79: #{bidirectional_attn_lstm.1} parent=71 // pred_region
        %p2726 = scmp.lt.s32.totalorder %s24, 1
        %s2727 = scalar_select %p2726, %s24, 1
        %s2728 = smul.addr %s2727, 8
        %s2729 = smul.addr %s2728, 2
        %s2730 = scalar_lea.vmem %s11, %s2729
      $region80: #{bidirectional_attn_lstm.1} parent=71 // pred_fallthru
        _
    $region72: #{bidirectional_attn_lstm.1} parent=5 // pred_fallthru
      _
  $region6: #{bidirectional_attn_lstm.1} parent=0 // loop_footer
    %s22 = sadd.s32 1, %s18
  $region7: #{bidirectional_attn_lstm.1} parent=0 // loop_footer_branch
    %17 = sbr.rel target = $region3
  $region8: #{bidirectional_attn_lstm.1} parent=0 // loop_exit
    _

</llo_original>
